<compile_context>
chip_gen: v6e
topology: v6e:2x2x1
jax: 0.10.0
libtpu: 0.0.40
codegen_flags: <defaults>
</compile_context>

<pallas_src>
import math
import jax
import jax.numpy as jnp
from jax import lax
from jax.experimental import pallas as pl
from jax.experimental.pallas import tpu as pltpu

LN_EPS = 1e-5


def _layernorm(x, gamma, beta):
    # x: (rows, D) f32, gamma/beta: (1, D) f32 -- statistics in f32.
    mu = jnp.mean(x, axis=-1, keepdims=True)
    var = jnp.mean((x - mu) ** 2, axis=-1, keepdims=True)
    return (x - mu) * lax.rsqrt(var + LN_EPS) * gamma + beta


def biased_block_kernel(
    x_ref,        # (1, S, D)        f32
    ab_ref,       # (1, G, S, S)     bf16   post-softmax bias for this head group
    wqkv_ref,     # (NG, D, 3*G*HD)  bf16   fused QKV weights (resident; scale folded into Q)
    bqkv_ref,     # (NG, 1, 3*G*HD)  f32    fused QKV biases  (scale folded into Q)
    wproj_ref,    # (NG, G*HD, D)    bf16   per-group slab of W_proj (resident)
    small_ref,    # (6, D)           f32    [b_proj, g1, be1, g2, be2, b_fc2]
    bfc1_ref,     # (1, HID)         f32
    wfc1_ref,     # (D, HID)         bf16   (resident)
    wfc2_ref,     # (HID, D)         bf16   (resident)
    o_ref,        # (1, S, D)        f32
    xn_scr,       # VMEM (S, D)      bf16   LN1(x), shared across head groups
    acc_scr,      # VMEM (S, D)      f32    x + b_proj + sum_h y_h @ W_proj[h]
):
    g = pl.program_id(1)
    num_groups = pl.num_programs(1)

    S, D = x_ref.shape[1], x_ref.shape[2]
    G = ab_ref.shape[1]
    GHD = wproj_ref.shape[1]
    HD = GHD // G
    HID = wfc1_ref.shape[1]

    # ---- first group for this batch row: LN1 once, init residual accumulator ----
    @pl.when(g == 0)
    def _init():
        x = x_ref[0]                                           # (S, D) f32
        xn = _layernorm(x, small_ref[1:2, :], small_ref[2:3, :])
        xn_scr[...] = xn.astype(jnp.bfloat16)
        acc_scr[...] = x + small_ref[0:1, :]                   # residual + proj bias

    xnb = xn_scr[...]                                          # (S, D) bf16

    # ---- fused QKV projection for the G heads of this group (one wide matmul) ----
    qkv = (jnp.dot(xnb, wqkv_ref[g], preferred_element_type=jnp.float32)
           + bqkv_ref[g])                                      # (S, 3*G*HD) f32
    qkv = qkv.astype(jnp.bfloat16)

    # ---- per-head biased attention; concat heads and project with K = G*HD wide ----
    ys = []
    for h in range(G):                                         # G is a small static constant
        qh = qkv[:, h * HD:(h + 1) * HD]                       # (S, HD) bf16
        kh = qkv[:, GHD + h * HD:GHD + (h + 1) * HD]
        vh = qkv[:, 2 * GHD + h * HD:2 * GHD + (h + 1) * HD]
        # scores = q @ k^T without materializing a transpose (contract last dims)
        att = lax.dot_general(
            qh, kh, dimension_numbers=(((1,), (1,)), ((), ())),
            preferred_element_type=jnp.float32)                # (S, S) f32
        m = jnp.max(att, axis=-1, keepdims=True)
        e = jnp.exp(att - m)
        p = e * pl.reciprocal(jnp.sum(e, axis=-1, keepdims=True), approx=True)
        p = p + ab_ref[0, h].astype(jnp.float32)               # bias added AFTER softmax
        ys.append(jnp.dot(p.astype(jnp.bfloat16), vh,
                          preferred_element_type=jnp.float32))  # (S, HD) f32
    y_cat = jnp.concatenate(ys, axis=-1) if G > 1 else ys[0]    # (S, G*HD) f32
    acc_scr[...] += jnp.dot(y_cat.astype(jnp.bfloat16), wproj_ref[g],
                            preferred_element_type=jnp.float32)

    # ---- last group: residual complete -> LN2 -> MLP (row-tiled over S) -> store ----
    @pl.when(g == num_groups - 1)
    def _finalize():
        rt = min(S, 256)
        while S % rt != 0:                                     # static, trace-time
            rt -= 1
        n_chunks = S // rt

        gamma2 = small_ref[3:4, :]
        beta2 = small_ref[4:5, :]
        bias_fc2 = small_ref[5:6, :]
        bias_fc1 = bfc1_ref[...]
        wfc1 = wfc1_ref[...]
        wfc2 = wfc2_ref[...]

        @pl.loop(0, n_chunks)
        def _(c):
            r0 = pl.multiple_of(c * rt, rt)
            x1 = acc_scr[pl.ds(r0, rt), :]                     # (rt, D) f32
            xn2 = _layernorm(x1, gamma2, beta2).astype(jnp.bfloat16)
            hmid = jnp.dot(xn2, wfc1, preferred_element_type=jnp.float32) + bias_fc1
            hmid = jax.nn.gelu(hmid)                           # TODO(synk): MLP_small undefined; tanh-approx GELU assumed
            mlp = jnp.dot(hmid.astype(jnp.bfloat16), wfc2,
                          preferred_element_type=jnp.float32) + bias_fc2
            o_ref[0, pl.ds(r0, rt), :] = (x1 + mlp).astype(o_ref.dtype)


def choose_group(H, HD, lane_target=256):
    """Heads per grid step: aim for G*HD ~= 256 lanes (full v6e/v7x MXU width)."""
    g = max(1, min(H, lane_target // max(HD, 1)))
    while H % g != 0:
        g -= 1
    return max(g, 1)


def prepare_params(params, H, G):
    """Host-side, one-time prep: fuse QKV per head-group, fold 1/sqrt(HD) into Q,
    group W_proj rows per head-group, pack small params, cast matmul weights to bf16."""
    D = params["w_qkv"].shape[0]
    HD = D // H
    NG = H // G
    GHD = G * HD
    scale = 1.0 / math.sqrt(HD)

    w_qkv = params["w_qkv"]                  # (D, 3D) : columns [Q | K | V]
    b_qkv = params["b_qkv"][0]               # (3D,)
    w_q, w_k, w_v = w_qkv[:, :D], w_qkv[:, D:2 * D], w_qkv[:, 2 * D:]
    b_q, b_k, b_v = b_qkv[:D], b_qkv[D:2 * D], b_qkv[2 * D:]

    def grp_w(w, s=1.0):                     # (D, D) -> (NG, D, GHD)
        return (w * s).reshape(D, NG, GHD).transpose(1, 0, 2)

    def grp_b(b, s=1.0):                     # (D,) -> (NG, 1, GHD)
        return (b * s).reshape(NG, 1, GHD)

    # per-group fused QKV: columns [q | k | v], each GHD wide, per-head HD contiguous
    w_qkv_g = jnp.concatenate(
        [grp_w(w_q, scale), grp_w(w_k), grp_w(w_v)], axis=-1).astype(jnp.bfloat16)
    b_qkv_g = jnp.concatenate(
        [grp_b(b_q, scale), grp_b(b_k), grp_b(b_v)], axis=-1).astype(jnp.float32)

    w_proj_g = params["w_proj"].reshape(NG, GHD, D).astype(jnp.bfloat16)

    small = jnp.concatenate(
        [params["b_proj"], params["g1"], params["be1"],
         params["g2"], params["be2"], params["b_fc2"]], axis=0).astype(jnp.float32)

    return {
        "w_qkv_g": w_qkv_g, "b_qkv_g": b_qkv_g, "w_proj_g": w_proj_g,
        "small": small,
        "b_fc1": params["b_fc1"].astype(jnp.float32),
        "w_fc1": params["w_fc1"].astype(jnp.bfloat16),
        "w_fc2": params["w_fc2"].astype(jnp.bfloat16),
    }


def _vmem_limit_bytes():
    # Explicit scoped-VMEM budget (review item): ~100 MiB on v5e/v6e (128 MiB physical),
    # ~48 MiB on v7x (64 MiB physical). Conservative fallback if the query fails.
    try:
        cap = pltpu.get_tpu_info().vmem_capacity_bytes
    except Exception:
        cap = 64 * 1024 * 1024
    return int(max(32 * 1024 * 1024, min(cap - 16 * 1024 * 1024, 100 * 1024 * 1024)))


def biased_block(x, attn_B, prepped, G):
    B, S, D = x.shape
    NG, _, GHD3 = prepped["w_qkv_g"].shape
    GHD = GHD3 // 3
    HID = prepped["w_fc1"].shape[1]

    # Halve the dominant (S^2-scaling) HBM stream. (Precision bound is the bf16 PV matmul
    # operand anyway, so bf16 bias loses essentially nothing extra.)
    attn_B = attn_B.astype(jnp.bfloat16)

    args = (x, attn_B, prepped["w_qkv_g"], prepped["b_qkv_g"], prepped["w_proj_g"],
            prepped["small"], prepped["b_fc1"], prepped["w_fc1"], prepped["w_fc2"])

    def run(single_buffer_weights):
        def wspec(shape, imap):
            # Resident, never-changing blocks: constant index_map; single-buffered if possible.
            if single_buffer_weights:
                return pl.BlockSpec(shape, imap, pipeline_mode=pl.Buffered(1))
            return pl.BlockSpec(shape, imap)

        in_specs = [
            pl.BlockSpec((1, S, D), lambda b, g: (b, 0, 0)),           # x
            pl.BlockSpec((1, G, S, S), lambda b, g: (b, g, 0, 0)),     # attn_B (head group)
            wspec((NG, D, GHD3), lambda b, g: (0, 0, 0)),              # fused QKV weights
            wspec((NG, 1, GHD3), lambda b, g: (0, 0, 0)),              # fused QKV biases
            wspec((NG, GHD, D), lambda b, g: (0, 0, 0)),               # W_proj (per group)
            wspec((6, D), lambda b, g: (0, 0)),                        # packed small params
            wspec((1, HID), lambda b, g: (0, 0)),                      # b_fc1
            wspec((D, HID), lambda b, g: (0, 0)),                      # w_fc1
            wspec((HID, D), lambda b, g: (0, 0)),                      # w_fc2
        ]
        out_spec = pl.BlockSpec((1, S, D), lambda b, g: (b, 0, 0))

        grid_spec = pltpu.PrefetchScalarGridSpec(
            num_scalar_prefetch=0,
            grid=(B, NG),
            in_specs=in_specs,
            out_specs=out_spec,
            scratch_shapes=[
                pltpu.VMEM((S, D), jnp.bfloat16),   # LN1(x) shared across head groups
                pltpu.VMEM((S, D), jnp.float32),    # residual / proj accumulator
            ],
        )
        return pl.pallas_call(
            biased_block_kernel,
            out_shape=jax.ShapeDtypeStruct((B, S, D), jnp.float32),
            grid_spec=grid_spec,
            compiler_params=pltpu.CompilerParams(
                dimension_semantics=("parallel", "arbitrary"),
                vmem_limit_bytes=_vmem_limit_bytes()),
        )(*args)

    try:
        return run(single_buffer_weights=True)
    except Exception:
        # TODO(synk): pipeline_mode=pl.Buffered(1) (single-buffered resident weights)
        # unavailable on this build; fall back to default double-buffering.
        return run(single_buffer_weights=False)


def biased_block_ref(x, attn_B, params):
    """Pure-JAX f32 reference (same math, batched) for validation."""
    B, S, D = x.shape
    H = attn_B.shape[1]
    HD = D // H
    xn = _layernorm(x, params["g1"][0], params["be1"][0])
    qkv = jnp.einsum("bsd,de->bse", xn, params["w_qkv"]) + params["b_qkv"][0]
    q, k, v = jnp.split(qkv, 3, axis=-1)
    q = q.reshape(B, S, H, HD).transpose(0, 2, 1, 3)
    k = k.reshape(B, S, H, HD).transpose(0, 2, 1, 3)
    v = v.reshape(B, S, H, HD).transpose(0, 2, 1, 3)
    att = jnp.einsum("bhqd,bhkd->bhqk", q, k) * (1.0 / math.sqrt(HD))
    att = jax.nn.softmax(att, axis=-1) + attn_B
    y = jnp.einsum("bhqk,bhkd->bhqd", att, v)
    y = y.transpose(0, 2, 1, 3).reshape(B, S, D)
    y = jnp.einsum("bsd,de->bse", y, params["w_proj"]) + params["b_proj"][0]
    x1 = x + y
    xn2 = _layernorm(x1, params["g2"][0], params["be2"][0])
    h = jnp.einsum("bsd,dh->bsh", xn2, params["w_fc1"]) + params["b_fc1"][0]
    h = jax.nn.gelu(h)
    h = jnp.einsum("bsh,hd->bsd", h, params["w_fc2"]) + params["b_fc2"][0]
    return x1 + h


def init_params(key, D, HID):
    ks = jax.random.split(key, 8)
    std = 0.02
    return {
        "w_qkv": std * jax.random.normal(ks[0], (D, 3 * D), jnp.float32),
        "b_qkv": std * jax.random.normal(ks[1], (1, 3 * D), jnp.float32),
        "w_proj": std * jax.random.normal(ks[2], (D, D), jnp.float32),
        "b_proj": std * jax.random.normal(ks[3], (1, D), jnp.float32),
        "g1": jnp.ones((1, D), jnp.float32),
        "be1": jnp.zeros((1, D), jnp.float32),
        "g2": jnp.ones((1, D), jnp.float32),
        "be2": jnp.zeros((1, D), jnp.float32),
        "w_fc1": std * jax.random.normal(ks[4], (D, HID), jnp.float32),
        "b_fc1": std * jax.random.normal(ks[5], (1, HID), jnp.float32),
        "w_fc2": std * jax.random.normal(ks[6], (HID, D), jnp.float32),
        "b_fc2": std * jax.random.normal(ks[7], (1, D), jnp.float32),
    }


if __name__ == "__main__":
    B, S, D, H = 2, 8, 32, 4
    HID = 4 * D
    HD = D // H

    key = jax.random.PRNGKey(0)
    kx, kb, kp = jax.random.split(key, 3)
    x = jax.random.normal(kx, (B, S, D), jnp.float32)
    attn_B = 0.1 * jax.random.normal(kb, (B, H, S, S), jnp.float32)
    params = init_params(kp, D, HID)

    G = choose_group(H, HD)                 # heads per grid step
    prepped = prepare_params(params, H, G)  # one-time host-side prep (fuse, fold, bf16)

    out = biased_block(x, attn_B, prepped, G)
    out = jax.block_until_ready(out)

    ref = biased_block_ref(x, attn_B, params)
    assert out.shape == (B, S, D)
    # bf16 MXU operands + approx reciprocal -> looser tolerance vs the f32 reference.
    max_err = float(jnp.max(jnp.abs(out - ref)))
    assert jnp.allclose(out, ref, rtol=2e-2, atol=2e-2), \
        f"mismatch vs reference (max abs err {max_err})"

    print("KERNEL_OK")
</pallas_src>

<mosaic_0001>
module attributes {stable_mosaic.version = 11 : i64} {
  func.func @biased_block_kernel(%arg0: i32, %arg1: i32, %arg2: memref<1x8x32xf32, #tpu.memory_space<vmem>>, %arg3: memref<1x4x8x8xbf16, #tpu.memory_space<vmem>>, %arg4: memref<1x32x96xbf16, #tpu.memory_space<vmem>>, %arg5: memref<1x1x96xf32, #tpu.memory_space<vmem>>, %arg6: memref<1x32x32xbf16, #tpu.memory_space<vmem>>, %arg7: memref<6x32xf32, #tpu.memory_space<vmem>>, %arg8: memref<1x128xf32, #tpu.memory_space<vmem>>, %arg9: memref<32x128xbf16, #tpu.memory_space<vmem>>, %arg10: memref<128x32xbf16, #tpu.memory_space<vmem>>, %arg11: memref<1x8x32xf32, #tpu.memory_space<vmem>>, %arg12: memref<8x32xbf16, #tpu.memory_space<vmem>>, %arg13: memref<8x32xf32, #tpu.memory_space<vmem>>) attributes {dimension_semantics = [#tpu.dimension_semantics<parallel>, #tpu.dimension_semantics<arbitrary>], iteration_bounds = array<i64: 2, 1>, scalar_prefetch = 0 : i64, scratch_operands = 2 : i64, tpu.core_type = #tpu.core_type<tc>, window_params = [{transform_indices = @transform_0, window_bounds = array<i64: 1, 8, 32>}, {transform_indices = @transform_1, window_bounds = array<i64: 1, 4, 8, 8>}, {pipeline_mode = #tpu.pipeline_mode<synchronous>, transform_indices = @transform_2, window_bounds = array<i64: 1, 32, 96>}, {pipeline_mode = #tpu.pipeline_mode<synchronous>, transform_indices = @transform_3, window_bounds = array<i64: 1, 1, 96>}, {pipeline_mode = #tpu.pipeline_mode<synchronous>, transform_indices = @transform_4, window_bounds = array<i64: 1, 32, 32>}, {pipeline_mode = #tpu.pipeline_mode<synchronous>, transform_indices = @transform_5, window_bounds = array<i64: 6, 32>}, {pipeline_mode = #tpu.pipeline_mode<synchronous>, transform_indices = @transform_6, window_bounds = array<i64: 1, 128>}, {pipeline_mode = #tpu.pipeline_mode<synchronous>, transform_indices = @transform_7, window_bounds = array<i64: 32, 128>}, {pipeline_mode = #tpu.pipeline_mode<synchronous>, transform_indices = @transform_8, window_bounds = array<i64: 128, 32>}, {transform_indices = @transform_9, window_bounds = array<i64: 1, 8, 32>}]} {
    %c0_i32 = arith.constant 0 : i32
    %0 = arith.cmpi eq, %arg1, %c0_i32 : i32
    %1 = arith.extui %0 : i1 to i32
    %c0_i32_0 = arith.constant 0 : i32
    %2 = arith.cmpi ne, %1, %c0_i32_0 : i32
    scf.if %2 {
      %c0_44 = arith.constant 0 : index
      %c0_45 = arith.constant 0 : index
      %c0_46 = arith.constant 0 : index
      %106 = vector.load %arg2[%c0_44, %c0_45, %c0_46] : memref<1x8x32xf32, #tpu.memory_space<vmem>>, vector<1x8x32xf32>
      %107 = vector.shape_cast %106 : vector<1x8x32xf32> to vector<8x32xf32>
      %c1_47 = arith.constant 1 : index
      %c0_48 = arith.constant 0 : index
      %108 = vector.load %arg7[%c1_47, %c0_48] : memref<6x32xf32, #tpu.memory_space<vmem>>, vector<1x32xf32>
      %c2_49 = arith.constant 2 : index
      %c0_50 = arith.constant 0 : index
      %109 = vector.load %arg7[%c2_49, %c0_50] : memref<6x32xf32, #tpu.memory_space<vmem>>, vector<1x32xf32>
      %cst_51 = arith.constant dense<0.000000e+00> : vector<8xf32>
      %110 = vector.multi_reduction <add>, %107, %cst_51 [1] : vector<8x32xf32> to vector<8xf32>
      %111 = vector.shape_cast %110 : vector<8xf32> to vector<8x1xf32>
      %cst_52 = arith.constant 3.200000e+01 : f32
      %112 = vector.broadcast %cst_52 : f32 to vector<8x1xf32>
      %113 = arith.divf %111, %112 : vector<8x1xf32>
      %114 = vector.broadcast %113 : vector<8x1xf32> to vector<8x32xf32>
      %115 = arith.subf %107, %114 : vector<8x32xf32>
      %116 = arith.mulf %115, %115 : vector<8x32xf32>
      %cst_53 = arith.constant dense<0.000000e+00> : vector<8xf32>
      %117 = vector.multi_reduction <add>, %116, %cst_53 [1] : vector<8x32xf32> to vector<8xf32>
      %118 = vector.shape_cast %117 : vector<8xf32> to vector<8x1xf32>
      %cst_54 = arith.constant 3.200000e+01 : f32
      %119 = vector.broadcast %cst_54 : f32 to vector<8x1xf32>
      %120 = arith.divf %118, %119 : vector<8x1xf32>
      %121 = vector.broadcast %113 : vector<8x1xf32> to vector<8x32xf32>
      %122 = arith.subf %107, %121 : vector<8x32xf32>
      %cst_55 = arith.constant 9.99999974E-6 : f32
      %123 = vector.broadcast %cst_55 : f32 to vector<8x1xf32>
      %124 = arith.addf %120, %123 : vector<8x1xf32>
      %125 = math.rsqrt %124 : vector<8x1xf32>
      %126 = vector.broadcast %125 : vector<8x1xf32> to vector<8x32xf32>
      %127 = arith.mulf %122, %126 : vector<8x32xf32>
      %128 = vector.broadcast %108 : vector<1x32xf32> to vector<8x32xf32>
      %129 = arith.mulf %127, %128 : vector<8x32xf32>
      %130 = vector.broadcast %109 : vector<1x32xf32> to vector<8x32xf32>
      %131 = arith.addf %129, %130 : vector<8x32xf32>
      %132 = arith.truncf %131 : vector<8x32xf32> to vector<8x32xbf16>
      %c0_56 = arith.constant 0 : index
      %c0_57 = arith.constant 0 : index
      %133 = vector.load %arg12[%c0_56, %c0_57] : memref<8x32xbf16, #tpu.memory_space<vmem>>, vector<8x32xbf16>
      tpu.vector_store %arg12[%c0_56, %c0_57], %132 {strides = array<i32>} : memref<8x32xbf16, #tpu.memory_space<vmem>>, vector<8x32xbf16>,
      %c0_58 = arith.constant 0 : index
      %c0_59 = arith.constant 0 : index
      %134 = vector.load %arg7[%c0_58, %c0_59] : memref<6x32xf32, #tpu.memory_space<vmem>>, vector<1x32xf32>
      %135 = vector.broadcast %134 : vector<1x32xf32> to vector<8x32xf32>
      %136 = arith.addf %107, %135 : vector<8x32xf32>
      %c0_60 = arith.constant 0 : index
      %c0_61 = arith.constant 0 : index
      %137 = vector.load %arg13[%c0_60, %c0_61] : memref<8x32xf32, #tpu.memory_space<vmem>>, vector<8x32xf32>
      tpu.vector_store %arg13[%c0_60, %c0_61], %136 {strides = array<i32>} : memref<8x32xf32, #tpu.memory_space<vmem>>, vector<8x32xf32>,
    } else {
    }
    %c0 = arith.constant 0 : index
    %c0_1 = arith.constant 0 : index
    %3 = vector.load %arg12[%c0, %c0_1] : memref<8x32xbf16, #tpu.memory_space<vmem>>, vector<8x32xbf16>
    %4 = arith.index_cast %arg1 : i32 to index
    %c0_2 = arith.constant 0 : index
    %c0_3 = arith.constant 0 : index
    %5 = vector.load %arg4[%4, %c0_2, %c0_3] : memref<1x32x96xbf16, #tpu.memory_space<vmem>>, vector<1x32x96xbf16>
    %6 = vector.shape_cast %5 : vector<1x32x96xbf16> to vector<32x96xbf16>
    %cst = arith.constant dense<0.000000e+00> : vector<8x96xf32>
    %7 = tpu.matmul %3, %6, %cst {dimension_numbers = #tpu.dot_dimension_numbers<[1], [0], [0], [1], [0, 0, 1, 1], [], []>} : vector<8x32xbf16>, vector<32x96xbf16>, vector<8x96xf32> -> vector<8x96xf32>
    %8 = arith.index_cast %arg1 : i32 to index
    %c0_4 = arith.constant 0 : index
    %c0_5 = arith.constant 0 : index
    %9 = vector.load %arg5[%8, %c0_4, %c0_5] : memref<1x1x96xf32, #tpu.memory_space<vmem>>, vector<1x1x96xf32>
    %10 = vector.shape_cast %9 : vector<1x1x96xf32> to vector<1x96xf32>
    %11 = vector.broadcast %10 : vector<1x96xf32> to vector<8x96xf32>
    %12 = arith.addf %7, %11 : vector<8x96xf32>
    %13 = arith.truncf %12 : vector<8x96xf32> to vector<8x96xbf16>
    %14 = vector.extract_strided_slice %13 {offsets = [0, 0], sizes = [8, 8], strides = [1, 1]} : vector<8x96xbf16> to vector<8x8xbf16>
    %15 = vector.extract_strided_slice %13 {offsets = [0, 32], sizes = [8, 8], strides = [1, 1]} : vector<8x96xbf16> to vector<8x8xbf16>
    %16 = vector.extract_strided_slice %13 {offsets = [0, 64], sizes = [8, 8], strides = [1, 1]} : vector<8x96xbf16> to vector<8x8xbf16>
    %cst_6 = arith.constant dense<0.000000e+00> : vector<8x8xf32>
    %17 = tpu.matmul %14, %15, %cst_6 {dimension_numbers = #tpu.dot_dimension_numbers<[1], [1], [0], [0], [0, 0, 1, 0], [], []>} : vector<8x8xbf16>, vector<8x8xbf16>, vector<8x8xf32> -> vector<8x8xf32>
    %cst_7 = arith.constant dense<0xFF800000> : vector<8xf32>
    %18 = vector.multi_reduction <maximumf>, %17, %cst_7 [1] : vector<8x8xf32> to vector<8xf32>
    %19 = vector.shape_cast %18 : vector<8xf32> to vector<8x1xf32>
    %20 = vector.broadcast %19 : vector<8x1xf32> to vector<8x8xf32>
    %21 = arith.subf %17, %20 : vector<8x8xf32>
    %22 = math.exp %21 : vector<8x8xf32>
    %cst_8 = arith.constant dense<0.000000e+00> : vector<8xf32>
    %23 = vector.multi_reduction <add>, %22, %cst_8 [1] : vector<8x8xf32> to vector<8xf32>
    %24 = vector.shape_cast %23 : vector<8xf32> to vector<8x1xf32>
    %25 = tpu.reciprocal %24 {approx = true} : vector<8x1xf32> -> vector<8x1xf32>
    %26 = vector.broadcast %25 : vector<8x1xf32> to vector<8x8xf32>
    %27 = arith.mulf %22, %26 : vector<8x8xf32>
    %c0_9 = arith.constant 0 : index
    %c0_10 = arith.constant 0 : index
    %c0_11 = arith.constant 0 : index
    %c0_12 = arith.constant 0 : index
    %28 = vector.load %arg3[%c0_9, %c0_10, %c0_11, %c0_12] : memref<1x4x8x8xbf16, #tpu.memory_space<vmem>>, vector<1x1x8x8xbf16>
    %29 = vector.shape_cast %28 : vector<1x1x8x8xbf16> to vector<8x8xbf16>
    %30 = arith.extf %29 : vector<8x8xbf16> to vector<8x8xf32>
    %31 = arith.addf %27, %30 : vector<8x8xf32>
    %32 = arith.truncf %31 : vector<8x8xf32> to vector<8x8xbf16>
    %cst_13 = arith.constant dense<0.000000e+00> : vector<8x8xf32>
    %33 = tpu.matmul %32, %16, %cst_13 {dimension_numbers = #tpu.dot_dimension_numbers<[1], [0], [0], [1], [0, 0, 1, 1], [], []>} : vector<8x8xbf16>, vector<8x8xbf16>, vector<8x8xf32> -> vector<8x8xf32>
    %34 = vector.extract_strided_slice %13 {offsets = [0, 8], sizes = [8, 8], strides = [1, 1]} : vector<8x96xbf16> to vector<8x8xbf16>
    %35 = vector.extract_strided_slice %13 {offsets = [0, 40], sizes = [8, 8], strides = [1, 1]} : vector<8x96xbf16> to vector<8x8xbf16>
    %36 = vector.extract_strided_slice %13 {offsets = [0, 72], sizes = [8, 8], strides = [1, 1]} : vector<8x96xbf16> to vector<8x8xbf16>
    %cst_14 = arith.constant dense<0.000000e+00> : vector<8x8xf32>
    %37 = tpu.matmul %34, %35, %cst_14 {dimension_numbers = #tpu.dot_dimension_numbers<[1], [1], [0], [0], [0, 0, 1, 0], [], []>} : vector<8x8xbf16>, vector<8x8xbf16>, vector<8x8xf32> -> vector<8x8xf32>
    %cst_15 = arith.constant dense<0xFF800000> : vector<8xf32>
    %38 = vector.multi_reduction <maximumf>, %37, %cst_15 [1] : vector<8x8xf32> to vector<8xf32>
    %39 = vector.shape_cast %38 : vector<8xf32> to vector<8x1xf32>
    %40 = vector.broadcast %39 : vector<8x1xf32> to vector<8x8xf32>
    %41 = arith.subf %37, %40 : vector<8x8xf32>
    %42 = math.exp %41 : vector<8x8xf32>
    %cst_16 = arith.constant dense<0.000000e+00> : vector<8xf32>
    %43 = vector.multi_reduction <add>, %42, %cst_16 [1] : vector<8x8xf32> to vector<8xf32>
    %44 = vector.shape_cast %43 : vector<8xf32> to vector<8x1xf32>
    %45 = tpu.reciprocal %44 {approx = true} : vector<8x1xf32> -> vector<8x1xf32>
    %46 = vector.broadcast %45 : vector<8x1xf32> to vector<8x8xf32>
    %47 = arith.mulf %42, %46 : vector<8x8xf32>
    %c0_17 = arith.constant 0 : index
    %c1 = arith.constant 1 : index
    %c0_18 = arith.constant 0 : index
    %c0_19 = arith.constant 0 : index
    %48 = vector.load %arg3[%c0_17, %c1, %c0_18, %c0_19] : memref<1x4x8x8xbf16, #tpu.memory_space<vmem>>, vector<1x1x8x8xbf16>
    %49 = vector.shape_cast %48 : vector<1x1x8x8xbf16> to vector<8x8xbf16>
    %50 = arith.extf %49 : vector<8x8xbf16> to vector<8x8xf32>
    %51 = arith.addf %47, %50 : vector<8x8xf32>
    %52 = arith.truncf %51 : vector<8x8xf32> to vector<8x8xbf16>
    %cst_20 = arith.constant dense<0.000000e+00> : vector<8x8xf32>
    %53 = tpu.matmul %52, %36, %cst_20 {dimension_numbers = #tpu.dot_dimension_numbers<[1], [0], [0], [1], [0, 0, 1, 1], [], []>} : vector<8x8xbf16>, vector<8x8xbf16>, vector<8x8xf32> -> vector<8x8xf32>
    %54 = vector.extract_strided_slice %13 {offsets = [0, 16], sizes = [8, 8], strides = [1, 1]} : vector<8x96xbf16> to vector<8x8xbf16>
    %55 = vector.extract_strided_slice %13 {offsets = [0, 48], sizes = [8, 8], strides = [1, 1]} : vector<8x96xbf16> to vector<8x8xbf16>
    %56 = vector.extract_strided_slice %13 {offsets = [0, 80], sizes = [8, 8], strides = [1, 1]} : vector<8x96xbf16> to vector<8x8xbf16>
    %cst_21 = arith.constant dense<0.000000e+00> : vector<8x8xf32>
    %57 = tpu.matmul %54, %55, %cst_21 {dimension_numbers = #tpu.dot_dimension_numbers<[1], [1], [0], [0], [0, 0, 1, 0], [], []>} : vector<8x8xbf16>, vector<8x8xbf16>, vector<8x8xf32> -> vector<8x8xf32>
    %cst_22 = arith.constant dense<0xFF800000> : vector<8xf32>
    %58 = vector.multi_reduction <maximumf>, %57, %cst_22 [1] : vector<8x8xf32> to vector<8xf32>
    %59 = vector.shape_cast %58 : vector<8xf32> to vector<8x1xf32>
    %60 = vector.broadcast %59 : vector<8x1xf32> to vector<8x8xf32>
    %61 = arith.subf %57, %60 : vector<8x8xf32>
    %62 = math.exp %61 : vector<8x8xf32>
    %cst_23 = arith.constant dense<0.000000e+00> : vector<8xf32>
    %63 = vector.multi_reduction <add>, %62, %cst_23 [1] : vector<8x8xf32> to vector<8xf32>
    %64 = vector.shape_cast %63 : vector<8xf32> to vector<8x1xf32>
    %65 = tpu.reciprocal %64 {approx = true} : vector<8x1xf32> -> vector<8x1xf32>
    %66 = vector.broadcast %65 : vector<8x1xf32> to vector<8x8xf32>
    %67 = arith.mulf %62, %66 : vector<8x8xf32>
    %c0_24 = arith.constant 0 : index
    %c2 = arith.constant 2 : index
    %c0_25 = arith.constant 0 : index
    %c0_26 = arith.constant 0 : index
    %68 = vector.load %arg3[%c0_24, %c2, %c0_25, %c0_26] : memref<1x4x8x8xbf16, #tpu.memory_space<vmem>>, vector<1x1x8x8xbf16>
    %69 = vector.shape_cast %68 : vector<1x1x8x8xbf16> to vector<8x8xbf16>
    %70 = arith.extf %69 : vector<8x8xbf16> to vector<8x8xf32>
    %71 = arith.addf %67, %70 : vector<8x8xf32>
    %72 = arith.truncf %71 : vector<8x8xf32> to vector<8x8xbf16>
    %cst_27 = arith.constant dense<0.000000e+00> : vector<8x8xf32>
    %73 = tpu.matmul %72, %56, %cst_27 {dimension_numbers = #tpu.dot_dimension_numbers<[1], [0], [0], [1], [0, 0, 1, 1], [], []>} : vector<8x8xbf16>, vector<8x8xbf16>, vector<8x8xf32> -> vector<8x8xf32>
    %74 = vector.extract_strided_slice %13 {offsets = [0, 24], sizes = [8, 8], strides = [1, 1]} : vector<8x96xbf16> to vector<8x8xbf16>
    %75 = vector.extract_strided_slice %13 {offsets = [0, 56], sizes = [8, 8], strides = [1, 1]} : vector<8x96xbf16> to vector<8x8xbf16>
    %76 = vector.extract_strided_slice %13 {offsets = [0, 88], sizes = [8, 8], strides = [1, 1]} : vector<8x96xbf16> to vector<8x8xbf16>
    %cst_28 = arith.constant dense<0.000000e+00> : vector<8x8xf32>
    %77 = tpu.matmul %74, %75, %cst_28 {dimension_numbers = #tpu.dot_dimension_numbers<[1], [1], [0], [0], [0, 0, 1, 0], [], []>} : vector<8x8xbf16>, vector<8x8xbf16>, vector<8x8xf32> -> vector<8x8xf32>
    %cst_29 = arith.constant dense<0xFF800000> : vector<8xf32>
    %78 = vector.multi_reduction <maximumf>, %77, %cst_29 [1] : vector<8x8xf32> to vector<8xf32>
    %79 = vector.shape_cast %78 : vector<8xf32> to vector<8x1xf32>
    %80 = vector.broadcast %79 : vector<8x1xf32> to vector<8x8xf32>
    %81 = arith.subf %77, %80 : vector<8x8xf32>
    %82 = math.exp %81 : vector<8x8xf32>
    %cst_30 = arith.constant dense<0.000000e+00> : vector<8xf32>
    %83 = vector.multi_reduction <add>, %82, %cst_30 [1] : vector<8x8xf32> to vector<8xf32>
    %84 = vector.shape_cast %83 : vector<8xf32> to vector<8x1xf32>
    %85 = tpu.reciprocal %84 {approx = true} : vector<8x1xf32> -> vector<8x1xf32>
    %86 = vector.broadcast %85 : vector<8x1xf32> to vector<8x8xf32>
    %87 = arith.mulf %82, %86 : vector<8x8xf32>
    %c0_31 = arith.constant 0 : index
    %c3 = arith.constant 3 : index
    %c0_32 = arith.constant 0 : index
    %c0_33 = arith.constant 0 : index
    %88 = vector.load %arg3[%c0_31, %c3, %c0_32, %c0_33] : memref<1x4x8x8xbf16, #tpu.memory_space<vmem>>, vector<1x1x8x8xbf16>
    %89 = vector.shape_cast %88 : vector<1x1x8x8xbf16> to vector<8x8xbf16>
    %90 = arith.extf %89 : vector<8x8xbf16> to vector<8x8xf32>
    %91 = arith.addf %87, %90 : vector<8x8xf32>
    %92 = arith.truncf %91 : vector<8x8xf32> to vector<8x8xbf16>
    %cst_34 = arith.constant dense<0.000000e+00> : vector<8x8xf32>
    %93 = tpu.matmul %92, %76, %cst_34 {dimension_numbers = #tpu.dot_dimension_numbers<[1], [0], [0], [1], [0, 0, 1, 1], [], []>} : vector<8x8xbf16>, vector<8x8xbf16>, vector<8x8xf32> -> vector<8x8xf32>
    %94 = tpu.concatenate %33, %53, %73, %93 in 1 : vector<8x8xf32>, vector<8x8xf32>, vector<8x8xf32>, vector<8x8xf32> -> vector<8x32xf32>
    %c0_35 = arith.constant 0 : index
    %c0_36 = arith.constant 0 : index
    %95 = vector.load %arg13[%c0_35, %c0_36] : memref<8x32xf32, #tpu.memory_space<vmem>>, vector<8x32xf32>
    %96 = arith.truncf %94 : vector<8x32xf32> to vector<8x32xbf16>
    %97 = arith.index_cast %arg1 : i32 to index
    %c0_37 = arith.constant 0 : index
    %c0_38 = arith.constant 0 : index
    %98 = vector.load %arg6[%97, %c0_37, %c0_38] : memref<1x32x32xbf16, #tpu.memory_space<vmem>>, vector<1x32x32xbf16>
    %99 = vector.shape_cast %98 : vector<1x32x32xbf16> to vector<32x32xbf16>
    %cst_39 = arith.constant dense<0.000000e+00> : vector<8x32xf32>
    %100 = tpu.matmul %96, %99, %cst_39 {dimension_numbers = #tpu.dot_dimension_numbers<[1], [0], [0], [1], [0, 0, 1, 1], [], []>} : vector<8x32xbf16>, vector<32x32xbf16>, vector<8x32xf32> -> vector<8x32xf32>
    %101 = arith.addf %95, %100 : vector<8x32xf32>
    %c0_40 = arith.constant 0 : index
    %c0_41 = arith.constant 0 : index
    %102 = vector.load %arg13[%c0_40, %c0_41] : memref<8x32xf32, #tpu.memory_space<vmem>>, vector<8x32xf32>
    tpu.vector_store %arg13[%c0_40, %c0_41], %101 {strides = array<i32>} : memref<8x32xf32, #tpu.memory_space<vmem>>, vector<8x32xf32>,
    %c0_i32_42 = arith.constant 0 : i32
    %103 = arith.cmpi eq, %arg1, %c0_i32_42 : i32
    %104 = arith.extui %103 : i1 to i32
    %c0_i32_43 = arith.constant 0 : i32
    %105 = arith.cmpi ne, %104, %c0_i32_43 : i32
    scf.if %105 {
      %c3_44 = arith.constant 3 : index
      %c0_45 = arith.constant 0 : index
      %106 = vector.load %arg7[%c3_44, %c0_45] : memref<6x32xf32, #tpu.memory_space<vmem>>, vector<1x32xf32>
      %c4 = arith.constant 4 : index
      %c0_46 = arith.constant 0 : index
      %107 = vector.load %arg7[%c4, %c0_46] : memref<6x32xf32, #tpu.memory_space<vmem>>, vector<1x32xf32>
      %c5 = arith.constant 5 : index
      %c0_47 = arith.constant 0 : index
      %108 = vector.load %arg7[%c5, %c0_47] : memref<6x32xf32, #tpu.memory_space<vmem>>, vector<1x32xf32>
      %c0_48 = arith.constant 0 : index
      %c0_49 = arith.constant 0 : index
      %109 = vector.load %arg8[%c0_48, %c0_49] : memref<1x128xf32, #tpu.memory_space<vmem>>, vector<1x128xf32>
      %c0_50 = arith.constant 0 : index
      %c0_51 = arith.constant 0 : index
      %110 = vector.load %arg9[%c0_50, %c0_51] : memref<32x128xbf16, #tpu.memory_space<vmem>>, vector<32x128xbf16>
      %c0_52 = arith.constant 0 : index
      %c0_53 = arith.constant 0 : index
      %111 = vector.load %arg10[%c0_52, %c0_53] : memref<128x32xbf16, #tpu.memory_space<vmem>>, vector<128x32xbf16>
      %c0_i32_54 = arith.constant 0 : i32
      %c1_i32 = arith.constant 1 : i32
      %112 = arith.muli %c0_i32_54, %c1_i32 : i32
      %c0_i32_55 = arith.constant 0 : i32
      %113 = arith.addi %c0_i32_55, %112 : i32
      %c8_i32 = arith.constant 8 : i32
      %114 = arith.muli %113, %c8_i32 : i32
      %115 = tpu.assume_multiple %114, 8 : i32
      %116 = arith.index_cast %115 : i32 to index
      %c0_56 = arith.constant 0 : index
      %117 = vector.load %arg13[%116, %c0_56] : memref<8x32xf32, #tpu.memory_space<vmem>>, vector<8x32xf32>
      %cst_57 = arith.constant dense<0.000000e+00> : vector<8xf32>
      %118 = vector.multi_reduction <add>, %117, %cst_57 [1] : vector<8x32xf32> to vector<8xf32>
      %119 = vector.shape_cast %118 : vector<8xf32> to vector<8x1xf32>
      %cst_58 = arith.constant 3.200000e+01 : f32
      %120 = vector.broadcast %cst_58 : f32 to vector<8x1xf32>
      %121 = arith.divf %119, %120 : vector<8x1xf32>
      %122 = vector.broadcast %121 : vector<8x1xf32> to vector<8x32xf32>
      %123 = arith.subf %117, %122 : vector<8x32xf32>
      %124 = arith.mulf %123, %123 : vector<8x32xf32>
      %cst_59 = arith.constant dense<0.000000e+00> : vector<8xf32>
      %125 = vector.multi_reduction <add>, %124, %cst_59 [1] : vector<8x32xf32> to vector<8xf32>
      %126 = vector.shape_cast %125 : vector<8xf32> to vector<8x1xf32>
      %cst_60 = arith.constant 3.200000e+01 : f32
      %127 = vector.broadcast %cst_60 : f32 to vector<8x1xf32>
      %128 = arith.divf %126, %127 : vector<8x1xf32>
      %129 = vector.broadcast %121 : vector<8x1xf32> to vector<8x32xf32>
      %130 = arith.subf %117, %129 : vector<8x32xf32>
      %cst_61 = arith.constant 9.99999974E-6 : f32
      %131 = vector.broadcast %cst_61 : f32 to vector<8x1xf32>
      %132 = arith.addf %128, %131 : vector<8x1xf32>
      %133 = math.rsqrt %132 : vector<8x1xf32>
      %134 = vector.broadcast %133 : vector<8x1xf32> to vector<8x32xf32>
      %135 = arith.mulf %130, %134 : vector<8x32xf32>
      %136 = vector.broadcast %106 : vector<1x32xf32> to vector<8x32xf32>
      %137 = arith.mulf %135, %136 : vector<8x32xf32>
      %138 = vector.broadcast %107 : vector<1x32xf32> to vector<8x32xf32>
      %139 = arith.addf %137, %138 : vector<8x32xf32>
      %140 = arith.truncf %139 : vector<8x32xf32> to vector<8x32xbf16>
      %cst_62 = arith.constant dense<0.000000e+00> : vector<8x128xf32>
      %141 = tpu.matmul %140, %110, %cst_62 {dimension_numbers = #tpu.dot_dimension_numbers<[1], [0], [0], [1], [0, 0, 1, 1], [], []>} : vector<8x32xbf16>, vector<32x128xbf16>, vector<8x128xf32> -> vector<8x128xf32>
      %142 = vector.broadcast %109 : vector<1x128xf32> to vector<8x128xf32>
      %143 = arith.addf %141, %142 : vector<8x128xf32>
      %144 = arith.mulf %143, %143 : vector<8x128xf32>
      %145 = arith.mulf %143, %144 : vector<8x128xf32>
      %cst_63 = arith.constant 4.471500e-02 : f32
      %146 = vector.broadcast %cst_63 : f32 to vector<8x128xf32>
      %147 = arith.mulf %146, %145 : vector<8x128xf32>
      %148 = arith.addf %143, %147 : vector<8x128xf32>
      %cst_64 = arith.constant 0.797884583 : f32
      %149 = vector.broadcast %cst_64 : f32 to vector<8x128xf32>
      %150 = arith.mulf %149, %148 : vector<8x128xf32>
      %151 = math.tanh %150 : vector<8x128xf32>
      %cst_65 = arith.constant 1.000000e+00 : f32
      %152 = vector.broadcast %cst_65 : f32 to vector<8x128xf32>
      %153 = arith.addf %152, %151 : vector<8x128xf32>
      %cst_66 = arith.constant 5.000000e-01 : f32
      %154 = vector.broadcast %cst_66 : f32 to vector<8x128xf32>
      %155 = arith.mulf %154, %153 : vector<8x128xf32>
      %156 = arith.mulf %143, %155 : vector<8x128xf32>
      %157 = arith.truncf %156 : vector<8x128xf32> to vector<8x128xbf16>
      %cst_67 = arith.constant dense<0.000000e+00> : vector<8x32xf32>
      %158 = tpu.matmul %157, %111, %cst_67 {dimension_numbers = #tpu.dot_dimension_numbers<[1], [0], [0], [1], [0, 0, 1, 1], [], []>} : vector<8x128xbf16>, vector<128x32xbf16>, vector<8x32xf32> -> vector<8x32xf32>
      %159 = vector.broadcast %108 : vector<1x32xf32> to vector<8x32xf32>
      %160 = arith.addf %158, %159 : vector<8x32xf32>
      %161 = arith.addf %117, %160 : vector<8x32xf32>
      %c0_68 = arith.constant 0 : index
      %162 = arith.index_cast %115 : i32 to index
      %c0_69 = arith.constant 0 : index
      %163 = vector.load %arg11[%c0_68, %162, %c0_69] : memref<1x8x32xf32, #tpu.memory_space<vmem>>, vector<1x8x32xf32>
      %164 = vector.shape_cast %163 : vector<1x8x32xf32> to vector<8x32xf32>
      %165 = vector.shape_cast %161 : vector<8x32xf32> to vector<1x8x32xf32>
      tpu.vector_store %arg11[%c0_68, %162, %c0_69], %165 {strides = array<i32>} : memref<1x8x32xf32, #tpu.memory_space<vmem>>, vector<1x8x32xf32>,
      %c1_i32_70 = arith.constant 1 : i32
    } else {
    }
    return
  }
  func.func @transform_0(%arg0: i32, %arg1: i32) -> (i32, i32, i32) {
    %c0_i32 = arith.constant 0 : i32
    %c0_i32_0 = arith.constant 0 : i32
    %c0_i32_1 = arith.constant 0 : i32
    return %arg0, %c0_i32, %c0_i32_0 : i32, i32, i32
  }
  func.func @transform_1(%arg0: i32, %arg1: i32) -> (i32, i32, i32, i32) {
    %c0_i32 = arith.constant 0 : i32
    %c0_i32_0 = arith.constant 0 : i32
    %c0_i32_1 = arith.constant 0 : i32
    return %arg0, %arg1, %c0_i32, %c0_i32_0 : i32, i32, i32, i32
  }
  func.func @transform_2(%arg0: i32, %arg1: i32) -> (i32, i32, i32) {
    %c0_i32 = arith.constant 0 : i32
    %c0_i32_0 = arith.constant 0 : i32
    %c0_i32_1 = arith.constant 0 : i32
    %c0_i32_2 = arith.constant 0 : i32
    return %c0_i32, %c0_i32_0, %c0_i32_1 : i32, i32, i32
  }
  func.func @transform_3(%arg0: i32, %arg1: i32) -> (i32, i32, i32) {
    %c0_i32 = arith.constant 0 : i32
    %c0_i32_0 = arith.constant 0 : i32
    %c0_i32_1 = arith.constant 0 : i32
    %c0_i32_2 = arith.constant 0 : i32
    return %c0_i32, %c0_i32_0, %c0_i32_1 : i32, i32, i32
  }
  func.func @transform_4(%arg0: i32, %arg1: i32) -> (i32, i32, i32) {
    %c0_i32 = arith.constant 0 : i32
    %c0_i32_0 = arith.constant 0 : i32
    %c0_i32_1 = arith.constant 0 : i32
    %c0_i32_2 = arith.constant 0 : i32
    return %c0_i32, %c0_i32_0, %c0_i32_1 : i32, i32, i32
  }
  func.func @transform_5(%arg0: i32, %arg1: i32) -> (i32, i32) {
    %c0_i32 = arith.constant 0 : i32
    %c0_i32_0 = arith.constant 0 : i32
    %c0_i32_1 = arith.constant 0 : i32
    return %c0_i32, %c0_i32_0 : i32, i32
  }
  func.func @transform_6(%arg0: i32, %arg1: i32) -> (i32, i32) {
    %c0_i32 = arith.constant 0 : i32
    %c0_i32_0 = arith.constant 0 : i32
    %c0_i32_1 = arith.constant 0 : i32
    return %c0_i32, %c0_i32_0 : i32, i32
  }
  func.func @transform_7(%arg0: i32, %arg1: i32) -> (i32, i32) {
    %c0_i32 = arith.constant 0 : i32
    %c0_i32_0 = arith.constant 0 : i32
    %c0_i32_1 = arith.constant 0 : i32
    return %c0_i32, %c0_i32_0 : i32, i32
  }
  func.func @transform_8(%arg0: i32, %arg1: i32) -> (i32, i32) {
    %c0_i32 = arith.constant 0 : i32
    %c0_i32_0 = arith.constant 0 : i32
    %c0_i32_1 = arith.constant 0 : i32
    return %c0_i32, %c0_i32_0 : i32, i32
  }
  func.func @transform_9(%arg0: i32, %arg1: i32) -> (i32, i32, i32) {
    %c0_i32 = arith.constant 0 : i32
    %c0_i32_0 = arith.constant 0 : i32
    %c0_i32_1 = arith.constant 0 : i32
    return %arg0, %c0_i32, %c0_i32_0 : i32, i32, i32
  }
}

module attributes {stable_mosaic.version = 11 : i64} {
  func.func @biased_block_kernel(%arg0: i32, %arg1: i32, %arg2: memref<1x8x32xf32, #tpu.memory_space<vmem>>, %arg3: memref<1x4x8x8xbf16, #tpu.memory_space<vmem>>, %arg4: memref<1x32x96xbf16, #tpu.memory_space<vmem>>, %arg5: memref<1x1x96xf32, #tpu.memory_space<vmem>>, %arg6: memref<1x32x32xbf16, #tpu.memory_space<vmem>>, %arg7: memref<6x32xf32, #tpu.memory_space<vmem>>, %arg8: memref<1x128xf32, #tpu.memory_space<vmem>>, %arg9: memref<32x128xbf16, #tpu.memory_space<vmem>>, %arg10: memref<128x32xbf16, #tpu.memory_space<vmem>>, %arg11: memref<1x8x32xf32, #tpu.memory_space<vmem>>, %arg12: memref<8x32xbf16, #tpu.memory_space<vmem>>, %arg13: memref<8x32xf32, #tpu.memory_space<vmem>>) attributes {dimension_semantics = [#tpu.dimension_semantics<parallel>, #tpu.dimension_semantics<arbitrary>], iteration_bounds = array<i64: 2, 1>, scalar_prefetch = 0 : i64, scratch_operands = 2 : i64, tpu.core_type = #tpu.core_type<tc>, window_params = [{transform_indices = @transform_0, window_bounds = array<i64: 1, 8, 32>}, {transform_indices = @transform_1, window_bounds = array<i64: 1, 4, 8, 8>}, {pipeline_mode = #tpu.pipeline_mode<synchronous>, transform_indices = @transform_2, window_bounds = array<i64: 1, 32, 96>}, {pipeline_mode = #tpu.pipeline_mode<synchronous>, transform_indices = @transform_3, window_bounds = array<i64: 1, 1, 96>}, {pipeline_mode = #tpu.pipeline_mode<synchronous>, transform_indices = @transform_4, window_bounds = array<i64: 1, 32, 32>}, {pipeline_mode = #tpu.pipeline_mode<synchronous>, transform_indices = @transform_5, window_bounds = array<i64: 6, 32>}, {pipeline_mode = #tpu.pipeline_mode<synchronous>, transform_indices = @transform_6, window_bounds = array<i64: 1, 128>}, {pipeline_mode = #tpu.pipeline_mode<synchronous>, transform_indices = @transform_7, window_bounds = array<i64: 32, 128>}, {pipeline_mode = #tpu.pipeline_mode<synchronous>, transform_indices = @transform_8, window_bounds = array<i64: 128, 32>}, {transform_indices = @transform_9, window_bounds = array<i64: 1, 8, 32>}]} {
    %c0_i32 = arith.constant 0 : i32
    %0 = arith.cmpi eq, %arg1, %c0_i32 : i32
    %1 = arith.extui %0 : i1 to i32
    %c0_i32_0 = arith.constant 0 : i32
    %2 = arith.cmpi ne, %1, %c0_i32_0 : i32
    scf.if %2 {
      %c0_44 = arith.constant 0 : index
      %c0_45 = arith.constant 0 : index
      %c0_46 = arith.constant 0 : index
      %106 = vector.load %arg2[%c0_44, %c0_45, %c0_46] : memref<1x8x32xf32, #tpu.memory_space<vmem>>, vector<1x8x32xf32>
      %107 = vector.shape_cast %106 : vector<1x8x32xf32> to vector<8x32xf32>
      %c1_47 = arith.constant 1 : index
      %c0_48 = arith.constant 0 : index
      %108 = vector.load %arg7[%c1_47, %c0_48] : memref<6x32xf32, #tpu.memory_space<vmem>>, vector<1x32xf32>
      %c2_49 = arith.constant 2 : index
      %c0_50 = arith.constant 0 : index
      %109 = vector.load %arg7[%c2_49, %c0_50] : memref<6x32xf32, #tpu.memory_space<vmem>>, vector<1x32xf32>
      %cst_51 = arith.constant dense<0.000000e+00> : vector<8xf32>
      %110 = vector.multi_reduction <add>, %107, %cst_51 [1] : vector<8x32xf32> to vector<8xf32>
      %111 = vector.shape_cast %110 : vector<8xf32> to vector<8x1xf32>
      %cst_52 = arith.constant 3.200000e+01 : f32
      %112 = vector.broadcast %cst_52 : f32 to vector<8x1xf32>
      %113 = arith.divf %111, %112 : vector<8x1xf32>
      %114 = vector.broadcast %113 : vector<8x1xf32> to vector<8x32xf32>
      %115 = arith.subf %107, %114 : vector<8x32xf32>
      %116 = arith.mulf %115, %115 : vector<8x32xf32>
      %cst_53 = arith.constant dense<0.000000e+00> : vector<8xf32>
      %117 = vector.multi_reduction <add>, %116, %cst_53 [1] : vector<8x32xf32> to vector<8xf32>
      %118 = vector.shape_cast %117 : vector<8xf32> to vector<8x1xf32>
      %cst_54 = arith.constant 3.200000e+01 : f32
      %119 = vector.broadcast %cst_54 : f32 to vector<8x1xf32>
      %120 = arith.divf %118, %119 : vector<8x1xf32>
      %121 = vector.broadcast %113 : vector<8x1xf32> to vector<8x32xf32>
      %122 = arith.subf %107, %121 : vector<8x32xf32>
      %cst_55 = arith.constant 9.99999974E-6 : f32
      %123 = vector.broadcast %cst_55 : f32 to vector<8x1xf32>
      %124 = arith.addf %120, %123 : vector<8x1xf32>
      %125 = math.rsqrt %124 : vector<8x1xf32>
      %126 = vector.broadcast %125 : vector<8x1xf32> to vector<8x32xf32>
      %127 = arith.mulf %122, %126 : vector<8x32xf32>
      %128 = vector.broadcast %108 : vector<1x32xf32> to vector<8x32xf32>
      %129 = arith.mulf %127, %128 : vector<8x32xf32>
      %130 = vector.broadcast %109 : vector<1x32xf32> to vector<8x32xf32>
      %131 = arith.addf %129, %130 : vector<8x32xf32>
      %132 = arith.truncf %131 : vector<8x32xf32> to vector<8x32xbf16>
      %c0_56 = arith.constant 0 : index
      %c0_57 = arith.constant 0 : index
      %133 = vector.load %arg12[%c0_56, %c0_57] : memref<8x32xbf16, #tpu.memory_space<vmem>>, vector<8x32xbf16>
      tpu.vector_store %arg12[%c0_56, %c0_57], %132 {strides = array<i32>} : memref<8x32xbf16, #tpu.memory_space<vmem>>, vector<8x32xbf16>,
      %c0_58 = arith.constant 0 : index
      %c0_59 = arith.constant 0 : index
      %134 = vector.load %arg7[%c0_58, %c0_59] : memref<6x32xf32, #tpu.memory_space<vmem>>, vector<1x32xf32>
      %135 = vector.broadcast %134 : vector<1x32xf32> to vector<8x32xf32>
      %136 = arith.addf %107, %135 : vector<8x32xf32>
      %c0_60 = arith.constant 0 : index
      %c0_61 = arith.constant 0 : index
      %137 = vector.load %arg13[%c0_60, %c0_61] : memref<8x32xf32, #tpu.memory_space<vmem>>, vector<8x32xf32>
      tpu.vector_store %arg13[%c0_60, %c0_61], %136 {strides = array<i32>} : memref<8x32xf32, #tpu.memory_space<vmem>>, vector<8x32xf32>,
    } else {
    }
    %c0 = arith.constant 0 : index
    %c0_1 = arith.constant 0 : index
    %3 = vector.load %arg12[%c0, %c0_1] : memref<8x32xbf16, #tpu.memory_space<vmem>>, vector<8x32xbf16>
    %4 = arith.index_cast %arg1 : i32 to index
    %c0_2 = arith.constant 0 : index
    %c0_3 = arith.constant 0 : index
    %5 = vector.load %arg4[%4, %c0_2, %c0_3] : memref<1x32x96xbf16, #tpu.memory_space<vmem>>, vector<1x32x96xbf16>
    %6 = vector.shape_cast %5 : vector<1x32x96xbf16> to vector<32x96xbf16>
    %cst = arith.constant dense<0.000000e+00> : vector<8x96xf32>
    %7 = tpu.matmul %3, %6, %cst {dimension_numbers = #tpu.dot_dimension_numbers<[1], [0], [0], [1], [0, 0, 1, 1], [], []>} : vector<8x32xbf16>, vector<32x96xbf16>, vector<8x96xf32> -> vector<8x96xf32>
    %8 = arith.index_cast %arg1 : i32 to index
    %c0_4 = arith.constant 0 : index
    %c0_5 = arith.constant 0 : index
    %9 = vector.load %arg5[%8, %c0_4, %c0_5] : memref<1x1x96xf32, #tpu.memory_space<vmem>>, vector<1x1x96xf32>
    %10 = vector.shape_cast %9 : vector<1x1x96xf32> to vector<1x96xf32>
    %11 = vector.broadcast %10 : vector<1x96xf32> to vector<8x96xf32>
    %12 = arith.addf %7, %11 : vector<8x96xf32>
    %13 = arith.truncf %12 : vector<8x96xf32> to vector<8x96xbf16>
    %14 = vector.extract_strided_slice %13 {offsets = [0, 0], sizes = [8, 8], strides = [1, 1]} : vector<8x96xbf16> to vector<8x8xbf16>
    %15 = vector.extract_strided_slice %13 {offsets = [0, 32], sizes = [8, 8], strides = [1, 1]} : vector<8x96xbf16> to vector<8x8xbf16>
    %16 = vector.extract_strided_slice %13 {offsets = [0, 64], sizes = [8, 8], strides = [1, 1]} : vector<8x96xbf16> to vector<8x8xbf16>
    %cst_6 = arith.constant dense<0.000000e+00> : vector<8x8xf32>
    %17 = tpu.matmul %14, %15, %cst_6 {dimension_numbers = #tpu.dot_dimension_numbers<[1], [1], [0], [0], [0, 0, 1, 0], [], []>} : vector<8x8xbf16>, vector<8x8xbf16>, vector<8x8xf32> -> vector<8x8xf32>
    %cst_7 = arith.constant dense<0xFF800000> : vector<8xf32>
    %18 = vector.multi_reduction <maximumf>, %17, %cst_7 [1] : vector<8x8xf32> to vector<8xf32>
    %19 = vector.shape_cast %18 : vector<8xf32> to vector<8x1xf32>
    %20 = vector.broadcast %19 : vector<8x1xf32> to vector<8x8xf32>
    %21 = arith.subf %17, %20 : vector<8x8xf32>
    %22 = math.exp %21 : vector<8x8xf32>
    %cst_8 = arith.constant dense<0.000000e+00> : vector<8xf32>
    %23 = vector.multi_reduction <add>, %22, %cst_8 [1] : vector<8x8xf32> to vector<8xf32>
    %24 = vector.shape_cast %23 : vector<8xf32> to vector<8x1xf32>
    %25 = tpu.reciprocal %24 {approx = true} : vector<8x1xf32> -> vector<8x1xf32>
    %26 = vector.broadcast %25 : vector<8x1xf32> to vector<8x8xf32>
    %27 = arith.mulf %22, %26 : vector<8x8xf32>
    %c0_9 = arith.constant 0 : index
    %c0_10 = arith.constant 0 : index
    %c0_11 = arith.constant 0 : index
    %c0_12 = arith.constant 0 : index
    %28 = vector.load %arg3[%c0_9, %c0_10, %c0_11, %c0_12] : memref<1x4x8x8xbf16, #tpu.memory_space<vmem>>, vector<1x1x8x8xbf16>
    %29 = vector.shape_cast %28 : vector<1x1x8x8xbf16> to vector<8x8xbf16>
    %30 = arith.extf %29 : vector<8x8xbf16> to vector<8x8xf32>
    %31 = arith.addf %27, %30 : vector<8x8xf32>
    %32 = arith.truncf %31 : vector<8x8xf32> to vector<8x8xbf16>
    %cst_13 = arith.constant dense<0.000000e+00> : vector<8x8xf32>
    %33 = tpu.matmul %32, %16, %cst_13 {dimension_numbers = #tpu.dot_dimension_numbers<[1], [0], [0], [1], [0, 0, 1, 1], [], []>} : vector<8x8xbf16>, vector<8x8xbf16>, vector<8x8xf32> -> vector<8x8xf32>
    %34 = vector.extract_strided_slice %13 {offsets = [0, 8], sizes = [8, 8], strides = [1, 1]} : vector<8x96xbf16> to vector<8x8xbf16>
    %35 = vector.extract_strided_slice %13 {offsets = [0, 40], sizes = [8, 8], strides = [1, 1]} : vector<8x96xbf16> to vector<8x8xbf16>
    %36 = vector.extract_strided_slice %13 {offsets = [0, 72], sizes = [8, 8], strides = [1, 1]} : vector<8x96xbf16> to vector<8x8xbf16>
    %cst_14 = arith.constant dense<0.000000e+00> : vector<8x8xf32>
    %37 = tpu.matmul %34, %35, %cst_14 {dimension_numbers = #tpu.dot_dimension_numbers<[1], [1], [0], [0], [0, 0, 1, 0], [], []>} : vector<8x8xbf16>, vector<8x8xbf16>, vector<8x8xf32> -> vector<8x8xf32>
    %cst_15 = arith.constant dense<0xFF800000> : vector<8xf32>
    %38 = vector.multi_reduction <maximumf>, %37, %cst_15 [1] : vector<8x8xf32> to vector<8xf32>
    %39 = vector.shape_cast %38 : vector<8xf32> to vector<8x1xf32>
    %40 = vector.broadcast %39 : vector<8x1xf32> to vector<8x8xf32>
    %41 = arith.subf %37, %40 : vector<8x8xf32>
    %42 = math.exp %41 : vector<8x8xf32>
    %cst_16 = arith.constant dense<0.000000e+00> : vector<8xf32>
    %43 = vector.multi_reduction <add>, %42, %cst_16 [1] : vector<8x8xf32> to vector<8xf32>
    %44 = vector.shape_cast %43 : vector<8xf32> to vector<8x1xf32>
    %45 = tpu.reciprocal %44 {approx = true} : vector<8x1xf32> -> vector<8x1xf32>
    %46 = vector.broadcast %45 : vector<8x1xf32> to vector<8x8xf32>
    %47 = arith.mulf %42, %46 : vector<8x8xf32>
    %c0_17 = arith.constant 0 : index
    %c1 = arith.constant 1 : index
    %c0_18 = arith.constant 0 : index
    %c0_19 = arith.constant 0 : index
    %48 = vector.load %arg3[%c0_17, %c1, %c0_18, %c0_19] : memref<1x4x8x8xbf16, #tpu.memory_space<vmem>>, vector<1x1x8x8xbf16>
    %49 = vector.shape_cast %48 : vector<1x1x8x8xbf16> to vector<8x8xbf16>
    %50 = arith.extf %49 : vector<8x8xbf16> to vector<8x8xf32>
    %51 = arith.addf %47, %50 : vector<8x8xf32>
    %52 = arith.truncf %51 : vector<8x8xf32> to vector<8x8xbf16>
    %cst_20 = arith.constant dense<0.000000e+00> : vector<8x8xf32>
    %53 = tpu.matmul %52, %36, %cst_20 {dimension_numbers = #tpu.dot_dimension_numbers<[1], [0], [0], [1], [0, 0, 1, 1], [], []>} : vector<8x8xbf16>, vector<8x8xbf16>, vector<8x8xf32> -> vector<8x8xf32>
    %54 = vector.extract_strided_slice %13 {offsets = [0, 16], sizes = [8, 8], strides = [1, 1]} : vector<8x96xbf16> to vector<8x8xbf16>
    %55 = vector.extract_strided_slice %13 {offsets = [0, 48], sizes = [8, 8], strides = [1, 1]} : vector<8x96xbf16> to vector<8x8xbf16>
    %56 = vector.extract_strided_slice %13 {offsets = [0, 80], sizes = [8, 8], strides = [1, 1]} : vector<8x96xbf16> to vector<8x8xbf16>
    %cst_21 = arith.constant dense<0.000000e+00> : vector<8x8xf32>
    %57 = tpu.matmul %54, %55, %cst_21 {dimension_numbers = #tpu.dot_dimension_numbers<[1], [1], [0], [0], [0, 0, 1, 0], [], []>} : vector<8x8xbf16>, vector<8x8xbf16>, vector<8x8xf32> -> vector<8x8xf32>
    %cst_22 = arith.constant dense<0xFF800000> : vector<8xf32>
    %58 = vector.multi_reduction <maximumf>, %57, %cst_22 [1] : vector<8x8xf32> to vector<8xf32>
    %59 = vector.shape_cast %58 : vector<8xf32> to vector<8x1xf32>
    %60 = vector.broadcast %59 : vector<8x1xf32> to vector<8x8xf32>
    %61 = arith.subf %57, %60 : vector<8x8xf32>
    %62 = math.exp %61 : vector<8x8xf32>
    %cst_23 = arith.constant dense<0.000000e+00> : vector<8xf32>
    %63 = vector.multi_reduction <add>, %62, %cst_23 [1] : vector<8x8xf32> to vector<8xf32>
    %64 = vector.shape_cast %63 : vector<8xf32> to vector<8x1xf32>
    %65 = tpu.reciprocal %64 {approx = true} : vector<8x1xf32> -> vector<8x1xf32>
    %66 = vector.broadcast %65 : vector<8x1xf32> to vector<8x8xf32>
    %67 = arith.mulf %62, %66 : vector<8x8xf32>
    %c0_24 = arith.constant 0 : index
    %c2 = arith.constant 2 : index
    %c0_25 = arith.constant 0 : index
    %c0_26 = arith.constant 0 : index
    %68 = vector.load %arg3[%c0_24, %c2, %c0_25, %c0_26] : memref<1x4x8x8xbf16, #tpu.memory_space<vmem>>, vector<1x1x8x8xbf16>
    %69 = vector.shape_cast %68 : vector<1x1x8x8xbf16> to vector<8x8xbf16>
    %70 = arith.extf %69 : vector<8x8xbf16> to vector<8x8xf32>
    %71 = arith.addf %67, %70 : vector<8x8xf32>
    %72 = arith.truncf %71 : vector<8x8xf32> to vector<8x8xbf16>
    %cst_27 = arith.constant dense<0.000000e+00> : vector<8x8xf32>
    %73 = tpu.matmul %72, %56, %cst_27 {dimension_numbers = #tpu.dot_dimension_numbers<[1], [0], [0], [1], [0, 0, 1, 1], [], []>} : vector<8x8xbf16>, vector<8x8xbf16>, vector<8x8xf32> -> vector<8x8xf32>
    %74 = vector.extract_strided_slice %13 {offsets = [0, 24], sizes = [8, 8], strides = [1, 1]} : vector<8x96xbf16> to vector<8x8xbf16>
    %75 = vector.extract_strided_slice %13 {offsets = [0, 56], sizes = [8, 8], strides = [1, 1]} : vector<8x96xbf16> to vector<8x8xbf16>
    %76 = vector.extract_strided_slice %13 {offsets = [0, 88], sizes = [8, 8], strides = [1, 1]} : vector<8x96xbf16> to vector<8x8xbf16>
    %cst_28 = arith.constant dense<0.000000e+00> : vector<8x8xf32>
    %77 = tpu.matmul %74, %75, %cst_28 {dimension_numbers = #tpu.dot_dimension_numbers<[1], [1], [0], [0], [0, 0, 1, 0], [], []>} : vector<8x8xbf16>, vector<8x8xbf16>, vector<8x8xf32> -> vector<8x8xf32>
    %cst_29 = arith.constant dense<0xFF800000> : vector<8xf32>
    %78 = vector.multi_reduction <maximumf>, %77, %cst_29 [1] : vector<8x8xf32> to vector<8xf32>
    %79 = vector.shape_cast %78 : vector<8xf32> to vector<8x1xf32>
    %80 = vector.broadcast %79 : vector<8x1xf32> to vector<8x8xf32>
    %81 = arith.subf %77, %80 : vector<8x8xf32>
    %82 = math.exp %81 : vector<8x8xf32>
    %cst_30 = arith.constant dense<0.000000e+00> : vector<8xf32>
    %83 = vector.multi_reduction <add>, %82, %cst_30 [1] : vector<8x8xf32> to vector<8xf32>
    %84 = vector.shape_cast %83 : vector<8xf32> to vector<8x1xf32>
    %85 = tpu.reciprocal %84 {approx = true} : vector<8x1xf32> -> vector<8x1xf32>
    %86 = vector.broadcast %85 : vector<8x1xf32> to vector<8x8xf32>
    %87 = arith.mulf %82, %86 : vector<8x8xf32>
    %c0_31 = arith.constant 0 : index
    %c3 = arith.constant 3 : index
    %c0_32 = arith.constant 0 : index
    %c0_33 = arith.constant 0 : index
    %88 = vector.load %arg3[%c0_31, %c3, %c0_32, %c0_33] : memref<1x4x8x8xbf16, #tpu.memory_space<vmem>>, vector<1x1x8x8xbf16>
    %89 = vector.shape_cast %88 : vector<1x1x8x8xbf16> to vector<8x8xbf16>
    %90 = arith.extf %89 : vector<8x8xbf16> to vector<8x8xf32>
    %91 = arith.addf %87, %90 : vector<8x8xf32>
    %92 = arith.truncf %91 : vector<8x8xf32> to vector<8x8xbf16>
    %cst_34 = arith.constant dense<0.000000e+00> : vector<8x8xf32>
    %93 = tpu.matmul %92, %76, %cst_34 {dimension_numbers = #tpu.dot_dimension_numbers<[1], [0], [0], [1], [0, 0, 1, 1], [], []>} : vector<8x8xbf16>, vector<8x8xbf16>, vector<8x8xf32> -> vector<8x8xf32>
    %94 = tpu.concatenate %33, %53, %73, %93 in 1 : vector<8x8xf32>, vector<8x8xf32>, vector<8x8xf32>, vector<8x8xf32> -> vector<8x32xf32>
    %c0_35 = arith.constant 0 : index
    %c0_36 = arith.constant 0 : index
    %95 = vector.load %arg13[%c0_35, %c0_36] : memref<8x32xf32, #tpu.memory_space<vmem>>, vector<8x32xf32>
    %96 = arith.truncf %94 : vector<8x32xf32> to vector<8x32xbf16>
    %97 = arith.index_cast %arg1 : i32 to index
    %c0_37 = arith.constant 0 : index
    %c0_38 = arith.constant 0 : index
    %98 = vector.load %arg6[%97, %c0_37, %c0_38] : memref<1x32x32xbf16, #tpu.memory_space<vmem>>, vector<1x32x32xbf16>
    %99 = vector.shape_cast %98 : vector<1x32x32xbf16> to vector<32x32xbf16>
    %cst_39 = arith.constant dense<0.000000e+00> : vector<8x32xf32>
    %100 = tpu.matmul %96, %99, %cst_39 {dimension_numbers = #tpu.dot_dimension_numbers<[1], [0], [0], [1], [0, 0, 1, 1], [], []>} : vector<8x32xbf16>, vector<32x32xbf16>, vector<8x32xf32> -> vector<8x32xf32>
    %101 = arith.addf %95, %100 : vector<8x32xf32>
    %c0_40 = arith.constant 0 : index
    %c0_41 = arith.constant 0 : index
    %102 = vector.load %arg13[%c0_40, %c0_41] : memref<8x32xf32, #tpu.memory_space<vmem>>, vector<8x32xf32>
    tpu.vector_store %arg13[%c0_40, %c0_41], %101 {strides = array<i32>} : memref<8x32xf32, #tpu.memory_space<vmem>>, vector<8x32xf32>,
    %c0_i32_42 = arith.constant 0 : i32
    %103 = arith.cmpi eq, %arg1, %c0_i32_42 : i32
    %104 = arith.extui %103 : i1 to i32
    %c0_i32_43 = arith.constant 0 : i32
    %105 = arith.cmpi ne, %104, %c0_i32_43 : i32
    scf.if %105 {
      %c3_44 = arith.constant 3 : index
      %c0_45 = arith.constant 0 : index
      %106 = vector.load %arg7[%c3_44, %c0_45] : memref<6x32xf32, #tpu.memory_space<vmem>>, vector<1x32xf32>
      %c4 = arith.constant 4 : index
      %c0_46 = arith.constant 0 : index
      %107 = vector.load %arg7[%c4, %c0_46] : memref<6x32xf32, #tpu.memory_space<vmem>>, vector<1x32xf32>
      %c5 = arith.constant 5 : index
      %c0_47 = arith.constant 0 : index
      %108 = vector.load %arg7[%c5, %c0_47] : memref<6x32xf32, #tpu.memory_space<vmem>>, vector<1x32xf32>
      %c0_48 = arith.constant 0 : index
      %c0_49 = arith.constant 0 : index
      %109 = vector.load %arg8[%c0_48, %c0_49] : memref<1x128xf32, #tpu.memory_space<vmem>>, vector<1x128xf32>
      %c0_50 = arith.constant 0 : index
      %c0_51 = arith.constant 0 : index
      %110 = vector.load %arg9[%c0_50, %c0_51] : memref<32x128xbf16, #tpu.memory_space<vmem>>, vector<32x128xbf16>
      %c0_52 = arith.constant 0 : index
      %c0_53 = arith.constant 0 : index
      %111 = vector.load %arg10[%c0_52, %c0_53] : memref<128x32xbf16, #tpu.memory_space<vmem>>, vector<128x32xbf16>
      %c0_i32_54 = arith.constant 0 : i32
      %c1_i32 = arith.constant 1 : i32
      %112 = arith.muli %c0_i32_54, %c1_i32 : i32
      %c0_i32_55 = arith.constant 0 : i32
      %113 = arith.addi %c0_i32_55, %112 : i32
      %c8_i32 = arith.constant 8 : i32
      %114 = arith.muli %113, %c8_i32 : i32
      %115 = tpu.assume_multiple %114, 8 : i32
      %116 = arith.index_cast %115 : i32 to index
      %c0_56 = arith.constant 0 : index
      %117 = vector.load %arg13[%116, %c0_56] : memref<8x32xf32, #tpu.memory_space<vmem>>, vector<8x32xf32>
      %cst_57 = arith.constant dense<0.000000e+00> : vector<8xf32>
      %118 = vector.multi_reduction <add>, %117, %cst_57 [1] : vector<8x32xf32> to vector<8xf32>
      %119 = vector.shape_cast %118 : vector<8xf32> to vector<8x1xf32>
      %cst_58 = arith.constant 3.200000e+01 : f32
      %120 = vector.broadcast %cst_58 : f32 to vector<8x1xf32>
      %121 = arith.divf %119, %120 : vector<8x1xf32>
      %122 = vector.broadcast %121 : vector<8x1xf32> to vector<8x32xf32>
      %123 = arith.subf %117, %122 : vector<8x32xf32>
      %124 = arith.mulf %123, %123 : vector<8x32xf32>
      %cst_59 = arith.constant dense<0.000000e+00> : vector<8xf32>
      %125 = vector.multi_reduction <add>, %124, %cst_59 [1] : vector<8x32xf32> to vector<8xf32>
      %126 = vector.shape_cast %125 : vector<8xf32> to vector<8x1xf32>
      %cst_60 = arith.constant 3.200000e+01 : f32
      %127 = vector.broadcast %cst_60 : f32 to vector<8x1xf32>
      %128 = arith.divf %126, %127 : vector<8x1xf32>
      %129 = vector.broadcast %121 : vector<8x1xf32> to vector<8x32xf32>
      %130 = arith.subf %117, %129 : vector<8x32xf32>
      %cst_61 = arith.constant 9.99999974E-6 : f32
      %131 = vector.broadcast %cst_61 : f32 to vector<8x1xf32>
      %132 = arith.addf %128, %131 : vector<8x1xf32>
      %133 = math.rsqrt %132 : vector<8x1xf32>
      %134 = vector.broadcast %133 : vector<8x1xf32> to vector<8x32xf32>
      %135 = arith.mulf %130, %134 : vector<8x32xf32>
      %136 = vector.broadcast %106 : vector<1x32xf32> to vector<8x32xf32>
      %137 = arith.mulf %135, %136 : vector<8x32xf32>
      %138 = vector.broadcast %107 : vector<1x32xf32> to vector<8x32xf32>
      %139 = arith.addf %137, %138 : vector<8x32xf32>
      %140 = arith.truncf %139 : vector<8x32xf32> to vector<8x32xbf16>
      %cst_62 = arith.constant dense<0.000000e+00> : vector<8x128xf32>
      %141 = tpu.matmul %140, %110, %cst_62 {dimension_numbers = #tpu.dot_dimension_numbers<[1], [0], [0], [1], [0, 0, 1, 1], [], []>} : vector<8x32xbf16>, vector<32x128xbf16>, vector<8x128xf32> -> vector<8x128xf32>
      %142 = vector.broadcast %109 : vector<1x128xf32> to vector<8x128xf32>
      %143 = arith.addf %141, %142 : vector<8x128xf32>
      %144 = arith.mulf %143, %143 : vector<8x128xf32>
      %145 = arith.mulf %143, %144 : vector<8x128xf32>
      %cst_63 = arith.constant 4.471500e-02 : f32
      %146 = vector.broadcast %cst_63 : f32 to vector<8x128xf32>
      %147 = arith.mulf %146, %145 : vector<8x128xf32>
      %148 = arith.addf %143, %147 : vector<8x128xf32>
      %cst_64 = arith.constant 0.797884583 : f32
      %149 = vector.broadcast %cst_64 : f32 to vector<8x128xf32>
      %150 = arith.mulf %149, %148 : vector<8x128xf32>
      %151 = math.tanh %150 : vector<8x128xf32>
      %cst_65 = arith.constant 1.000000e+00 : f32
      %152 = vector.broadcast %cst_65 : f32 to vector<8x128xf32>
      %153 = arith.addf %152, %151 : vector<8x128xf32>
      %cst_66 = arith.constant 5.000000e-01 : f32
      %154 = vector.broadcast %cst_66 : f32 to vector<8x128xf32>
      %155 = arith.mulf %154, %153 : vector<8x128xf32>
      %156 = arith.mulf %143, %155 : vector<8x128xf32>
      %157 = arith.truncf %156 : vector<8x128xf32> to vector<8x128xbf16>
      %cst_67 = arith.constant dense<0.000000e+00> : vector<8x32xf32>
      %158 = tpu.matmul %157, %111, %cst_67 {dimension_numbers = #tpu.dot_dimension_numbers<[1], [0], [0], [1], [0, 0, 1, 1], [], []>} : vector<8x128xbf16>, vector<128x32xbf16>, vector<8x32xf32> -> vector<8x32xf32>
      %159 = vector.broadcast %108 : vector<1x32xf32> to vector<8x32xf32>
      %160 = arith.addf %158, %159 : vector<8x32xf32>
      %161 = arith.addf %117, %160 : vector<8x32xf32>
      %c0_68 = arith.constant 0 : index
      %162 = arith.index_cast %115 : i32 to index
      %c0_69 = arith.constant 0 : index
      %163 = vector.load %arg11[%c0_68, %162, %c0_69] : memref<1x8x32xf32, #tpu.memory_space<vmem>>, vector<1x8x32xf32>
      %164 = vector.shape_cast %163 : vector<1x8x32xf32> to vector<8x32xf32>
      %165 = vector.shape_cast %161 : vector<8x32xf32> to vector<1x8x32xf32>
      tpu.vector_store %arg11[%c0_68, %162, %c0_69], %165 {strides = array<i32>} : memref<1x8x32xf32, #tpu.memory_space<vmem>>, vector<1x8x32xf32>,
      %c1_i32_70 = arith.constant 1 : i32
    } else {
    }
    return
  }
  func.func @transform_0(%arg0: i32, %arg1: i32) -> (i32, i32, i32) {
    %c0_i32 = arith.constant 0 : i32
    %c0_i32_0 = arith.constant 0 : i32
    %c0_i32_1 = arith.constant 0 : i32
    return %arg0, %c0_i32, %c0_i32_0 : i32, i32, i32
  }
  func.func @transform_1(%arg0: i32, %arg1: i32) -> (i32, i32, i32, i32) {
    %c0_i32 = arith.constant 0 : i32
    %c0_i32_0 = arith.constant 0 : i32
    %c0_i32_1 = arith.constant 0 : i32
    return %arg0, %arg1, %c0_i32, %c0_i32_0 : i32, i32, i32, i32
  }
  func.func @transform_2(%arg0: i32, %arg1: i32) -> (i32, i32, i32) {
    %c0_i32 = arith.constant 0 : i32
    %c0_i32_0 = arith.constant 0 : i32
    %c0_i32_1 = arith.constant 0 : i32
    %c0_i32_2 = arith.constant 0 : i32
    return %c0_i32, %c0_i32_0, %c0_i32_1 : i32, i32, i32
  }
  func.func @transform_3(%arg0: i32, %arg1: i32) -> (i32, i32, i32) {
    %c0_i32 = arith.constant 0 : i32
    %c0_i32_0 = arith.constant 0 : i32
    %c0_i32_1 = arith.constant 0 : i32
    %c0_i32_2 = arith.constant 0 : i32
    return %c0_i32, %c0_i32_0, %c0_i32_1 : i32, i32, i32
  }
  func.func @transform_4(%arg0: i32, %arg1: i32) -> (i32, i32, i32) {
    %c0_i32 = arith.constant 0 : i32
    %c0_i32_0 = arith.constant 0 : i32
    %c0_i32_1 = arith.constant 0 : i32
    %c0_i32_2 = arith.constant 0 : i32
    return %c0_i32, %c0_i32_0, %c0_i32_1 : i32, i32, i32
  }
  func.func @transform_5(%arg0: i32, %arg1: i32) -> (i32, i32) {
    %c0_i32 = arith.constant 0 : i32
    %c0_i32_0 = arith.constant 0 : i32
    %c0_i32_1 = arith.constant 0 : i32
    return %c0_i32, %c0_i32_0 : i32, i32
  }
  func.func @transform_6(%arg0: i32, %arg1: i32) -> (i32, i32) {
    %c0_i32 = arith.constant 0 : i32
    %c0_i32_0 = arith.constant 0 : i32
    %c0_i32_1 = arith.constant 0 : i32
    return %c0_i32, %c0_i32_0 : i32, i32
  }
  func.func @transform_7(%arg0: i32, %arg1: i32) -> (i32, i32) {
    %c0_i32 = arith.constant 0 : i32
    %c0_i32_0 = arith.constant 0 : i32
    %c0_i32_1 = arith.constant 0 : i32
    return %c0_i32, %c0_i32_0 : i32, i32
  }
  func.func @transform_8(%arg0: i32, %arg1: i32) -> (i32, i32) {
    %c0_i32 = arith.constant 0 : i32
    %c0_i32_0 = arith.constant 0 : i32
    %c0_i32_1 = arith.constant 0 : i32
    return %c0_i32, %c0_i32_0 : i32, i32
  }
  func.func @transform_9(%arg0: i32, %arg1: i32) -> (i32, i32, i32) {
    %c0_i32 = arith.constant 0 : i32
    %c0_i32_0 = arith.constant 0 : i32
    %c0_i32_1 = arith.constant 0 : i32
    return %arg0, %c0_i32, %c0_i32_0 : i32, i32, i32
  }
}

</mosaic_0001>

<llo_original>
// kernel: tpu_custom_call.1
$region0: #{tpu_custom_call.1}
  #allocation0 [shape = 'u32[]', space=smem, size = 0x4, offset = 0x4, fixed_abs, tag = 'smem constant byte address 0x4 - core index']
  #allocation1 [shape = 'u32[144,128]{1,0:T(1,128)}', space=vmem, size = 0x12000, scoped, tag = 'internal scratch']
  #allocation2 [shape = 'bf16[8,32]{1,0:T(8,128)(2,1)}', space=vmem, size = 0x800, scoped, tag = 'scratch operand']
  #allocation3 [shape = 'f32[8,32]{1,0:T(8,128)}', space=vmem, size = 0x1000, scoped, tag = 'scratch operand']
  %s0 = inlined_call_operand.vmem [shape: f32[2,8,32], index: 0, kind: input, shape index: {}]
  %s1 = inlined_call_operand.vmem [shape: bf16[2,4,8,8], index: 1, kind: input, shape index: {}]
  %s2 = inlined_call_operand.vmem [shape: bf16[1,32,96], index: 2, kind: input, shape index: {}]
  %s3 = inlined_call_operand.vmem [shape: f32[1,1,96], index: 3, kind: input, shape index: {}]
  %s4 = inlined_call_operand.vmem [shape: bf16[1,32,32], index: 4, kind: input, shape index: {}]
  %s5 = inlined_call_operand.vmem [shape: f32[6,32], index: 5, kind: input, shape index: {}]
  %s6 = inlined_call_operand.vmem [shape: f32[1,128], index: 6, kind: input, shape index: {}]
  %s7 = inlined_call_operand.hbm [shape: bf16[32,128], index: 7, kind: input, shape index: {}]
  %s8 = inlined_call_operand.vmem [shape: bf16[128,32], index: 8, kind: input, shape index: {}]
  %s9 = inlined_call_operand.hbm [shape: f32[2,8,32], index: 9, kind: output, shape index: {}]
  %s10 = sld [smem:[#allocation0]]
  $region81: #{tpu_custom_call.1} parent=0
    _
  %s12 = ssub.s32 1, %s10
  %s13 = scalar_select 0, %s12, %s10
  $region1: #{tpu_custom_call.1} parent=0
    #allocation4 [shape = 'u8[8192]{0}', space=vmem, size = 0x2000, scoped, tag = 'input window, operand 7, single buffered']
    #allocation5 [shape = 's32[2]{0}', space=sflag, size = 0x8, scoped, tag = 'scoped memory for tpu_custom_call.1']
    #allocation6 [shape = 's32[2]{0}', space=sflag, size = 0x8, scoped, tag = 'scoped memory for tpu_custom_call.1']
    #allocation7 [shape = 'u8[8192]{0}', space=vmem, size = 0x2000, scoped, tag = 'output window, operand 0']
    %14 = vsyncpa [#allocation5], 0
    %15 = vsyncpa [#allocation6], 0
    %s16 = scalar_lea.sflag [#allocation6], 1
    %17 = vsyncpa %s16, 0
    loop: start=0, step=1, limit=4
    $region2: #{tpu_custom_call.1} parent=1 // loop_pre_header
      _
    $region3: #{tpu_custom_call.1} parent=1 // loop_header
      %s19 = sphi 0, %s23
      %p20 = scmp.ge.s32.totalorder %s19, 4
      %s26 = sphi 0, %s38
      %s27 = sphi 0, %s34
      %s28 = sphi 0, %s26
      %s29 = sphi 0, %s27
      %s30 = sphi 0, %s28
      %s31 = sphi 0, %s29
      %s41 = sphi 0, %s43
      %s44 = sphi 0, %s41
      %s45 = sphi 0, %s44
      %s61 = sphi 0, %s45
      %s69 = sphi 0, %s71
      %s72 = sphi 0, %s69
      %s73 = sphi 0, %s72
      %s89 = sphi 0, %s73
      %s93 = sphi 0, %s93
      %s95 = sphi 0, %s93
      %s96 = sphi 0, %s95
      %s110 = sphi 0, %s96
      %s114 = sphi 0, %s114
      %s116 = sphi 0, %s114
      %s117 = sphi 0, %s116
      %s131 = sphi 0, %s117
      %s135 = sphi 0, %s135
      %s137 = sphi 0, %s135
      %s138 = sphi 0, %s137
      %s152 = sphi 0, %s138
      %s156 = sphi 0, %s156
      %s158 = sphi 0, %s156
      %s159 = sphi 0, %s158
      %s173 = sphi 0, %s159
      %s177 = sphi 0, %s177
      %s179 = sphi 0, %s177
      %s180 = sphi 0, %s179
      %s194 = sphi 0, %s180
      %s198 = sphi 0, %s198
      %s200 = sphi 0, %s198
      %s201 = sphi 0, %s200
      %s215 = sphi 0, %s201
      %s219 = sphi 0, %s219
      %s221 = sphi 0, %s219
      %s222 = sphi 0, %s221
      %s236 = sphi 0, %s222
      %s242 = sphi 0, %s244
      %s245 = sphi 0, %s242
      %s246 = sphi 0, %s245
      %s262 = sphi 0, %s246
    $region4: #{tpu_custom_call.1} parent=1 // loop_header_branch
      %22 = sbr.rel (%p20) target = $region8
    $region5: #{tpu_custom_call.1} parent=1 // loop_body
      %s24 = ssub.s32 %s19, 1
      %s25 = ssub.s32 %s19, 2
      %s32 = sadd.s32 1, %s27
      %p33 = scmp.ge.s32.totalorder %s32, 1
      %s34 = scalar_select %p33, 0, %s32
      %s35 = sadd.s32 1, %s26
      %s36 = scalar_select %p33, %s35, %s26
      %p37 = scmp.ge.s32.totalorder %s36, 2
      %s38 = scalar_select %p37, 0, %s36
      %s39 = ssub.s32 %s26, %s38
      %p40 = scmp.eq.s32.totalorder %s39, 0
      %s42 = sadd.s32 %s41, 1
      %s43 = scalar_select %p40, %s41, %s42
      %p46 = pneg %p40
      %p47 = scmp.eq.s32.totalorder %s19, 1
      %p48 = por %p46, %p47
      %p49 = scmp.ne.s32.totalorder %s41, %s44
      %p50 = scmp.eq.s32.totalorder %s19, 0
      %p51 = por %p49, %p50
      %p52 = scmp.ne.s32.totalorder %s41, %s44
      %p53 = scmp.eq.s32.totalorder %s24, 1
      %p54 = por %p52, %p53
      %p55 = scmp.ne.s32.totalorder %s44, %s45
      %p56 = scmp.eq.s32.totalorder %s24, 0
      %p57 = por %p55, %p56
      %p58 = scmp.ne.s32.totalorder %s44, %s45
      %p59 = scmp.eq.s32.totalorder %s25, 1
      %p60 = por %p58, %p59
      %p62 = scmp.ne.s32.totalorder %s45, %s61
      %p63 = scmp.eq.s32.totalorder %s25, 0
      %p64 = por %p62, %p63
      %s65 = ssub.s32 %s26, %s38
      %s66 = ssub.s32 %s27, %s34
      %s67 = sor.u32 %s65, %s66
      %p68 = scmp.eq.s32.totalorder %s67, 0
      %s70 = sadd.s32 %s69, 1
      %s71 = scalar_select %p68, %s69, %s70
      %p74 = pneg %p68
      %p75 = scmp.eq.s32.totalorder %s19, 1
      %p76 = por %p74, %p75
      %p77 = scmp.ne.s32.totalorder %s69, %s72
      %p78 = scmp.eq.s32.totalorder %s19, 0
      %p79 = por %p77, %p78
      %p80 = scmp.ne.s32.totalorder %s69, %s72
      %p81 = scmp.eq.s32.totalorder %s24, 1
      %p82 = por %p80, %p81
      %p83 = scmp.ne.s32.totalorder %s72, %s73
      %p84 = scmp.eq.s32.totalorder %s24, 0
      %p85 = por %p83, %p84
      %p86 = scmp.ne.s32.totalorder %s72, %s73
      %p87 = scmp.eq.s32.totalorder %s25, 1
      %p88 = por %p86, %p87
      %p90 = scmp.ne.s32.totalorder %s73, %s89
      %p91 = scmp.eq.s32.totalorder %s25, 0
      %p92 = por %p90, %p91
      %s94 = sadd.s32 %s93, 1
      %p97 = scmp.eq.s32.totalorder %s19, 1
      %p98 = scmp.ne.s32.totalorder %s93, %s95
      %p99 = scmp.eq.s32.totalorder %s19, 0
      %p100 = por %p98, %p99
      %p101 = scmp.ne.s32.totalorder %s93, %s95
      %p102 = scmp.eq.s32.totalorder %s24, 1
      %p103 = por %p101, %p102
      %p104 = scmp.ne.s32.totalorder %s95, %s96
      %p105 = scmp.eq.s32.totalorder %s24, 0
      %p106 = por %p104, %p105
      %p107 = scmp.ne.s32.totalorder %s95, %s96
      %p108 = scmp.eq.s32.totalorder %s25, 1
      %p109 = por %p107, %p108
      %p111 = scmp.ne.s32.totalorder %s96, %s110
      %p112 = scmp.eq.s32.totalorder %s25, 0
      %p113 = por %p111, %p112
      %s115 = sadd.s32 %s114, 1
      %p118 = scmp.eq.s32.totalorder %s19, 1
      %p119 = scmp.ne.s32.totalorder %s114, %s116
      %p120 = scmp.eq.s32.totalorder %s19, 0
      %p121 = por %p119, %p120
      %p122 = scmp.ne.s32.totalorder %s114, %s116
      %p123 = scmp.eq.s32.totalorder %s24, 1
      %p124 = por %p122, %p123
      %p125 = scmp.ne.s32.totalorder %s116, %s117
      %p126 = scmp.eq.s32.totalorder %s24, 0
      %p127 = por %p125, %p126
      %p128 = scmp.ne.s32.totalorder %s116, %s117
      %p129 = scmp.eq.s32.totalorder %s25, 1
      %p130 = por %p128, %p129
      %p132 = scmp.ne.s32.totalorder %s117, %s131
      %p133 = scmp.eq.s32.totalorder %s25, 0
      %p134 = por %p132, %p133
      %s136 = sadd.s32 %s135, 1
      %p139 = scmp.eq.s32.totalorder %s19, 1
      %p140 = scmp.ne.s32.totalorder %s135, %s137
      %p141 = scmp.eq.s32.totalorder %s19, 0
      %p142 = por %p140, %p141
      %p143 = scmp.ne.s32.totalorder %s135, %s137
      %p144 = scmp.eq.s32.totalorder %s24, 1
      %p145 = por %p143, %p144
      %p146 = scmp.ne.s32.totalorder %s137, %s138
      %p147 = scmp.eq.s32.totalorder %s24, 0
      %p148 = por %p146, %p147
      %p149 = scmp.ne.s32.totalorder %s137, %s138
      %p150 = scmp.eq.s32.totalorder %s25, 1
      %p151 = por %p149, %p150
      %p153 = scmp.ne.s32.totalorder %s138, %s152
      %p154 = scmp.eq.s32.totalorder %s25, 0
      %p155 = por %p153, %p154
      %s157 = sadd.s32 %s156, 1
      %p160 = scmp.eq.s32.totalorder %s19, 1
      %p161 = scmp.ne.s32.totalorder %s156, %s158
      %p162 = scmp.eq.s32.totalorder %s19, 0
      %p163 = por %p161, %p162
      %p164 = scmp.ne.s32.totalorder %s156, %s158
      %p165 = scmp.eq.s32.totalorder %s24, 1
      %p166 = por %p164, %p165
      %p167 = scmp.ne.s32.totalorder %s158, %s159
      %p168 = scmp.eq.s32.totalorder %s24, 0
      %p169 = por %p167, %p168
      %p170 = scmp.ne.s32.totalorder %s158, %s159
      %p171 = scmp.eq.s32.totalorder %s25, 1
      %p172 = por %p170, %p171
      %p174 = scmp.ne.s32.totalorder %s159, %s173
      %p175 = scmp.eq.s32.totalorder %s25, 0
      %p176 = por %p174, %p175
      %s178 = sadd.s32 %s177, 1
      %p181 = scmp.eq.s32.totalorder %s19, 1
      %p182 = scmp.ne.s32.totalorder %s177, %s179
      %p183 = scmp.eq.s32.totalorder %s19, 0
      %p184 = por %p182, %p183
      %p185 = scmp.ne.s32.totalorder %s177, %s179
      %p186 = scmp.eq.s32.totalorder %s24, 1
      %p187 = por %p185, %p186
      %p188 = scmp.ne.s32.totalorder %s179, %s180
      %p189 = scmp.eq.s32.totalorder %s24, 0
      %p190 = por %p188, %p189
      %p191 = scmp.ne.s32.totalorder %s179, %s180
      %p192 = scmp.eq.s32.totalorder %s25, 1
      %p193 = por %p191, %p192
      %p195 = scmp.ne.s32.totalorder %s180, %s194
      %p196 = scmp.eq.s32.totalorder %s25, 0
      %p197 = por %p195, %p196
      %s199 = sadd.s32 %s198, 1
      %p202 = scmp.eq.s32.totalorder %s19, 1
      %p203 = scmp.ne.s32.totalorder %s198, %s200
      %p204 = scmp.eq.s32.totalorder %s19, 0
      %p205 = por %p203, %p204
      %p206 = scmp.ne.s32.totalorder %s198, %s200
      %p207 = scmp.eq.s32.totalorder %s24, 1
      %p208 = por %p206, %p207
      %p209 = scmp.ne.s32.totalorder %s200, %s201
      %p210 = scmp.eq.s32.totalorder %s24, 0
      %p211 = por %p209, %p210
      %p212 = scmp.ne.s32.totalorder %s200, %s201
      %p213 = scmp.eq.s32.totalorder %s25, 1
      %p214 = por %p212, %p213
      %p216 = scmp.ne.s32.totalorder %s201, %s215
      %p217 = scmp.eq.s32.totalorder %s25, 0
      %p218 = por %p216, %p217
      %s220 = sadd.s32 %s219, 1
      %p223 = scmp.eq.s32.totalorder %s19, 1
      %p224 = scmp.ne.s32.totalorder %s219, %s221
      %p225 = scmp.eq.s32.totalorder %s19, 0
      %p226 = por %p224, %p225
      %p227 = scmp.ne.s32.totalorder %s219, %s221
      %p228 = scmp.eq.s32.totalorder %s24, 1
      %p229 = por %p227, %p228
      %p230 = scmp.ne.s32.totalorder %s221, %s222
      %p231 = scmp.eq.s32.totalorder %s24, 0
      %p232 = por %p230, %p231
      %p233 = scmp.ne.s32.totalorder %s221, %s222
      %p234 = scmp.eq.s32.totalorder %s25, 1
      %p235 = por %p233, %p234
      %p237 = scmp.ne.s32.totalorder %s222, %s236
      %p238 = scmp.eq.s32.totalorder %s25, 0
      %p239 = por %p237, %p238
      %s240 = ssub.s32 %s26, %s38
      %p241 = scmp.eq.s32.totalorder %s240, 0
      %s243 = sadd.s32 %s242, 1
      %s244 = scalar_select %p241, %s242, %s243
      %p247 = pneg %p241
      %p248 = scmp.eq.s32.totalorder %s19, 1
      %p249 = por %p247, %p248
      %p250 = scmp.ne.s32.totalorder %s242, %s245
      %p251 = scmp.eq.s32.totalorder %s19, 0
      %p252 = por %p250, %p251
      %p253 = scmp.ne.s32.totalorder %s242, %s245
      %p254 = scmp.eq.s32.totalorder %s24, 1
      %p255 = por %p253, %p254
      %p256 = scmp.ne.s32.totalorder %s245, %s246
      %p257 = scmp.eq.s32.totalorder %s24, 0
      %p258 = por %p256, %p257
      %p259 = scmp.ne.s32.totalorder %s245, %s246
      %p260 = scmp.eq.s32.totalorder %s25, 1
      %p261 = por %p259, %p260
      %p263 = scmp.ne.s32.totalorder %s246, %s262
      %p264 = scmp.eq.s32.totalorder %s25, 0
      %p265 = por %p263, %p264
      %p266 = scmp.le.s32.totalorder 1, %s19
      %p267 = scmp.lt.s32.totalorder %s19, 3
      %p268 = pnand %p266, %p267
      %p269 = pneg %p268
      // Predicated region
      $region9: #{tpu_custom_call.1} parent=5 // pred_check
        _
      $region10: #{tpu_custom_call.1} parent=5 // pred_check_branch
        %271 = sbr.rel (%p268) target = $region12
      $region11: #{tpu_custom_call.1} parent=5 // pred_region
        %s272 = ssub.s32 %s19, 1
        // Predicated region
        $region13: #{tpu_custom_call.1} parent=11 // pred_check
          %p273 = pneg %p106
        $region14: #{tpu_custom_call.1} parent=11 // pred_check_branch
          %275 = sbr.rel (%p273) target = $region16
        $region15: #{tpu_custom_call.1} parent=11 // pred_region
          _
        $region16: #{tpu_custom_call.1} parent=11 // pred_fallthru
          _
        // Predicated region
        $region17: #{tpu_custom_call.1} parent=11 // pred_check
          %p276 = pneg %p127
        $region18: #{tpu_custom_call.1} parent=11 // pred_check_branch
          %278 = sbr.rel (%p276) target = $region20
        $region19: #{tpu_custom_call.1} parent=11 // pred_region
          _
        $region20: #{tpu_custom_call.1} parent=11 // pred_fallthru
          _
        // Predicated region
        $region21: #{tpu_custom_call.1} parent=11 // pred_check
          %p279 = pneg %p148
        $region22: #{tpu_custom_call.1} parent=11 // pred_check_branch
          %281 = sbr.rel (%p279) target = $region24
        $region23: #{tpu_custom_call.1} parent=11 // pred_region
          _
        $region24: #{tpu_custom_call.1} parent=11 // pred_fallthru
          _
        // Predicated region
        $region25: #{tpu_custom_call.1} parent=11 // pred_check
          %p282 = pneg %p169
        $region26: #{tpu_custom_call.1} parent=11 // pred_check_branch
          %284 = sbr.rel (%p282) target = $region28
        $region27: #{tpu_custom_call.1} parent=11 // pred_region
          _
        $region28: #{tpu_custom_call.1} parent=11 // pred_fallthru
          _
        // Predicated region
        $region29: #{tpu_custom_call.1} parent=11 // pred_check
          %p285 = pneg %p190
        $region30: #{tpu_custom_call.1} parent=11 // pred_check_branch
          %287 = sbr.rel (%p285) target = $region32
        $region31: #{tpu_custom_call.1} parent=11 // pred_region
          _
        $region32: #{tpu_custom_call.1} parent=11 // pred_fallthru
          _
        // Predicated region
        $region33: #{tpu_custom_call.1} parent=11 // pred_check
          %p288 = pneg %p211
        $region34: #{tpu_custom_call.1} parent=11 // pred_check_branch
          %290 = sbr.rel (%p288) target = $region36
        $region35: #{tpu_custom_call.1} parent=11 // pred_region
          %s292 = ssub.s32 256, 256
          %293 = vsyncadd [#allocation5], %s292
          %s294 = sshll.u32 [#allocation4], 4
          %s295 = int_to_ptr.vmem [resolvable:$true] %s294
          %300 = dma.hbm_to_vmem [thread:$0]  %s7, 256, %s295, [#allocation5], 64, 64, 4
        $region36: #{tpu_custom_call.1} parent=11 // pred_fallthru
          _
        // Predicated region
        $region37: #{tpu_custom_call.1} parent=11 // pred_check
          %p301 = pneg %p232
        $region38: #{tpu_custom_call.1} parent=11 // pred_check_branch
          %303 = sbr.rel (%p301) target = $region40
        $region39: #{tpu_custom_call.1} parent=11 // pred_region
          _
        $region40: #{tpu_custom_call.1} parent=11 // pred_fallthru
          _
      $region12: #{tpu_custom_call.1} parent=5 // pred_fallthru
        _
      %p304 = scmp.lt.s32.totalorder %s19, 2
      // Predicated region
      $region41: #{tpu_custom_call.1} parent=5 // pred_check
        %p305 = pneg %p304
      $region42: #{tpu_custom_call.1} parent=5 // pred_check_branch
        %307 = sbr.rel (%p305) target = $region44
      $region43: #{tpu_custom_call.1} parent=5 // pred_region
        // Predicated region
        $region45: #{tpu_custom_call.1} parent=43 // pred_check
          %p308 = pneg %p51
        $region46: #{tpu_custom_call.1} parent=43 // pred_check_branch
          %310 = sbr.rel (%p308) target = $region48
        $region47: #{tpu_custom_call.1} parent=43 // pred_region
          %p311 = scmp.lt.s32.totalorder %s26, 1
          %s312 = scalar_select %p311, %s26, 1
          %s313 = smul.addr %s312, 8
          %s314 = scalar_lea.vmem %s0, %s313
        $region48: #{tpu_custom_call.1} parent=43 // pred_fallthru
          _
        // Predicated region
        $region49: #{tpu_custom_call.1} parent=43 // pred_check
          %p315 = pneg %p79
        $region50: #{tpu_custom_call.1} parent=43 // pred_check_branch
          %317 = sbr.rel (%p315) target = $region52
        $region51: #{tpu_custom_call.1} parent=43 // pred_region
          %s318 = smul.u32 4, %s27
          %p319 = scmp.lt.s32.totalorder %s26, 1
          %s320 = scalar_select %p319, %s26, 1
          %p321 = scmp.lt.s32.totalorder %s318, 3
          %s322 = scalar_select %p321, %s318, 3
          %s323 = smul.addr %s320, 4
          %s324 = sadd.s32 %s322, %s323
          %s325 = smul.addr %s324, 4
          %s326 = scalar_lea.vmem %s1, %s325
          %s327 = smul.u32 4, %s27
        $region52: #{tpu_custom_call.1} parent=43 // pred_fallthru
          _
      $region44: #{tpu_custom_call.1} parent=5 // pred_fallthru
        _
      %p328 = scmp.le.s32.totalorder 1, %s19
      %p329 = scmp.lt.s32.totalorder %s19, 3
      %p330 = pnand %p328, %p329
      %p331 = pneg %p330
      // Predicated region
      $region53: #{tpu_custom_call.1} parent=5 // pred_check
        _
      $region54: #{tpu_custom_call.1} parent=5 // pred_check_branch
        %333 = sbr.rel (%p330) target = $region56
      $region55: #{tpu_custom_call.1} parent=5 // pred_region
        %s334 = ssub.s32 %s19, 1
        // Predicated region
        $region57: #{tpu_custom_call.1} parent=55 // pred_check
          %p335 = pneg %p211
        $region58: #{tpu_custom_call.1} parent=55 // pred_check_branch
          %337 = sbr.rel (%p335) target = $region60
        $region59: #{tpu_custom_call.1} parent=55 // pred_region
          %338 = dma.done [#allocation5], 256
        $region60: #{tpu_custom_call.1} parent=55 // pred_fallthru
          _
        %p339 = scmp.lt.s32.totalorder %s28, 1
        %s340 = scalar_select %p339, %s28, 1
        %s341 = smul.addr %s340, 8
        %s342 = scalar_lea.vmem %s0, %s341
        %p343 = pneg %p57
        %p344 = pneg %p54
        %s345 = smul.u32 4, %s29
        %p346 = scmp.lt.s32.totalorder %s28, 1
        %s347 = scalar_select %p346, %s28, 1
        %p348 = scmp.lt.s32.totalorder %s345, 3
        %s349 = scalar_select %p348, %s345, 3
        %s350 = smul.addr %s347, 4
        %s351 = sadd.s32 %s349, %s350
        %s352 = smul.addr %s351, 4
        %s353 = scalar_lea.vmem %s1, %s352
        %p354 = pneg %p85
        %p355 = pneg %p82
        %p356 = pneg %p106
        %p357 = pneg %p103
        %p358 = pneg %p127
        %p359 = pneg %p124
        %p360 = pneg %p148
        %p361 = pneg %p145
        %p362 = pneg %p169
        %p363 = pneg %p166
        %p364 = pneg %p190
        %p365 = pneg %p187
        %p366 = pneg %p211
        %p367 = pneg %p208
        %p368 = pneg %p232
        %p369 = pneg %p229
        %p370 = pneg %p258
        %p371 = pneg %p255
        %s372 = sand.u32 %s245, 1
        %s373 = scalar_lea.sflag [#allocation6], %s372
        %s374 = sand.u32 %s245, 1
        %s375 = smul.addr %s374, 8
        %s376 = scalar_lea.vmem [#allocation7], %s375
        %p377 = scmp.lt.s32.totalorder %s28, 1
        %s378 = scalar_select %p377, %s28, 1
        %s379 = smul.addr %s378, 8
        %s380 = scalar_lea.vmem %s0, %s379
        %s381 = smul.u32 4, %s29
        %p382 = scmp.lt.s32.totalorder %s28, 1
        %s383 = scalar_select %p382, %s28, 1
        %p384 = scmp.lt.s32.totalorder %s381, 3
        %s385 = scalar_select %p384, %s381, 3
        %s386 = smul.addr %s383, 4
        %s387 = sadd.s32 %s385, %s386
        %s388 = smul.addr %s387, 4
        %s389 = scalar_lea.vmem %s1, %s388
        %s390 = smul.u32 4, %s29
        %p392 = scmp.eq.s32.totalorder %s29, 0
        // Predicated region
        $region61: #{tpu_custom_call.1} parent=55 // pred_check
          %p393 = pneg %p392
        $region62: #{tpu_custom_call.1} parent=55 // pred_check_branch
          %395 = sbr.rel (%p393) target = $region64
        $region63: #{tpu_custom_call.1} parent=55 // pred_region
          %v396 = vld [vmem:[%s380] sm:$0xff]
          %v397 = vld [vmem:[%s5 + $0x1] sm:$0x1]
          %v398 = vld [vmem:[%s5 + $0x2] sm:$0x1]
          %vm399 = vcmask 261120
          %v400 = vsel %vm399, %v396, 0.0
          %401 = vadd.xlane.f32.xlu0 %v400
          %v402 = vpop.xlane.xlu0 %401
          %v403 = vrcp.pop 32.0
          %v404 = vmul.f32 %v402, %v403
          %v405 = vsub.f32 %v396, %v404
          %v406 = vmul.f32 %v405, %v405
          %v407 = vsel %vm399, %v406, 0.0
          %408 = vadd.xlane.f32.xlu0 %v407
          %v409 = vpop.xlane.xlu0 %408
          %v410 = vmul.f32 %v409, %v403
          %v411 = vadd.f32 %v410, 1e-05
          %v412 = vrsqrt.pop %v411
          %v413 = vmul.f32 %v405, %v412
          %v414 = vlaneseq
          %v415 = vshrl.u32 %v414, 7
          %v416 = vsub.s32 0, %v415
          %v417 = vrot.slane %v397, %v416
          %v418 = vmul.f32 %v413, %v417
          %v419 = vlaneseq
          %v420 = vshrl.u32 %v419, 7
          %v421 = vsub.s32 0, %v420
          %v422 = vrot.slane %v398, %v421
          %v423 = vadd.f32 %v418, %v422
          %v424 = vpack.c.bf16 %v423, %v423
          %vm425 = vcmask 257024
          %426 = vst.msk [vmem:[#allocation2] sm:$0xf] %vm425, %v424
          %v427 = vld [vmem:[%s5] sm:$0x1]
          %v428 = vlaneseq
          %v429 = vshrl.u32 %v428, 7
          %v430 = vsub.s32 0, %v429
          %v431 = vrot.slane %v427, %v430
          %v432 = vadd.f32 %v396, %v431
          %433 = vst.msk [vmem:[#allocation3] sm:$0xff] %vm399, %v432
        $region64: #{tpu_custom_call.1} parent=55 // pred_fallthru
          _
        %v434 = vld [vmem:[#allocation2] sm:$0xf]
        %s435 = smul.u32 %s29, 4
        %s436 = smul.addr %s435, 4
        %s437 = scalar_lea.vmem %s2, %s436
        %v438 = vld [vmem:[%s437] sm:$0xf]
        %v439 = vld [vmem:[%s437 + $0x4] sm:$0xf]
        %v440 = vld [vmem:[%s437 + $0x8] sm:$0xf]
        %v441 = vld [vmem:[%s437 + $0xc] sm:$0xf]
        %s442 = scalar_lea.vmem %s3, %s29
        %v443 = vld [vmem:[%s442] sm:$0x1]
        %v445 = vlaneseq
        %v446 = vshrl.u32 %v445, 7
        %v447 = vsub.s32 0, %v446
        %v448 = vrot.slane %v443, %v447
        %v454 = vunpack.c.l.b16 %v438
        %v455 = vunpack.c.l.b16 %v439
        %v456 = vunpack.c.l.b16 %v440
        %v457 = vunpack.c.l.b16 %v441
        %v458 = vpack.c.b16 %v455, %v454
        %v459 = vpack.c.b16 %v457, %v456
        %vm462 = vcmask 261120
        %v464 = vsel %vm462, %v434, 0
        %466 = vmatprep.subr.bf16.mxu0 0
        %467 = vmatpush1.bf16.msra.mxu0 0
        %468 = vmatprep.subr.bf16.mxu0 0
        %469 = vmatpush1.bf16.msra.mxu0 0
        %470 = vmatprep.subr.bf16.mxu0 0
        %471 = vmatpush1.bf16.msra.mxu0 0
        %472 = vmatprep.subr.bf16.mxu0 0
        %473 = vmatpush1.bf16.msra.mxu0 0
        %474 = vmatprep.subr.bf16.mxu0 0
        %475 = vmatpush1.bf16.msra.mxu0 0
        %476 = vmatprep.subr.bf16.mxu0 0
        %477 = vmatpush1.bf16.msra.mxu0 0
        %478 = vmatprep.subr.bf16.mxu0 0
        %479 = vmatpush1.bf16.msra.mxu0 %v459
        %480 = vmatprep.subr.bf16.mxu0 0
        %481 = vmatpush1.bf16.msra.mxu0 %v458
        %482 = vmatprep.subr.bf16.mxu0 0
        %483 = vmatpush2.bf16.msra.mxu0 0
        %484 = vmatprep.subr.bf16.mxu0 0
        %485 = vmatpush2.bf16.msra.mxu0 0
        %486 = vmatprep.subr.bf16.mxu0 0
        %487 = vmatpush2.bf16.msra.mxu0 0
        %488 = vmatprep.subr.bf16.mxu0 0
        %489 = vmatpush2.bf16.msra.mxu0 0
        %490 = vmatprep.subr.bf16.mxu0 0
        %491 = vmatpush2.bf16.msra.mxu0 0
        %492 = vmatprep.subr.bf16.mxu0 0
        %493 = vmatpush2.bf16.msra.mxu0 0
        %494 = vmatprep.subr.bf16.mxu0 0
        %495 = vmatpush2.bf16.msra.mxu0 0
        %496 = vmatprep.subr.bf16.mxu0 0
        %497 = vmatpush2.bf16.msra.mxu0 0
        %498 = vmatprep.mubr.bf16.mxu0 0
        %499 = vmatmul.mubr.bf16.gmra.mxu0 %v464
        %v500 = vpop.f32.mrf.mxu0
        %v501 = vadd.f32 %v448, %v500
        %v502 = vpop.f32.mrf.mxu0
        %v503 = vpop.f32.mrf.mxu0
        %v504 = vpop.f32.mrf.mxu0
        %505 = vdwg.mxu0
        %v506 = vpack.c.bf16 %v501, %v501
        %508 = vrot.lane.b32.xlu0 %v506, 96
        %v509 = vpop.permute.xlu0 %508
        %vm510 = vcmask 64512
        %v512 = vsel %vm510, %v506, 0
        %v515 = vsel %vm510, %v509, 0
        %517 = vmatprep.subr.bf16.mxu0 0
        %518 = vmatpush1.bf16.xpose.msra.mxu0 0
        %519 = vmatprep.subr.bf16.mxu0 0
        %520 = vmatpush1.bf16.xpose.msra.mxu0 0
        %521 = vmatprep.subr.bf16.mxu0 0
        %522 = vmatpush1.bf16.xpose.msra.mxu0 0
        %523 = vmatprep.subr.bf16.mxu0 0
        %524 = vmatpush1.bf16.xpose.msra.mxu0 0
        %525 = vmatprep.subr.bf16.mxu0 0
        %526 = vmatpush1.bf16.xpose.msra.mxu0 0
        %527 = vmatprep.subr.bf16.mxu0 0
        %528 = vmatpush1.bf16.xpose.msra.mxu0 0
        %529 = vmatprep.subr.bf16.mxu0 0
        %530 = vmatpush1.bf16.xpose.msra.mxu0 0
        %531 = vmatprep.subr.bf16.mxu0 0
        %532 = vmatpush1.bf16.xpose.msra.mxu0 %v515
        %533 = vmatprep.subr.bf16.mxu0 0
        %534 = vmatpush2.bf16.xpose.msra.mxu0 0
        %535 = vmatprep.subr.bf16.mxu0 0
        %536 = vmatpush2.bf16.xpose.msra.mxu0 0
        %537 = vmatprep.subr.bf16.mxu0 0
        %538 = vmatpush2.bf16.xpose.msra.mxu0 0
        %539 = vmatprep.subr.bf16.mxu0 0
        %540 = vmatpush2.bf16.xpose.msra.mxu0 0
        %541 = vmatprep.subr.bf16.mxu0 0
        %542 = vmatpush2.bf16.xpose.msra.mxu0 0
        %543 = vmatprep.subr.bf16.mxu0 0
        %544 = vmatpush2.bf16.xpose.msra.mxu0 0
        %545 = vmatprep.subr.bf16.mxu0 0
        %546 = vmatpush2.bf16.xpose.msra.mxu0 0
        %547 = vmatprep.subr.bf16.mxu0 0
        %548 = vmatpush2.bf16.xpose.msra.mxu0 0
        %549 = vmatprep.mubr.bf16.mxu0 0
        %550 = vmatmul.mubr.bf16.gmra.mxu0 %v512
        %v551 = vpop.f32.mrf.mxu0
        %v552 = vadd.f32 0.0, %v551
        %v553 = vpop.f32.mrf.mxu0
        %v554 = vpop.f32.mrf.mxu0
        %v555 = vpop.f32.mrf.mxu0
        %556 = vdwg.mxu0
        %v557 = vsel %vm510, %v552, -inf
        %558 = vmax.xlane.f32.xlu0 %v557
        %v559 = vpop.xlane.xlu0 %558
        %v560 = vsub.f32 %v552, %v559
        %v561 = vmul.f32 %v560, 1.442695
        %v562 = vpow.pop %v561
        %v563 = vsel %vm510, %v562, 0.0
        %564 = vadd.xlane.f32.xlu0 %v563
        %v565 = vpop.xlane.xlu0 %564
        %v566 = vrcp.pop %v565
        %v567 = vmul.f32 %v562, %v566
        %v568 = vld [vmem:[%s389] sm:$0xf]
        %v569 = vunpack.c.l.bf16 %v568
        %v570 = vadd.f32 %v567, %v569
        %v571 = vpack.c.bf16 %v570, %v570
        %572 = vrot.lane.b32.xlu0 %v506, 64
        %v573 = vpop.permute.xlu0 %572
        %v575 = vsel %vm510, %v571, 0
        %vm577 = vcmask 1043456
        %v579 = vsel %vm577, %v573, 0
        %581 = vmatprep.subr.bf16.mxu0 0
        %582 = vmatpush1.bf16.msra.mxu0 0
        %583 = vmatprep.subr.bf16.mxu0 0
        %584 = vmatpush1.bf16.msra.mxu0 0
        %585 = vmatprep.subr.bf16.mxu0 0
        %586 = vmatpush1.bf16.msra.mxu0 0
        %587 = vmatprep.subr.bf16.mxu0 0
        %588 = vmatpush1.bf16.msra.mxu0 0
        %589 = vmatprep.subr.bf16.mxu0 0
        %590 = vmatpush1.bf16.msra.mxu0 0
        %591 = vmatprep.subr.bf16.mxu0 0
        %592 = vmatpush1.bf16.msra.mxu0 0
        %593 = vmatprep.subr.bf16.mxu0 0
        %594 = vmatpush1.bf16.msra.mxu0 0
        %595 = vmatprep.subr.bf16.mxu0 0
        %596 = vmatpush1.bf16.msra.mxu0 %v579
        %597 = vmatprep.subr.bf16.mxu0 0
        %598 = vmatpush2.bf16.msra.mxu0 0
        %599 = vmatprep.subr.bf16.mxu0 0
        %600 = vmatpush2.bf16.msra.mxu0 0
        %601 = vmatprep.subr.bf16.mxu0 0
        %602 = vmatpush2.bf16.msra.mxu0 0
        %603 = vmatprep.subr.bf16.mxu0 0
        %604 = vmatpush2.bf16.msra.mxu0 0
        %605 = vmatprep.subr.bf16.mxu0 0
        %606 = vmatpush2.bf16.msra.mxu0 0
        %607 = vmatprep.subr.bf16.mxu0 0
        %608 = vmatpush2.bf16.msra.mxu0 0
        %609 = vmatprep.subr.bf16.mxu0 0
        %610 = vmatpush2.bf16.msra.mxu0 0
        %611 = vmatprep.subr.bf16.mxu0 0
        %612 = vmatpush2.bf16.msra.mxu0 0
        %613 = vmatprep.mubr.bf16.mxu0 0
        %614 = vmatmul.mubr.bf16.gmra.mxu0 %v575
        %v615 = vpop.f32.mrf.mxu0
        %v616 = vadd.f32 0.0, %v615
        %v617 = vpop.f32.mrf.mxu0
        %v618 = vpop.f32.mrf.mxu0
        %v619 = vpop.f32.mrf.mxu0
        %620 = vdwg.mxu0
        %621 = vrot.lane.b32.xlu0 %v506, 120
        %v622 = vpop.permute.xlu0 %621
        %623 = vrot.lane.b32.xlu0 %v506, 88
        %v624 = vpop.permute.xlu0 %623
        %v626 = vsel %vm510, %v622, 0
        %v629 = vsel %vm510, %v624, 0
        %631 = vmatprep.subr.bf16.mxu0 0
        %632 = vmatpush1.bf16.xpose.msra.mxu0 0
        %633 = vmatprep.subr.bf16.mxu0 0
        %634 = vmatpush1.bf16.xpose.msra.mxu0 0
        %635 = vmatprep.subr.bf16.mxu0 0
        %636 = vmatpush1.bf16.xpose.msra.mxu0 0
        %637 = vmatprep.subr.bf16.mxu0 0
        %638 = vmatpush1.bf16.xpose.msra.mxu0 0
        %639 = vmatprep.subr.bf16.mxu0 0
        %640 = vmatpush1.bf16.xpose.msra.mxu0 0
        %641 = vmatprep.subr.bf16.mxu0 0
        %642 = vmatpush1.bf16.xpose.msra.mxu0 0
        %643 = vmatprep.subr.bf16.mxu0 0
        %644 = vmatpush1.bf16.xpose.msra.mxu0 0
        %645 = vmatprep.subr.bf16.mxu0 0
        %646 = vmatpush1.bf16.xpose.msra.mxu0 %v629
        %647 = vmatprep.subr.bf16.mxu0 0
        %648 = vmatpush2.bf16.xpose.msra.mxu0 0
        %649 = vmatprep.subr.bf16.mxu0 0
        %650 = vmatpush2.bf16.xpose.msra.mxu0 0
        %651 = vmatprep.subr.bf16.mxu0 0
        %652 = vmatpush2.bf16.xpose.msra.mxu0 0
        %653 = vmatprep.subr.bf16.mxu0 0
        %654 = vmatpush2.bf16.xpose.msra.mxu0 0
        %655 = vmatprep.subr.bf16.mxu0 0
        %656 = vmatpush2.bf16.xpose.msra.mxu0 0
        %657 = vmatprep.subr.bf16.mxu0 0
        %658 = vmatpush2.bf16.xpose.msra.mxu0 0
        %659 = vmatprep.subr.bf16.mxu0 0
        %660 = vmatpush2.bf16.xpose.msra.mxu0 0
        %661 = vmatprep.subr.bf16.mxu0 0
        %662 = vmatpush2.bf16.xpose.msra.mxu0 0
        %663 = vmatprep.mubr.bf16.mxu0 0
        %664 = vmatmul.mubr.bf16.gmra.mxu0 %v626
        %v665 = vpop.f32.mrf.mxu0
        %v666 = vadd.f32 0.0, %v665
        %v667 = vpop.f32.mrf.mxu0
        %v668 = vpop.f32.mrf.mxu0
        %v669 = vpop.f32.mrf.mxu0
        %670 = vdwg.mxu0
        %v671 = vsel %vm510, %v666, -inf
        %672 = vmax.xlane.f32.xlu0 %v671
        %v673 = vpop.xlane.xlu0 %672
        %v674 = vsub.f32 %v666, %v673
        %v675 = vmul.f32 %v674, 1.442695
        %v676 = vpow.pop %v675
        %v677 = vsel %vm510, %v676, 0.0
        %678 = vadd.xlane.f32.xlu0 %v677
        %v679 = vpop.xlane.xlu0 %678
        %v680 = vrcp.pop %v679
        %v681 = vmul.f32 %v676, %v680
        %s682 = scalar_lea.vmem %s389, 4
        %v683 = vld [vmem:[%s682] sm:$0xf]
        %v684 = vunpack.c.l.bf16 %v683
        %v685 = vadd.f32 %v681, %v684
        %v686 = vpack.c.bf16 %v685, %v685
        %687 = vrot.lane.b32.xlu0 %v506, 56
        %v688 = vpop.permute.xlu0 %687
        %v690 = vsel %vm510, %v686, 0
        %v693 = vsel %vm577, %v688, 0
        %695 = vmatprep.subr.bf16.mxu0 0
        %696 = vmatpush1.bf16.msra.mxu0 0
        %697 = vmatprep.subr.bf16.mxu0 0
        %698 = vmatpush1.bf16.msra.mxu0 0
        %699 = vmatprep.subr.bf16.mxu0 0
        %700 = vmatpush1.bf16.msra.mxu0 0
        %701 = vmatprep.subr.bf16.mxu0 0
        %702 = vmatpush1.bf16.msra.mxu0 0
        %703 = vmatprep.subr.bf16.mxu0 0
        %704 = vmatpush1.bf16.msra.mxu0 0
        %705 = vmatprep.subr.bf16.mxu0 0
        %706 = vmatpush1.bf16.msra.mxu0 0
        %707 = vmatprep.subr.bf16.mxu0 0
        %708 = vmatpush1.bf16.msra.mxu0 0
        %709 = vmatprep.subr.bf16.mxu0 0
        %710 = vmatpush1.bf16.msra.mxu0 %v693
        %711 = vmatprep.subr.bf16.mxu0 0
        %712 = vmatpush2.bf16.msra.mxu0 0
        %713 = vmatprep.subr.bf16.mxu0 0
        %714 = vmatpush2.bf16.msra.mxu0 0
        %715 = vmatprep.subr.bf16.mxu0 0
        %716 = vmatpush2.bf16.msra.mxu0 0
        %717 = vmatprep.subr.bf16.mxu0 0
        %718 = vmatpush2.bf16.msra.mxu0 0
        %719 = vmatprep.subr.bf16.mxu0 0
        %720 = vmatpush2.bf16.msra.mxu0 0
        %721 = vmatprep.subr.bf16.mxu0 0
        %722 = vmatpush2.bf16.msra.mxu0 0
        %723 = vmatprep.subr.bf16.mxu0 0
        %724 = vmatpush2.bf16.msra.mxu0 0
        %725 = vmatprep.subr.bf16.mxu0 0
        %726 = vmatpush2.bf16.msra.mxu0 0
        %727 = vmatprep.mubr.bf16.mxu0 0
        %728 = vmatmul.mubr.bf16.gmra.mxu0 %v690
        %v729 = vpop.f32.mrf.mxu0
        %v730 = vadd.f32 0.0, %v729
        %v731 = vpop.f32.mrf.mxu0
        %v732 = vpop.f32.mrf.mxu0
        %v733 = vpop.f32.mrf.mxu0
        %734 = vdwg.mxu0
        %735 = vrot.lane.b32.xlu0 %v506, 112
        %v736 = vpop.permute.xlu0 %735
        %737 = vrot.lane.b32.xlu0 %v506, 80
        %v738 = vpop.permute.xlu0 %737
        %v740 = vsel %vm510, %v736, 0
        %v743 = vsel %vm510, %v738, 0
        %745 = vmatprep.subr.bf16.mxu0 0
        %746 = vmatpush1.bf16.xpose.msra.mxu0 0
        %747 = vmatprep.subr.bf16.mxu0 0
        %748 = vmatpush1.bf16.xpose.msra.mxu0 0
        %749 = vmatprep.subr.bf16.mxu0 0
        %750 = vmatpush1.bf16.xpose.msra.mxu0 0
        %751 = vmatprep.subr.bf16.mxu0 0
        %752 = vmatpush1.bf16.xpose.msra.mxu0 0
        %753 = vmatprep.subr.bf16.mxu0 0
        %754 = vmatpush1.bf16.xpose.msra.mxu0 0
        %755 = vmatprep.subr.bf16.mxu0 0
        %756 = vmatpush1.bf16.xpose.msra.mxu0 0
        %757 = vmatprep.subr.bf16.mxu0 0
        %758 = vmatpush1.bf16.xpose.msra.mxu0 0
        %759 = vmatprep.subr.bf16.mxu0 0
        %760 = vmatpush1.bf16.xpose.msra.mxu0 %v743
        %761 = vmatprep.subr.bf16.mxu0 0
        %762 = vmatpush2.bf16.xpose.msra.mxu0 0
        %763 = vmatprep.subr.bf16.mxu0 0
        %764 = vmatpush2.bf16.xpose.msra.mxu0 0
        %765 = vmatprep.subr.bf16.mxu0 0
        %766 = vmatpush2.bf16.xpose.msra.mxu0 0
        %767 = vmatprep.subr.bf16.mxu0 0
        %768 = vmatpush2.bf16.xpose.msra.mxu0 0
        %769 = vmatprep.subr.bf16.mxu0 0
        %770 = vmatpush2.bf16.xpose.msra.mxu0 0
        %771 = vmatprep.subr.bf16.mxu0 0
        %772 = vmatpush2.bf16.xpose.msra.mxu0 0
        %773 = vmatprep.subr.bf16.mxu0 0
        %774 = vmatpush2.bf16.xpose.msra.mxu0 0
        %775 = vmatprep.subr.bf16.mxu0 0
        %776 = vmatpush2.bf16.xpose.msra.mxu0 0
        %777 = vmatprep.mubr.bf16.mxu0 0
        %778 = vmatmul.mubr.bf16.gmra.mxu0 %v740
        %v779 = vpop.f32.mrf.mxu0
        %v780 = vadd.f32 0.0, %v779
        %v781 = vpop.f32.mrf.mxu0
        %v782 = vpop.f32.mrf.mxu0
        %v783 = vpop.f32.mrf.mxu0
        %784 = vdwg.mxu0
        %v785 = vsel %vm510, %v780, -inf
        %786 = vmax.xlane.f32.xlu0 %v785
        %v787 = vpop.xlane.xlu0 %786
        %v788 = vsub.f32 %v780, %v787
        %v789 = vmul.f32 %v788, 1.442695
        %v790 = vpow.pop %v789
        %v791 = vsel %vm510, %v790, 0.0
        %792 = vadd.xlane.f32.xlu0 %v791
        %v793 = vpop.xlane.xlu0 %792
        %v794 = vrcp.pop %v793
        %v795 = vmul.f32 %v790, %v794
        %s796 = scalar_lea.vmem %s389, 8
        %v797 = vld [vmem:[%s796] sm:$0xf]
        %v798 = vunpack.c.l.bf16 %v797
        %v799 = vadd.f32 %v795, %v798
        %v800 = vpack.c.bf16 %v799, %v799
        %801 = vrot.lane.b32.xlu0 %v506, 48
        %v802 = vpop.permute.xlu0 %801
        %v804 = vsel %vm510, %v800, 0
        %v807 = vsel %vm577, %v802, 0
        %809 = vmatprep.subr.bf16.mxu0 0
        %810 = vmatpush1.bf16.msra.mxu0 0
        %811 = vmatprep.subr.bf16.mxu0 0
        %812 = vmatpush1.bf16.msra.mxu0 0
        %813 = vmatprep.subr.bf16.mxu0 0
        %814 = vmatpush1.bf16.msra.mxu0 0
        %815 = vmatprep.subr.bf16.mxu0 0
        %816 = vmatpush1.bf16.msra.mxu0 0
        %817 = vmatprep.subr.bf16.mxu0 0
        %818 = vmatpush1.bf16.msra.mxu0 0
        %819 = vmatprep.subr.bf16.mxu0 0
        %820 = vmatpush1.bf16.msra.mxu0 0
        %821 = vmatprep.subr.bf16.mxu0 0
        %822 = vmatpush1.bf16.msra.mxu0 0
        %823 = vmatprep.subr.bf16.mxu0 0
        %824 = vmatpush1.bf16.msra.mxu0 %v807
        %825 = vmatprep.subr.bf16.mxu0 0
        %826 = vmatpush2.bf16.msra.mxu0 0
        %827 = vmatprep.subr.bf16.mxu0 0
        %828 = vmatpush2.bf16.msra.mxu0 0
        %829 = vmatprep.subr.bf16.mxu0 0
        %830 = vmatpush2.bf16.msra.mxu0 0
        %831 = vmatprep.subr.bf16.mxu0 0
        %832 = vmatpush2.bf16.msra.mxu0 0
        %833 = vmatprep.subr.bf16.mxu0 0
        %834 = vmatpush2.bf16.msra.mxu0 0
        %835 = vmatprep.subr.bf16.mxu0 0
        %836 = vmatpush2.bf16.msra.mxu0 0
        %837 = vmatprep.subr.bf16.mxu0 0
        %838 = vmatpush2.bf16.msra.mxu0 0
        %839 = vmatprep.subr.bf16.mxu0 0
        %840 = vmatpush2.bf16.msra.mxu0 0
        %841 = vmatprep.mubr.bf16.mxu0 0
        %842 = vmatmul.mubr.bf16.gmra.mxu0 %v804
        %v843 = vpop.f32.mrf.mxu0
        %v844 = vadd.f32 0.0, %v843
        %v845 = vpop.f32.mrf.mxu0
        %v846 = vpop.f32.mrf.mxu0
        %v847 = vpop.f32.mrf.mxu0
        %848 = vdwg.mxu0
        %849 = vrot.lane.b32.xlu0 %v506, 104
        %v850 = vpop.permute.xlu0 %849
        %851 = vrot.lane.b32.xlu0 %v506, 72
        %v852 = vpop.permute.xlu0 %851
        %v854 = vsel %vm510, %v850, 0
        %v857 = vsel %vm510, %v852, 0
        %859 = vmatprep.subr.bf16.mxu0 0
        %860 = vmatpush1.bf16.xpose.msra.mxu0 0
        %861 = vmatprep.subr.bf16.mxu0 0
        %862 = vmatpush1.bf16.xpose.msra.mxu0 0
        %863 = vmatprep.subr.bf16.mxu0 0
        %864 = vmatpush1.bf16.xpose.msra.mxu0 0
        %865 = vmatprep.subr.bf16.mxu0 0
        %866 = vmatpush1.bf16.xpose.msra.mxu0 0
        %867 = vmatprep.subr.bf16.mxu0 0
        %868 = vmatpush1.bf16.xpose.msra.mxu0 0
        %869 = vmatprep.subr.bf16.mxu0 0
        %870 = vmatpush1.bf16.xpose.msra.mxu0 0
        %871 = vmatprep.subr.bf16.mxu0 0
        %872 = vmatpush1.bf16.xpose.msra.mxu0 0
        %873 = vmatprep.subr.bf16.mxu0 0
        %874 = vmatpush1.bf16.xpose.msra.mxu0 %v857
        %875 = vmatprep.subr.bf16.mxu0 0
        %876 = vmatpush2.bf16.xpose.msra.mxu0 0
        %877 = vmatprep.subr.bf16.mxu0 0
        %878 = vmatpush2.bf16.xpose.msra.mxu0 0
        %879 = vmatprep.subr.bf16.mxu0 0
        %880 = vmatpush2.bf16.xpose.msra.mxu0 0
        %881 = vmatprep.subr.bf16.mxu0 0
        %882 = vmatpush2.bf16.xpose.msra.mxu0 0
        %883 = vmatprep.subr.bf16.mxu0 0
        %884 = vmatpush2.bf16.xpose.msra.mxu0 0
        %885 = vmatprep.subr.bf16.mxu0 0
        %886 = vmatpush2.bf16.xpose.msra.mxu0 0
        %887 = vmatprep.subr.bf16.mxu0 0
        %888 = vmatpush2.bf16.xpose.msra.mxu0 0
        %889 = vmatprep.subr.bf16.mxu0 0
        %890 = vmatpush2.bf16.xpose.msra.mxu0 0
        %891 = vmatprep.mubr.bf16.mxu0 0
        %892 = vmatmul.mubr.bf16.gmra.mxu0 %v854
        %v893 = vpop.f32.mrf.mxu0
        %v894 = vadd.f32 0.0, %v893
        %v895 = vpop.f32.mrf.mxu0
        %v896 = vpop.f32.mrf.mxu0
        %v897 = vpop.f32.mrf.mxu0
        %898 = vdwg.mxu0
        %v899 = vsel %vm510, %v894, -inf
        %900 = vmax.xlane.f32.xlu0 %v899
        %v901 = vpop.xlane.xlu0 %900
        %v902 = vsub.f32 %v894, %v901
        %v903 = vmul.f32 %v902, 1.442695
        %v904 = vpow.pop %v903
        %v905 = vsel %vm510, %v904, 0.0
        %906 = vadd.xlane.f32.xlu0 %v905
        %v907 = vpop.xlane.xlu0 %906
        %v908 = vrcp.pop %v907
        %v909 = vmul.f32 %v904, %v908
        %s910 = scalar_lea.vmem %s389, 12
        %v911 = vld [vmem:[%s910] sm:$0xf]
        %v912 = vunpack.c.l.bf16 %v911
        %v913 = vadd.f32 %v909, %v912
        %v914 = vpack.c.bf16 %v913, %v913
        %915 = vrot.lane.b32.xlu0 %v506, 40
        %v916 = vpop.permute.xlu0 %915
        %v918 = vsel %vm510, %v914, 0
        %v921 = vsel %vm577, %v916, 0
        %923 = vmatprep.subr.bf16.mxu0 0
        %924 = vmatpush1.bf16.msra.mxu0 0
        %925 = vmatprep.subr.bf16.mxu0 0
        %926 = vmatpush1.bf16.msra.mxu0 0
        %927 = vmatprep.subr.bf16.mxu0 0
        %928 = vmatpush1.bf16.msra.mxu0 0
        %929 = vmatprep.subr.bf16.mxu0 0
        %930 = vmatpush1.bf16.msra.mxu0 0
        %931 = vmatprep.subr.bf16.mxu0 0
        %932 = vmatpush1.bf16.msra.mxu0 0
        %933 = vmatprep.subr.bf16.mxu0 0
        %934 = vmatpush1.bf16.msra.mxu0 0
        %935 = vmatprep.subr.bf16.mxu0 0
        %936 = vmatpush1.bf16.msra.mxu0 0
        %937 = vmatprep.subr.bf16.mxu0 0
        %938 = vmatpush1.bf16.msra.mxu0 %v921
        %939 = vmatprep.subr.bf16.mxu0 0
        %940 = vmatpush2.bf16.msra.mxu0 0
        %941 = vmatprep.subr.bf16.mxu0 0
        %942 = vmatpush2.bf16.msra.mxu0 0
        %943 = vmatprep.subr.bf16.mxu0 0
        %944 = vmatpush2.bf16.msra.mxu0 0
        %945 = vmatprep.subr.bf16.mxu0 0
        %946 = vmatpush2.bf16.msra.mxu0 0
        %947 = vmatprep.subr.bf16.mxu0 0
        %948 = vmatpush2.bf16.msra.mxu0 0
        %949 = vmatprep.subr.bf16.mxu0 0
        %950 = vmatpush2.bf16.msra.mxu0 0
        %951 = vmatprep.subr.bf16.mxu0 0
        %952 = vmatpush2.bf16.msra.mxu0 0
        %953 = vmatprep.subr.bf16.mxu0 0
        %954 = vmatpush2.bf16.msra.mxu0 0
        %955 = vmatprep.mubr.bf16.mxu0 0
        %956 = vmatmul.mubr.bf16.gmra.mxu0 %v918
        %v957 = vpop.f32.mrf.mxu0
        %v958 = vadd.f32 0.0, %v957
        %v959 = vpop.f32.mrf.mxu0
        %v960 = vpop.f32.mrf.mxu0
        %v961 = vpop.f32.mrf.mxu0
        %962 = vdwg.mxu0
        %964 = vrot.lane.b32.xlu0 %v730, 8
        %v965 = vpop.permute.xlu0 %964
        %968 = vrot.lane.b32.xlu0 %v844, 16
        %v969 = vpop.permute.xlu0 %968
        %972 = vrot.lane.b32.xlu0 %v958, 24
        %v973 = vpop.permute.xlu0 %972
        %v975 = vsel %vm510, %v616, %v965
        %vm976 = vcmask 130048
        %v977 = vsel %vm976, %v975, %v969
        %vm978 = vcmask 195584
        %v979 = vsel %vm978, %v977, %v973
        %v980 = vld [vmem:[#allocation3] sm:$0xff]
        %v981 = vpack.c.bf16 %v979, %v979
        %s982 = smul.addr %s435, 4
        %s983 = scalar_lea.vmem %s4, %s982
        %v984 = vld [vmem:[%s983] sm:$0xf]
        %v985 = vld [vmem:[%s983 + $0x4] sm:$0xf]
        %v986 = vld [vmem:[%s983 + $0x8] sm:$0xf]
        %v987 = vld [vmem:[%s983 + $0xc] sm:$0xf]
        %v992 = vunpack.c.l.b16 %v984
        %v993 = vunpack.c.l.b16 %v985
        %v994 = vunpack.c.l.b16 %v986
        %v995 = vunpack.c.l.b16 %v987
        %v996 = vpack.c.b16 %v993, %v992
        %v997 = vpack.c.b16 %v995, %v994
        %v1001 = vsel %vm462, %v981, 0
        %1003 = vmatprep.subr.bf16.mxu0 0
        %1004 = vmatpush1.bf16.msra.mxu0 0
        %1005 = vmatprep.subr.bf16.mxu0 0
        %1006 = vmatpush1.bf16.msra.mxu0 0
        %1007 = vmatprep.subr.bf16.mxu0 0
        %1008 = vmatpush1.bf16.msra.mxu0 0
        %1009 = vmatprep.subr.bf16.mxu0 0
        %1010 = vmatpush1.bf16.msra.mxu0 0
        %1011 = vmatprep.subr.bf16.mxu0 0
        %1012 = vmatpush1.bf16.msra.mxu0 0
        %1013 = vmatprep.subr.bf16.mxu0 0
        %1014 = vmatpush1.bf16.msra.mxu0 0
        %1015 = vmatprep.subr.bf16.mxu0 0
        %1016 = vmatpush1.bf16.msra.mxu0 %v997
        %1017 = vmatprep.subr.bf16.mxu0 0
        %1018 = vmatpush1.bf16.msra.mxu0 %v996
        %1019 = vmatprep.subr.bf16.mxu0 0
        %1020 = vmatpush2.bf16.msra.mxu0 0
        %1021 = vmatprep.subr.bf16.mxu0 0
        %1022 = vmatpush2.bf16.msra.mxu0 0
        %1023 = vmatprep.subr.bf16.mxu0 0
        %1024 = vmatpush2.bf16.msra.mxu0 0
        %1025 = vmatprep.subr.bf16.mxu0 0
        %1026 = vmatpush2.bf16.msra.mxu0 0
        %1027 = vmatprep.subr.bf16.mxu0 0
        %1028 = vmatpush2.bf16.msra.mxu0 0
        %1029 = vmatprep.subr.bf16.mxu0 0
        %1030 = vmatpush2.bf16.msra.mxu0 0
        %1031 = vmatprep.subr.bf16.mxu0 0
        %1032 = vmatpush2.bf16.msra.mxu0 0
        %1033 = vmatprep.subr.bf16.mxu0 0
        %1034 = vmatpush2.bf16.msra.mxu0 0
        %1035 = vmatprep.mubr.bf16.mxu0 0
        %1036 = vmatmul.mubr.bf16.gmra.mxu0 %v1001
        %v1037 = vpop.f32.mrf.mxu0
        %v1038 = vadd.f32 0.0, %v1037
        %v1039 = vpop.f32.mrf.mxu0
        %v1040 = vpop.f32.mrf.mxu0
        %v1041 = vpop.f32.mrf.mxu0
        %1042 = vdwg.mxu0
        %v1043 = vadd.f32 %v980, %v1038
        %1044 = vst.msk [vmem:[#allocation3] sm:$0xff] %vm462, %v1043
        // Predicated region
        $region65: #{tpu_custom_call.1} parent=55 // pred_check
          %p1045 = pneg %p392
        $region66: #{tpu_custom_call.1} parent=55 // pred_check_branch
          %1047 = sbr.rel (%p1045) target = $region68
        $region67: #{tpu_custom_call.1} parent=55 // pred_region
          %v1048 = vld [vmem:[%s5 + $0x3] sm:$0x1]
          %v1049 = vld [vmem:[%s5 + $0x4] sm:$0x1]
          %v1050 = vld [vmem:[%s5 + $0x5] sm:$0x1]
          %v1051 = vld [vmem:[%s6] sm:$0x1]
          %v1052 = vld [vmem:[#allocation4] sm:$0xf]
          %v1053 = vld [vmem:[#allocation4 + $0x4] sm:$0xf]
          %v1054 = vld [vmem:[#allocation4 + $0x8] sm:$0xf]
          %v1055 = vld [vmem:[#allocation4 + $0xc] sm:$0xf]
          %v1056 = vld [vmem:[%s8] sm:$0xf]
          %v1057 = vld [vmem:[%s8 + $0x4] sm:$0xf]
          %v1058 = vld [vmem:[%s8 + $0x8] sm:$0xf]
          %v1059 = vld [vmem:[%s8 + $0xc] sm:$0xf]
          %v1060 = vld [vmem:[%s8 + $0x10] sm:$0xf]
          %v1061 = vld [vmem:[%s8 + $0x14] sm:$0xf]
          %v1062 = vld [vmem:[%s8 + $0x18] sm:$0xf]
          %v1063 = vld [vmem:[%s8 + $0x1c] sm:$0xf]
          %v1064 = vld [vmem:[%s8 + $0x20] sm:$0xf]
          %v1065 = vld [vmem:[%s8 + $0x24] sm:$0xf]
          %v1066 = vld [vmem:[%s8 + $0x28] sm:$0xf]
          %v1067 = vld [vmem:[%s8 + $0x2c] sm:$0xf]
          %v1068 = vld [vmem:[%s8 + $0x30] sm:$0xf]
          %v1069 = vld [vmem:[%s8 + $0x34] sm:$0xf]
          %v1070 = vld [vmem:[%s8 + $0x38] sm:$0xf]
          %v1071 = vld [vmem:[%s8 + $0x3c] sm:$0xf]
          %v1072 = vld [vmem:[#allocation3] sm:$0xff]
          %v1073 = vsel %vm462, %v1072, 0.0
          %1074 = vadd.xlane.f32.xlu0 %v1073
          %v1075 = vpop.xlane.xlu0 %1074
          %v1076 = vrcp.pop 32.0
          %v1077 = vmul.f32 %v1075, %v1076
          %v1078 = vsub.f32 %v1072, %v1077
          %v1079 = vmul.f32 %v1078, %v1078
          %v1080 = vsel %vm462, %v1079, 0.0
          %1081 = vadd.xlane.f32.xlu0 %v1080
          %v1082 = vpop.xlane.xlu0 %1081
          %v1083 = vmul.f32 %v1082, %v1076
          %v1084 = vadd.f32 %v1083, 1e-05
          %v1085 = vrsqrt.pop %v1084
          %v1086 = vmul.f32 %v1078, %v1085
          %v1087 = vlaneseq
          %v1088 = vshrl.u32 %v1087, 7
          %v1089 = vsub.s32 0, %v1088
          %v1090 = vrot.slane %v1048, %v1089
          %v1091 = vmul.f32 %v1086, %v1090
          %v1092 = vlaneseq
          %v1093 = vshrl.u32 %v1092, 7
          %v1094 = vsub.s32 0, %v1093
          %v1095 = vrot.slane %v1049, %v1094
          %v1096 = vadd.f32 %v1091, %v1095
          %v1097 = vpack.c.bf16 %v1096, %v1096
          %v1099 = vlaneseq
          %v1100 = vshrl.u32 %v1099, 7
          %v1101 = vsub.s32 0, %v1100
          %v1102 = vrot.slane %v1051, %v1101
          %v1108 = vunpack.c.l.b16 %v1052
          %v1109 = vunpack.c.l.b16 %v1053
          %v1110 = vunpack.c.l.b16 %v1054
          %v1111 = vunpack.c.l.b16 %v1055
          %v1112 = vpack.c.b16 %v1109, %v1108
          %v1113 = vpack.c.b16 %v1111, %v1110
          %v1117 = vsel %vm462, %v1097, 0
          %1119 = vmatprep.subr.bf16.mxu0 0
          %1120 = vmatpush1.bf16.msra.mxu0 0
          %1121 = vmatprep.subr.bf16.mxu0 0
          %1122 = vmatpush1.bf16.msra.mxu0 0
          %1123 = vmatprep.subr.bf16.mxu0 0
          %1124 = vmatpush1.bf16.msra.mxu0 0
          %1125 = vmatprep.subr.bf16.mxu0 0
          %1126 = vmatpush1.bf16.msra.mxu0 0
          %1127 = vmatprep.subr.bf16.mxu0 0
          %1128 = vmatpush1.bf16.msra.mxu0 0
          %1129 = vmatprep.subr.bf16.mxu0 0
          %1130 = vmatpush1.bf16.msra.mxu0 0
          %1131 = vmatprep.subr.bf16.mxu0 0
          %1132 = vmatpush1.bf16.msra.mxu0 %v1113
          %1133 = vmatprep.subr.bf16.mxu0 0
          %1134 = vmatpush1.bf16.msra.mxu0 %v1112
          %1135 = vmatprep.subr.bf16.mxu0 0
          %1136 = vmatpush2.bf16.msra.mxu0 0
          %1137 = vmatprep.subr.bf16.mxu0 0
          %1138 = vmatpush2.bf16.msra.mxu0 0
          %1139 = vmatprep.subr.bf16.mxu0 0
          %1140 = vmatpush2.bf16.msra.mxu0 0
          %1141 = vmatprep.subr.bf16.mxu0 0
          %1142 = vmatpush2.bf16.msra.mxu0 0
          %1143 = vmatprep.subr.bf16.mxu0 0
          %1144 = vmatpush2.bf16.msra.mxu0 0
          %1145 = vmatprep.subr.bf16.mxu0 0
          %1146 = vmatpush2.bf16.msra.mxu0 0
          %1147 = vmatprep.subr.bf16.mxu0 0
          %1148 = vmatpush2.bf16.msra.mxu0 0
          %1149 = vmatprep.subr.bf16.mxu0 0
          %1150 = vmatpush2.bf16.msra.mxu0 0
          %1151 = vmatprep.mubr.bf16.mxu0 0
          %1152 = vmatmul.mubr.bf16.gmra.mxu0 %v1117
          %v1153 = vpop.f32.mrf.mxu0
          %v1154 = vadd.f32 %v1102, %v1153
          %v1155 = vpop.f32.mrf.mxu0
          %v1156 = vpop.f32.mrf.mxu0
          %v1157 = vpop.f32.mrf.mxu0
          %1158 = vdwg.mxu0
          %v1159 = vmul.f32 %v1154, %v1154
          %v1160 = vmul.f32 %v1154, %v1159
          %v1161 = vmul.f32 %v1160, 0.044715
          %v1162 = vadd.f32 %v1154, %v1161
          %v1163 = vmul.f32 %v1162, 0.7978846
          %v1164 = vtanh.pop %v1163
          %v1165 = vadd.f32 %v1164, 1.0
          %v1166 = vmul.f32 %v1165, 0.5
          %v1167 = vmul.f32 %v1154, %v1166
          %v1168 = vpack.c.bf16 %v1167, %v1167
          %v1169 = vlaneseq
          %v1170 = vshrl.u32 %v1169, 7
          %v1171 = vsub.s32 0, %v1170
          %v1172 = vrot.slane %v1050, %v1171
          %v1189 = vunpack.c.l.b16 %v1056
          %v1190 = vunpack.c.l.b16 %v1057
          %v1191 = vunpack.c.l.b16 %v1058
          %v1192 = vunpack.c.l.b16 %v1059
          %v1193 = vunpack.c.l.b16 %v1060
          %v1194 = vunpack.c.l.b16 %v1061
          %v1195 = vunpack.c.l.b16 %v1062
          %v1196 = vunpack.c.l.b16 %v1063
          %v1197 = vunpack.c.l.b16 %v1064
          %v1198 = vunpack.c.l.b16 %v1065
          %v1199 = vunpack.c.l.b16 %v1066
          %v1200 = vunpack.c.l.b16 %v1067
          %v1201 = vunpack.c.l.b16 %v1068
          %v1202 = vunpack.c.l.b16 %v1069
          %v1203 = vunpack.c.l.b16 %v1070
          %v1204 = vunpack.c.l.b16 %v1071
          %v1205 = vpack.c.b16 %v1190, %v1189
          %v1206 = vpack.c.b16 %v1192, %v1191
          %v1207 = vpack.c.b16 %v1194, %v1193
          %v1208 = vpack.c.b16 %v1196, %v1195
          %v1209 = vpack.c.b16 %v1198, %v1197
          %v1210 = vpack.c.b16 %v1200, %v1199
          %v1211 = vpack.c.b16 %v1202, %v1201
          %v1212 = vpack.c.b16 %v1204, %v1203
          %1221 = vmatprep.subr.bf16.mxu0 0
          %1222 = vmatpush1.bf16.msra.mxu0 %v1212
          %1223 = vmatprep.subr.bf16.mxu0 0
          %1224 = vmatpush1.bf16.msra.mxu0 %v1211
          %1225 = vmatprep.subr.bf16.mxu0 0
          %1226 = vmatpush1.bf16.msra.mxu0 %v1210
          %1227 = vmatprep.subr.bf16.mxu0 0
          %1228 = vmatpush1.bf16.msra.mxu0 %v1209
          %1229 = vmatprep.subr.bf16.mxu0 0
          %1230 = vmatpush1.bf16.msra.mxu0 %v1208
          %1231 = vmatprep.subr.bf16.mxu0 0
          %1232 = vmatpush1.bf16.msra.mxu0 %v1207
          %1233 = vmatprep.subr.bf16.mxu0 0
          %1234 = vmatpush1.bf16.msra.mxu0 %v1206
          %1235 = vmatprep.subr.bf16.mxu0 0
          %1236 = vmatpush1.bf16.msra.mxu0 %v1205
          %1237 = vmatprep.subr.bf16.mxu0 0
          %1238 = vmatpush2.bf16.msra.mxu0 0
          %1239 = vmatprep.subr.bf16.mxu0 0
          %1240 = vmatpush2.bf16.msra.mxu0 0
          %1241 = vmatprep.subr.bf16.mxu0 0
          %1242 = vmatpush2.bf16.msra.mxu0 0
          %1243 = vmatprep.subr.bf16.mxu0 0
          %1244 = vmatpush2.bf16.msra.mxu0 0
          %1245 = vmatprep.subr.bf16.mxu0 0
          %1246 = vmatpush2.bf16.msra.mxu0 0
          %1247 = vmatprep.subr.bf16.mxu0 0
          %1248 = vmatpush2.bf16.msra.mxu0 0
          %1249 = vmatprep.subr.bf16.mxu0 0
          %1250 = vmatpush2.bf16.msra.mxu0 0
          %1251 = vmatprep.subr.bf16.mxu0 0
          %1252 = vmatpush2.bf16.msra.mxu0 0
          %1253 = vmatprep.mubr.bf16.mxu0 0
          %1254 = vmatmul.mubr.bf16.gmra.mxu0 %v1168
          %v1255 = vpop.f32.mrf.mxu0
          %v1256 = vadd.f32 %v1172, %v1255
          %v1257 = vpop.f32.mrf.mxu0
          %v1258 = vpop.f32.mrf.mxu0
          %v1259 = vpop.f32.mrf.mxu0
          %1260 = vdwg.mxu0
          %v1261 = vadd.f32 %v1072, %v1256
          %1262 = vst.msk [vmem:[%s376] sm:$0xff] %vm462, %v1261
        $region68: #{tpu_custom_call.1} parent=55 // pred_fallthru
          _
        %s1263 = sand.u32 %s245, 1
        %s1264 = scalar_lea.sflag [#allocation6], %s1263
        %s1265 = sand.u32 %s245, 1
        %s1266 = smul.addr %s1265, 8
        %s1267 = scalar_lea.vmem [#allocation7], %s1266
        // Predicated region
        $region69: #{tpu_custom_call.1} parent=55 // pred_check
          %p1268 = pneg %p255
        $region70: #{tpu_custom_call.1} parent=55 // pred_check_branch
          %1270 = sbr.rel (%p1268) target = $region72
        $region71: #{tpu_custom_call.1} parent=55 // pred_region
          %s1272 = ssub.s32 128, 128
          %1273 = vsyncadd %s1264, %s1272
          %s1274 = smul.addr %s28, 128
          %s1275 = scalar_lea.hbm %s9, %s1274
          %s1277 = sshll.u32 %s1267, 4
          %s1278 = int_to_ptr.vmem [resolvable:$true] %s1277
          %1280 = dma.vmem_to_hbm [thread:$0]  %s1278, 128, %s1275, %s1264
        $region72: #{tpu_custom_call.1} parent=55 // pred_fallthru
          _
      $region56: #{tpu_custom_call.1} parent=5 // pred_fallthru
        _
      %p1281 = scmp.le.s32.totalorder 2, %s19
      // Predicated region
      $region73: #{tpu_custom_call.1} parent=5 // pred_check
        %p1282 = pneg %p1281
      $region74: #{tpu_custom_call.1} parent=5 // pred_check_branch
        %1284 = sbr.rel (%p1282) target = $region76
      $region75: #{tpu_custom_call.1} parent=5 // pred_region
        %s1285 = ssub.s32 %s19, 2
        // Predicated region
        $region77: #{tpu_custom_call.1} parent=75 // pred_check
          %p1286 = pneg %p261
        $region78: #{tpu_custom_call.1} parent=75 // pred_check_branch
          %1288 = sbr.rel (%p1286) target = $region80
        $region79: #{tpu_custom_call.1} parent=75 // pred_region
          %s1289 = sand.u32 %s246, 1
          %s1290 = scalar_lea.sflag [#allocation6], %s1289
          %s1291 = sand.u32 %s246, 1
          %s1292 = smul.addr %s1291, 8
          %s1293 = scalar_lea.vmem [#allocation7], %s1292
          %1294 = dma.done %s1290, 128
        $region80: #{tpu_custom_call.1} parent=75 // pred_fallthru
          _
      $region76: #{tpu_custom_call.1} parent=5 // pred_fallthru
        _
    $region6: #{tpu_custom_call.1} parent=1 // loop_footer
      %s23 = sadd.s32 1, %s19
    $region7: #{tpu_custom_call.1} parent=1 // loop_footer_branch
      %18 = sbr.rel target = $region3
    $region8: #{tpu_custom_call.1} parent=1 // loop_exit
      _
    %1295 = vsyncpa [#allocation5], 1
    %s1296 = scalar_lea.sflag [#allocation5], 1
    %1297 = vsyncpa %s1296, 1
    %1298 = vsyncpa [#allocation6], 1
    %s1299 = scalar_lea.sflag [#allocation6], 1
    %1300 = vsyncpa %s1299, 1

// kernel: tpu_custom_call.1
$region0: #{tpu_custom_call.1}
  #allocation0 [shape = 'u32[]', space=smem, size = 0x4, offset = 0x4, fixed_abs, tag = 'smem constant byte address 0x4 - core index']
  #allocation1 [shape = 'u32[144,128]{1,0:T(1,128)}', space=vmem, size = 0x12000, scoped, tag = 'internal scratch']
  #allocation2 [shape = 'bf16[8,32]{1,0:T(8,128)(2,1)}', space=vmem, size = 0x800, scoped, tag = 'scratch operand']
  #allocation3 [shape = 'f32[8,32]{1,0:T(8,128)}', space=vmem, size = 0x1000, scoped, tag = 'scratch operand']
  %s0 = inlined_call_operand.vmem [shape: f32[2,8,32], index: 0, kind: input, shape index: {}]
  %s1 = inlined_call_operand.vmem [shape: bf16[2,4,8,8], index: 1, kind: input, shape index: {}]
  %s2 = inlined_call_operand.vmem [shape: bf16[1,32,96], index: 2, kind: input, shape index: {}]
  %s3 = inlined_call_operand.vmem [shape: f32[1,1,96], index: 3, kind: input, shape index: {}]
  %s4 = inlined_call_operand.vmem [shape: bf16[1,32,32], index: 4, kind: input, shape index: {}]
  %s5 = inlined_call_operand.vmem [shape: f32[6,32], index: 5, kind: input, shape index: {}]
  %s6 = inlined_call_operand.vmem [shape: f32[1,128], index: 6, kind: input, shape index: {}]
  %s7 = inlined_call_operand.hbm [shape: bf16[32,128], index: 7, kind: input, shape index: {}]
  %s8 = inlined_call_operand.vmem [shape: bf16[128,32], index: 8, kind: input, shape index: {}]
  %s9 = inlined_call_operand.hbm [shape: f32[2,8,32], index: 9, kind: output, shape index: {}]
  %s10 = sld [smem:[#allocation0]]
  $region81: #{tpu_custom_call.1} parent=0
    _
  %s12 = ssub.s32 1, %s10
  %s13 = scalar_select 0, %s12, %s10
  $region1: #{tpu_custom_call.1} parent=0
    #allocation4 [shape = 'u8[8192]{0}', space=vmem, size = 0x2000, scoped, tag = 'input window, operand 7, single buffered']
    #allocation5 [shape = 's32[2]{0}', space=sflag, size = 0x8, scoped, tag = 'scoped memory for tpu_custom_call.1']
    #allocation6 [shape = 's32[2]{0}', space=sflag, size = 0x8, scoped, tag = 'scoped memory for tpu_custom_call.1']
    #allocation7 [shape = 'u8[8192]{0}', space=vmem, size = 0x2000, scoped, tag = 'output window, operand 0']
    %14 = vsyncpa [#allocation5], 0
    %15 = vsyncpa [#allocation6], 0
    %s16 = scalar_lea.sflag [#allocation6], 1
    %17 = vsyncpa %s16, 0
    loop: start=0, step=1, limit=4
    $region2: #{tpu_custom_call.1} parent=1 // loop_pre_header
      _
    $region3: #{tpu_custom_call.1} parent=1 // loop_header
      %s19 = sphi 0, %s23
      %p20 = scmp.ge.s32.totalorder %s19, 4
      %s26 = sphi 0, %s38
      %s27 = sphi 0, %s34
      %s28 = sphi 0, %s26
      %s29 = sphi 0, %s27
      %s30 = sphi 0, %s28
      %s31 = sphi 0, %s29
      %s41 = sphi 0, %s43
      %s44 = sphi 0, %s41
      %s45 = sphi 0, %s44
      %s61 = sphi 0, %s45
      %s69 = sphi 0, %s71
      %s72 = sphi 0, %s69
      %s73 = sphi 0, %s72
      %s89 = sphi 0, %s73
      %s93 = sphi 0, %s93
      %s95 = sphi 0, %s93
      %s96 = sphi 0, %s95
      %s110 = sphi 0, %s96
      %s114 = sphi 0, %s114
      %s116 = sphi 0, %s114
      %s117 = sphi 0, %s116
      %s131 = sphi 0, %s117
      %s135 = sphi 0, %s135
      %s137 = sphi 0, %s135
      %s138 = sphi 0, %s137
      %s152 = sphi 0, %s138
      %s156 = sphi 0, %s156
      %s158 = sphi 0, %s156
      %s159 = sphi 0, %s158
      %s173 = sphi 0, %s159
      %s177 = sphi 0, %s177
      %s179 = sphi 0, %s177
      %s180 = sphi 0, %s179
      %s194 = sphi 0, %s180
      %s198 = sphi 0, %s198
      %s200 = sphi 0, %s198
      %s201 = sphi 0, %s200
      %s215 = sphi 0, %s201
      %s219 = sphi 0, %s219
      %s221 = sphi 0, %s219
      %s222 = sphi 0, %s221
      %s236 = sphi 0, %s222
      %s242 = sphi 0, %s244
      %s245 = sphi 0, %s242
      %s246 = sphi 0, %s245
      %s262 = sphi 0, %s246
    $region4: #{tpu_custom_call.1} parent=1 // loop_header_branch
      %22 = sbr.rel (%p20) target = $region8
    $region5: #{tpu_custom_call.1} parent=1 // loop_body
      %s24 = ssub.s32 %s19, 1
      %s25 = ssub.s32 %s19, 2
      %s32 = sadd.s32 1, %s27
      %p33 = scmp.ge.s32.totalorder %s32, 1
      %s34 = scalar_select %p33, 0, %s32
      %s35 = sadd.s32 1, %s26
      %s36 = scalar_select %p33, %s35, %s26
      %p37 = scmp.ge.s32.totalorder %s36, 2
      %s38 = scalar_select %p37, 0, %s36
      %s39 = ssub.s32 %s26, %s38
      %p40 = scmp.eq.s32.totalorder %s39, 0
      %s42 = sadd.s32 %s41, 1
      %s43 = scalar_select %p40, %s41, %s42
      %p46 = pneg %p40
      %p47 = scmp.eq.s32.totalorder %s19, 1
      %p48 = por %p46, %p47
      %p49 = scmp.ne.s32.totalorder %s41, %s44
      %p50 = scmp.eq.s32.totalorder %s19, 0
      %p51 = por %p49, %p50
      %p52 = scmp.ne.s32.totalorder %s41, %s44
      %p53 = scmp.eq.s32.totalorder %s24, 1
      %p54 = por %p52, %p53
      %p55 = scmp.ne.s32.totalorder %s44, %s45
      %p56 = scmp.eq.s32.totalorder %s24, 0
      %p57 = por %p55, %p56
      %p58 = scmp.ne.s32.totalorder %s44, %s45
      %p59 = scmp.eq.s32.totalorder %s25, 1
      %p60 = por %p58, %p59
      %p62 = scmp.ne.s32.totalorder %s45, %s61
      %p63 = scmp.eq.s32.totalorder %s25, 0
      %p64 = por %p62, %p63
      %s65 = ssub.s32 %s26, %s38
      %s66 = ssub.s32 %s27, %s34
      %s67 = sor.u32 %s65, %s66
      %p68 = scmp.eq.s32.totalorder %s67, 0
      %s70 = sadd.s32 %s69, 1
      %s71 = scalar_select %p68, %s69, %s70
      %p74 = pneg %p68
      %p75 = scmp.eq.s32.totalorder %s19, 1
      %p76 = por %p74, %p75
      %p77 = scmp.ne.s32.totalorder %s69, %s72
      %p78 = scmp.eq.s32.totalorder %s19, 0
      %p79 = por %p77, %p78
      %p80 = scmp.ne.s32.totalorder %s69, %s72
      %p81 = scmp.eq.s32.totalorder %s24, 1
      %p82 = por %p80, %p81
      %p83 = scmp.ne.s32.totalorder %s72, %s73
      %p84 = scmp.eq.s32.totalorder %s24, 0
      %p85 = por %p83, %p84
      %p86 = scmp.ne.s32.totalorder %s72, %s73
      %p87 = scmp.eq.s32.totalorder %s25, 1
      %p88 = por %p86, %p87
      %p90 = scmp.ne.s32.totalorder %s73, %s89
      %p91 = scmp.eq.s32.totalorder %s25, 0
      %p92 = por %p90, %p91
      %s94 = sadd.s32 %s93, 1
      %p97 = scmp.eq.s32.totalorder %s19, 1
      %p98 = scmp.ne.s32.totalorder %s93, %s95
      %p99 = scmp.eq.s32.totalorder %s19, 0
      %p100 = por %p98, %p99
      %p101 = scmp.ne.s32.totalorder %s93, %s95
      %p102 = scmp.eq.s32.totalorder %s24, 1
      %p103 = por %p101, %p102
      %p104 = scmp.ne.s32.totalorder %s95, %s96
      %p105 = scmp.eq.s32.totalorder %s24, 0
      %p106 = por %p104, %p105
      %p107 = scmp.ne.s32.totalorder %s95, %s96
      %p108 = scmp.eq.s32.totalorder %s25, 1
      %p109 = por %p107, %p108
      %p111 = scmp.ne.s32.totalorder %s96, %s110
      %p112 = scmp.eq.s32.totalorder %s25, 0
      %p113 = por %p111, %p112
      %s115 = sadd.s32 %s114, 1
      %p118 = scmp.eq.s32.totalorder %s19, 1
      %p119 = scmp.ne.s32.totalorder %s114, %s116
      %p120 = scmp.eq.s32.totalorder %s19, 0
      %p121 = por %p119, %p120
      %p122 = scmp.ne.s32.totalorder %s114, %s116
      %p123 = scmp.eq.s32.totalorder %s24, 1
      %p124 = por %p122, %p123
      %p125 = scmp.ne.s32.totalorder %s116, %s117
      %p126 = scmp.eq.s32.totalorder %s24, 0
      %p127 = por %p125, %p126
      %p128 = scmp.ne.s32.totalorder %s116, %s117
      %p129 = scmp.eq.s32.totalorder %s25, 1
      %p130 = por %p128, %p129
      %p132 = scmp.ne.s32.totalorder %s117, %s131
      %p133 = scmp.eq.s32.totalorder %s25, 0
      %p134 = por %p132, %p133
      %s136 = sadd.s32 %s135, 1
      %p139 = scmp.eq.s32.totalorder %s19, 1
      %p140 = scmp.ne.s32.totalorder %s135, %s137
      %p141 = scmp.eq.s32.totalorder %s19, 0
      %p142 = por %p140, %p141
      %p143 = scmp.ne.s32.totalorder %s135, %s137
      %p144 = scmp.eq.s32.totalorder %s24, 1
      %p145 = por %p143, %p144
      %p146 = scmp.ne.s32.totalorder %s137, %s138
      %p147 = scmp.eq.s32.totalorder %s24, 0
      %p148 = por %p146, %p147
      %p149 = scmp.ne.s32.totalorder %s137, %s138
      %p150 = scmp.eq.s32.totalorder %s25, 1
      %p151 = por %p149, %p150
      %p153 = scmp.ne.s32.totalorder %s138, %s152
      %p154 = scmp.eq.s32.totalorder %s25, 0
      %p155 = por %p153, %p154
      %s157 = sadd.s32 %s156, 1
      %p160 = scmp.eq.s32.totalorder %s19, 1
      %p161 = scmp.ne.s32.totalorder %s156, %s158
      %p162 = scmp.eq.s32.totalorder %s19, 0
      %p163 = por %p161, %p162
      %p164 = scmp.ne.s32.totalorder %s156, %s158
      %p165 = scmp.eq.s32.totalorder %s24, 1
      %p166 = por %p164, %p165
      %p167 = scmp.ne.s32.totalorder %s158, %s159
      %p168 = scmp.eq.s32.totalorder %s24, 0
      %p169 = por %p167, %p168
      %p170 = scmp.ne.s32.totalorder %s158, %s159
      %p171 = scmp.eq.s32.totalorder %s25, 1
      %p172 = por %p170, %p171
      %p174 = scmp.ne.s32.totalorder %s159, %s173
      %p175 = scmp.eq.s32.totalorder %s25, 0
      %p176 = por %p174, %p175
      %s178 = sadd.s32 %s177, 1
      %p181 = scmp.eq.s32.totalorder %s19, 1
      %p182 = scmp.ne.s32.totalorder %s177, %s179
      %p183 = scmp.eq.s32.totalorder %s19, 0
      %p184 = por %p182, %p183
      %p185 = scmp.ne.s32.totalorder %s177, %s179
      %p186 = scmp.eq.s32.totalorder %s24, 1
      %p187 = por %p185, %p186
      %p188 = scmp.ne.s32.totalorder %s179, %s180
      %p189 = scmp.eq.s32.totalorder %s24, 0
      %p190 = por %p188, %p189
      %p191 = scmp.ne.s32.totalorder %s179, %s180
      %p192 = scmp.eq.s32.totalorder %s25, 1
      %p193 = por %p191, %p192
      %p195 = scmp.ne.s32.totalorder %s180, %s194
      %p196 = scmp.eq.s32.totalorder %s25, 0
      %p197 = por %p195, %p196
      %s199 = sadd.s32 %s198, 1
      %p202 = scmp.eq.s32.totalorder %s19, 1
      %p203 = scmp.ne.s32.totalorder %s198, %s200
      %p204 = scmp.eq.s32.totalorder %s19, 0
      %p205 = por %p203, %p204
      %p206 = scmp.ne.s32.totalorder %s198, %s200
      %p207 = scmp.eq.s32.totalorder %s24, 1
      %p208 = por %p206, %p207
      %p209 = scmp.ne.s32.totalorder %s200, %s201
      %p210 = scmp.eq.s32.totalorder %s24, 0
      %p211 = por %p209, %p210
      %p212 = scmp.ne.s32.totalorder %s200, %s201
      %p213 = scmp.eq.s32.totalorder %s25, 1
      %p214 = por %p212, %p213
      %p216 = scmp.ne.s32.totalorder %s201, %s215
      %p217 = scmp.eq.s32.totalorder %s25, 0
      %p218 = por %p216, %p217
      %s220 = sadd.s32 %s219, 1
      %p223 = scmp.eq.s32.totalorder %s19, 1
      %p224 = scmp.ne.s32.totalorder %s219, %s221
      %p225 = scmp.eq.s32.totalorder %s19, 0
      %p226 = por %p224, %p225
      %p227 = scmp.ne.s32.totalorder %s219, %s221
      %p228 = scmp.eq.s32.totalorder %s24, 1
      %p229 = por %p227, %p228
      %p230 = scmp.ne.s32.totalorder %s221, %s222
      %p231 = scmp.eq.s32.totalorder %s24, 0
      %p232 = por %p230, %p231
      %p233 = scmp.ne.s32.totalorder %s221, %s222
      %p234 = scmp.eq.s32.totalorder %s25, 1
      %p235 = por %p233, %p234
      %p237 = scmp.ne.s32.totalorder %s222, %s236
      %p238 = scmp.eq.s32.totalorder %s25, 0
      %p239 = por %p237, %p238
      %s240 = ssub.s32 %s26, %s38
      %p241 = scmp.eq.s32.totalorder %s240, 0
      %s243 = sadd.s32 %s242, 1
      %s244 = scalar_select %p241, %s242, %s243
      %p247 = pneg %p241
      %p248 = scmp.eq.s32.totalorder %s19, 1
      %p249 = por %p247, %p248
      %p250 = scmp.ne.s32.totalorder %s242, %s245
      %p251 = scmp.eq.s32.totalorder %s19, 0
      %p252 = por %p250, %p251
      %p253 = scmp.ne.s32.totalorder %s242, %s245
      %p254 = scmp.eq.s32.totalorder %s24, 1
      %p255 = por %p253, %p254
      %p256 = scmp.ne.s32.totalorder %s245, %s246
      %p257 = scmp.eq.s32.totalorder %s24, 0
      %p258 = por %p256, %p257
      %p259 = scmp.ne.s32.totalorder %s245, %s246
      %p260 = scmp.eq.s32.totalorder %s25, 1
      %p261 = por %p259, %p260
      %p263 = scmp.ne.s32.totalorder %s246, %s262
      %p264 = scmp.eq.s32.totalorder %s25, 0
      %p265 = por %p263, %p264
      %p266 = scmp.le.s32.totalorder 1, %s19
      %p267 = scmp.lt.s32.totalorder %s19, 3
      %p268 = pnand %p266, %p267
      %p269 = pneg %p268
      // Predicated region
      $region9: #{tpu_custom_call.1} parent=5 // pred_check
        _
      $region10: #{tpu_custom_call.1} parent=5 // pred_check_branch
        %271 = sbr.rel (%p268) target = $region12
      $region11: #{tpu_custom_call.1} parent=5 // pred_region
        %s272 = ssub.s32 %s19, 1
        // Predicated region
        $region13: #{tpu_custom_call.1} parent=11 // pred_check
          %p273 = pneg %p106
        $region14: #{tpu_custom_call.1} parent=11 // pred_check_branch
          %275 = sbr.rel (%p273) target = $region16
        $region15: #{tpu_custom_call.1} parent=11 // pred_region
          _
        $region16: #{tpu_custom_call.1} parent=11 // pred_fallthru
          _
        // Predicated region
        $region17: #{tpu_custom_call.1} parent=11 // pred_check
          %p276 = pneg %p127
        $region18: #{tpu_custom_call.1} parent=11 // pred_check_branch
          %278 = sbr.rel (%p276) target = $region20
        $region19: #{tpu_custom_call.1} parent=11 // pred_region
          _
        $region20: #{tpu_custom_call.1} parent=11 // pred_fallthru
          _
        // Predicated region
        $region21: #{tpu_custom_call.1} parent=11 // pred_check
          %p279 = pneg %p148
        $region22: #{tpu_custom_call.1} parent=11 // pred_check_branch
          %281 = sbr.rel (%p279) target = $region24
        $region23: #{tpu_custom_call.1} parent=11 // pred_region
          _
        $region24: #{tpu_custom_call.1} parent=11 // pred_fallthru
          _
        // Predicated region
        $region25: #{tpu_custom_call.1} parent=11 // pred_check
          %p282 = pneg %p169
        $region26: #{tpu_custom_call.1} parent=11 // pred_check_branch
          %284 = sbr.rel (%p282) target = $region28
        $region27: #{tpu_custom_call.1} parent=11 // pred_region
          _
        $region28: #{tpu_custom_call.1} parent=11 // pred_fallthru
          _
        // Predicated region
        $region29: #{tpu_custom_call.1} parent=11 // pred_check
          %p285 = pneg %p190
        $region30: #{tpu_custom_call.1} parent=11 // pred_check_branch
          %287 = sbr.rel (%p285) target = $region32
        $region31: #{tpu_custom_call.1} parent=11 // pred_region
          _
        $region32: #{tpu_custom_call.1} parent=11 // pred_fallthru
          _
        // Predicated region
        $region33: #{tpu_custom_call.1} parent=11 // pred_check
          %p288 = pneg %p211
        $region34: #{tpu_custom_call.1} parent=11 // pred_check_branch
          %290 = sbr.rel (%p288) target = $region36
        $region35: #{tpu_custom_call.1} parent=11 // pred_region
          %s292 = ssub.s32 256, 256
          %293 = vsyncadd [#allocation5], %s292
          %s294 = sshll.u32 [#allocation4], 4
          %s295 = int_to_ptr.vmem [resolvable:$true] %s294
          %300 = dma.hbm_to_vmem [thread:$0]  %s7, 256, %s295, [#allocation5], 64, 64, 4
        $region36: #{tpu_custom_call.1} parent=11 // pred_fallthru
          _
        // Predicated region
        $region37: #{tpu_custom_call.1} parent=11 // pred_check
          %p301 = pneg %p232
        $region38: #{tpu_custom_call.1} parent=11 // pred_check_branch
          %303 = sbr.rel (%p301) target = $region40
        $region39: #{tpu_custom_call.1} parent=11 // pred_region
          _
        $region40: #{tpu_custom_call.1} parent=11 // pred_fallthru
          _
      $region12: #{tpu_custom_call.1} parent=5 // pred_fallthru
        _
      %p304 = scmp.lt.s32.totalorder %s19, 2
      // Predicated region
      $region41: #{tpu_custom_call.1} parent=5 // pred_check
        %p305 = pneg %p304
      $region42: #{tpu_custom_call.1} parent=5 // pred_check_branch
        %307 = sbr.rel (%p305) target = $region44
      $region43: #{tpu_custom_call.1} parent=5 // pred_region
        // Predicated region
        $region45: #{tpu_custom_call.1} parent=43 // pred_check
          %p308 = pneg %p51
        $region46: #{tpu_custom_call.1} parent=43 // pred_check_branch
          %310 = sbr.rel (%p308) target = $region48
        $region47: #{tpu_custom_call.1} parent=43 // pred_region
          %p311 = scmp.lt.s32.totalorder %s26, 1
          %s312 = scalar_select %p311, %s26, 1
          %s313 = smul.addr %s312, 8
          %s314 = scalar_lea.vmem %s0, %s313
        $region48: #{tpu_custom_call.1} parent=43 // pred_fallthru
          _
        // Predicated region
        $region49: #{tpu_custom_call.1} parent=43 // pred_check
          %p315 = pneg %p79
        $region50: #{tpu_custom_call.1} parent=43 // pred_check_branch
          %317 = sbr.rel (%p315) target = $region52
        $region51: #{tpu_custom_call.1} parent=43 // pred_region
          %s318 = smul.u32 4, %s27
          %p319 = scmp.lt.s32.totalorder %s26, 1
          %s320 = scalar_select %p319, %s26, 1
          %p321 = scmp.lt.s32.totalorder %s318, 3
          %s322 = scalar_select %p321, %s318, 3
          %s323 = smul.addr %s320, 4
          %s324 = sadd.s32 %s322, %s323
          %s325 = smul.addr %s324, 4
          %s326 = scalar_lea.vmem %s1, %s325
          %s327 = smul.u32 4, %s27
        $region52: #{tpu_custom_call.1} parent=43 // pred_fallthru
          _
      $region44: #{tpu_custom_call.1} parent=5 // pred_fallthru
        _
      %p328 = scmp.le.s32.totalorder 1, %s19
      %p329 = scmp.lt.s32.totalorder %s19, 3
      %p330 = pnand %p328, %p329
      %p331 = pneg %p330
      // Predicated region
      $region53: #{tpu_custom_call.1} parent=5 // pred_check
        _
      $region54: #{tpu_custom_call.1} parent=5 // pred_check_branch
        %333 = sbr.rel (%p330) target = $region56
      $region55: #{tpu_custom_call.1} parent=5 // pred_region
        %s334 = ssub.s32 %s19, 1
        // Predicated region
        $region57: #{tpu_custom_call.1} parent=55 // pred_check
          %p335 = pneg %p211
        $region58: #{tpu_custom_call.1} parent=55 // pred_check_branch
          %337 = sbr.rel (%p335) target = $region60
        $region59: #{tpu_custom_call.1} parent=55 // pred_region
          %338 = dma.done [#allocation5], 256
        $region60: #{tpu_custom_call.1} parent=55 // pred_fallthru
          _
        %p339 = scmp.lt.s32.totalorder %s28, 1
        %s340 = scalar_select %p339, %s28, 1
        %s341 = smul.addr %s340, 8
        %s342 = scalar_lea.vmem %s0, %s341
        %p343 = pneg %p57
        %p344 = pneg %p54
        %s345 = smul.u32 4, %s29
        %p346 = scmp.lt.s32.totalorder %s28, 1
        %s347 = scalar_select %p346, %s28, 1
        %p348 = scmp.lt.s32.totalorder %s345, 3
        %s349 = scalar_select %p348, %s345, 3
        %s350 = smul.addr %s347, 4
        %s351 = sadd.s32 %s349, %s350
        %s352 = smul.addr %s351, 4
        %s353 = scalar_lea.vmem %s1, %s352
        %p354 = pneg %p85
        %p355 = pneg %p82
        %p356 = pneg %p106
        %p357 = pneg %p103
        %p358 = pneg %p127
        %p359 = pneg %p124
        %p360 = pneg %p148
        %p361 = pneg %p145
        %p362 = pneg %p169
        %p363 = pneg %p166
        %p364 = pneg %p190
        %p365 = pneg %p187
        %p366 = pneg %p211
        %p367 = pneg %p208
        %p368 = pneg %p232
        %p369 = pneg %p229
        %p370 = pneg %p258
        %p371 = pneg %p255
        %s372 = sand.u32 %s245, 1
        %s373 = scalar_lea.sflag [#allocation6], %s372
        %s374 = sand.u32 %s245, 1
        %s375 = smul.addr %s374, 8
        %s376 = scalar_lea.vmem [#allocation7], %s375
        %p377 = scmp.lt.s32.totalorder %s28, 1
        %s378 = scalar_select %p377, %s28, 1
        %s379 = smul.addr %s378, 8
        %s380 = scalar_lea.vmem %s0, %s379
        %s381 = smul.u32 4, %s29
        %p382 = scmp.lt.s32.totalorder %s28, 1
        %s383 = scalar_select %p382, %s28, 1
        %p384 = scmp.lt.s32.totalorder %s381, 3
        %s385 = scalar_select %p384, %s381, 3
        %s386 = smul.addr %s383, 4
        %s387 = sadd.s32 %s385, %s386
        %s388 = smul.addr %s387, 4
        %s389 = scalar_lea.vmem %s1, %s388
        %s390 = smul.u32 4, %s29
        %p392 = scmp.eq.s32.totalorder %s29, 0
        // Predicated region
        $region61: #{tpu_custom_call.1} parent=55 // pred_check
          %p393 = pneg %p392
        $region62: #{tpu_custom_call.1} parent=55 // pred_check_branch
          %395 = sbr.rel (%p393) target = $region64
        $region63: #{tpu_custom_call.1} parent=55 // pred_region
          %v396 = vld [vmem:[%s380] sm:$0xff]
          %v397 = vld [vmem:[%s5 + $0x1] sm:$0x1]
          %v398 = vld [vmem:[%s5 + $0x2] sm:$0x1]
          %vm399 = vcmask 261120
          %v400 = vsel %vm399, %v396, 0.0
          %401 = vadd.xlane.f32.xlu0 %v400
          %v402 = vpop.xlane.xlu0 %401
          %v403 = vrcp.pop 32.0
          %v404 = vmul.f32 %v402, %v403
          %v405 = vsub.f32 %v396, %v404
          %v406 = vmul.f32 %v405, %v405
          %v407 = vsel %vm399, %v406, 0.0
          %408 = vadd.xlane.f32.xlu0 %v407
          %v409 = vpop.xlane.xlu0 %408
          %v410 = vmul.f32 %v409, %v403
          %v411 = vadd.f32 %v410, 1e-05
          %v412 = vrsqrt.pop %v411
          %v413 = vmul.f32 %v405, %v412
          %v414 = vlaneseq
          %v415 = vshrl.u32 %v414, 7
          %v416 = vsub.s32 0, %v415
          %v417 = vrot.slane %v397, %v416
          %v418 = vmul.f32 %v413, %v417
          %v419 = vlaneseq
          %v420 = vshrl.u32 %v419, 7
          %v421 = vsub.s32 0, %v420
          %v422 = vrot.slane %v398, %v421
          %v423 = vadd.f32 %v418, %v422
          %v424 = vpack.c.bf16 %v423, %v423
          %vm425 = vcmask 257024
          %426 = vst.msk [vmem:[#allocation2] sm:$0xf] %vm425, %v424
          %v427 = vld [vmem:[%s5] sm:$0x1]
          %v428 = vlaneseq
          %v429 = vshrl.u32 %v428, 7
          %v430 = vsub.s32 0, %v429
          %v431 = vrot.slane %v427, %v430
          %v432 = vadd.f32 %v396, %v431
          %433 = vst.msk [vmem:[#allocation3] sm:$0xff] %vm399, %v432
        $region64: #{tpu_custom_call.1} parent=55 // pred_fallthru
          _
        %v434 = vld [vmem:[#allocation2] sm:$0xf]
        %s435 = smul.u32 %s29, 4
        %s436 = smul.addr %s435, 4
        %s437 = scalar_lea.vmem %s2, %s436
        %v438 = vld [vmem:[%s437] sm:$0xf]
        %v439 = vld [vmem:[%s437 + $0x4] sm:$0xf]
        %v440 = vld [vmem:[%s437 + $0x8] sm:$0xf]
        %v441 = vld [vmem:[%s437 + $0xc] sm:$0xf]
        %s442 = scalar_lea.vmem %s3, %s29
        %v443 = vld [vmem:[%s442] sm:$0x1]
        %v445 = vlaneseq
        %v446 = vshrl.u32 %v445, 7
        %v447 = vsub.s32 0, %v446
        %v448 = vrot.slane %v443, %v447
        %v454 = vunpack.c.l.b16 %v438
        %v455 = vunpack.c.l.b16 %v439
        %v456 = vunpack.c.l.b16 %v440
        %v457 = vunpack.c.l.b16 %v441
        %v458 = vpack.c.b16 %v455, %v454
        %v459 = vpack.c.b16 %v457, %v456
        %vm462 = vcmask 261120
        %v464 = vsel %vm462, %v434, 0
        %466 = vmatprep.subr.bf16.mxu0 0
        %467 = vmatpush1.bf16.msra.mxu0 0
        %468 = vmatprep.subr.bf16.mxu0 0
        %469 = vmatpush1.bf16.msra.mxu0 0
        %470 = vmatprep.subr.bf16.mxu0 0
        %471 = vmatpush1.bf16.msra.mxu0 0
        %472 = vmatprep.subr.bf16.mxu0 0
        %473 = vmatpush1.bf16.msra.mxu0 0
        %474 = vmatprep.subr.bf16.mxu0 0
        %475 = vmatpush1.bf16.msra.mxu0 0
        %476 = vmatprep.subr.bf16.mxu0 0
        %477 = vmatpush1.bf16.msra.mxu0 0
        %478 = vmatprep.subr.bf16.mxu0 0
        %479 = vmatpush1.bf16.msra.mxu0 %v459
        %480 = vmatprep.subr.bf16.mxu0 0
        %481 = vmatpush1.bf16.msra.mxu0 %v458
        %482 = vmatprep.subr.bf16.mxu0 0
        %483 = vmatpush2.bf16.msra.mxu0 0
        %484 = vmatprep.subr.bf16.mxu0 0
        %485 = vmatpush2.bf16.msra.mxu0 0
        %486 = vmatprep.subr.bf16.mxu0 0
        %487 = vmatpush2.bf16.msra.mxu0 0
        %488 = vmatprep.subr.bf16.mxu0 0
        %489 = vmatpush2.bf16.msra.mxu0 0
        %490 = vmatprep.subr.bf16.mxu0 0
        %491 = vmatpush2.bf16.msra.mxu0 0
        %492 = vmatprep.subr.bf16.mxu0 0
        %493 = vmatpush2.bf16.msra.mxu0 0
        %494 = vmatprep.subr.bf16.mxu0 0
        %495 = vmatpush2.bf16.msra.mxu0 0
        %496 = vmatprep.subr.bf16.mxu0 0
        %497 = vmatpush2.bf16.msra.mxu0 0
        %498 = vmatprep.mubr.bf16.mxu0 0
        %499 = vmatmul.mubr.bf16.gmra.mxu0 %v464
        %v500 = vpop.f32.mrf.mxu0
        %v501 = vadd.f32 %v448, %v500
        %v502 = vpop.f32.mrf.mxu0
        %v503 = vpop.f32.mrf.mxu0
        %v504 = vpop.f32.mrf.mxu0
        %505 = vdwg.mxu0
        %v506 = vpack.c.bf16 %v501, %v501
        %508 = vrot.lane.b32.xlu0 %v506, 96
        %v509 = vpop.permute.xlu0 %508
        %vm510 = vcmask 64512
        %v512 = vsel %vm510, %v506, 0
        %v515 = vsel %vm510, %v509, 0
        %517 = vmatprep.subr.bf16.mxu0 0
        %518 = vmatpush1.bf16.xpose.msra.mxu0 0
        %519 = vmatprep.subr.bf16.mxu0 0
        %520 = vmatpush1.bf16.xpose.msra.mxu0 0
        %521 = vmatprep.subr.bf16.mxu0 0
        %522 = vmatpush1.bf16.xpose.msra.mxu0 0
        %523 = vmatprep.subr.bf16.mxu0 0
        %524 = vmatpush1.bf16.xpose.msra.mxu0 0
        %525 = vmatprep.subr.bf16.mxu0 0
        %526 = vmatpush1.bf16.xpose.msra.mxu0 0
        %527 = vmatprep.subr.bf16.mxu0 0
        %528 = vmatpush1.bf16.xpose.msra.mxu0 0
        %529 = vmatprep.subr.bf16.mxu0 0
        %530 = vmatpush1.bf16.xpose.msra.mxu0 0
        %531 = vmatprep.subr.bf16.mxu0 0
        %532 = vmatpush1.bf16.xpose.msra.mxu0 %v515
        %533 = vmatprep.subr.bf16.mxu0 0
        %534 = vmatpush2.bf16.xpose.msra.mxu0 0
        %535 = vmatprep.subr.bf16.mxu0 0
        %536 = vmatpush2.bf16.xpose.msra.mxu0 0
        %537 = vmatprep.subr.bf16.mxu0 0
        %538 = vmatpush2.bf16.xpose.msra.mxu0 0
        %539 = vmatprep.subr.bf16.mxu0 0
        %540 = vmatpush2.bf16.xpose.msra.mxu0 0
        %541 = vmatprep.subr.bf16.mxu0 0
        %542 = vmatpush2.bf16.xpose.msra.mxu0 0
        %543 = vmatprep.subr.bf16.mxu0 0
        %544 = vmatpush2.bf16.xpose.msra.mxu0 0
        %545 = vmatprep.subr.bf16.mxu0 0
        %546 = vmatpush2.bf16.xpose.msra.mxu0 0
        %547 = vmatprep.subr.bf16.mxu0 0
        %548 = vmatpush2.bf16.xpose.msra.mxu0 0
        %549 = vmatprep.mubr.bf16.mxu0 0
        %550 = vmatmul.mubr.bf16.gmra.mxu0 %v512
        %v551 = vpop.f32.mrf.mxu0
        %v552 = vadd.f32 0.0, %v551
        %v553 = vpop.f32.mrf.mxu0
        %v554 = vpop.f32.mrf.mxu0
        %v555 = vpop.f32.mrf.mxu0
        %556 = vdwg.mxu0
        %v557 = vsel %vm510, %v552, -inf
        %558 = vmax.xlane.f32.xlu0 %v557
        %v559 = vpop.xlane.xlu0 %558
        %v560 = vsub.f32 %v552, %v559
        %v561 = vmul.f32 %v560, 1.442695
        %v562 = vpow.pop %v561
        %v563 = vsel %vm510, %v562, 0.0
        %564 = vadd.xlane.f32.xlu0 %v563
        %v565 = vpop.xlane.xlu0 %564
        %v566 = vrcp.pop %v565
        %v567 = vmul.f32 %v562, %v566
        %v568 = vld [vmem:[%s389] sm:$0xf]
        %v569 = vunpack.c.l.bf16 %v568
        %v570 = vadd.f32 %v567, %v569
        %v571 = vpack.c.bf16 %v570, %v570
        %572 = vrot.lane.b32.xlu0 %v506, 64
        %v573 = vpop.permute.xlu0 %572
        %v575 = vsel %vm510, %v571, 0
        %vm577 = vcmask 1043456
        %v579 = vsel %vm577, %v573, 0
        %581 = vmatprep.subr.bf16.mxu0 0
        %582 = vmatpush1.bf16.msra.mxu0 0
        %583 = vmatprep.subr.bf16.mxu0 0
        %584 = vmatpush1.bf16.msra.mxu0 0
        %585 = vmatprep.subr.bf16.mxu0 0
        %586 = vmatpush1.bf16.msra.mxu0 0
        %587 = vmatprep.subr.bf16.mxu0 0
        %588 = vmatpush1.bf16.msra.mxu0 0
        %589 = vmatprep.subr.bf16.mxu0 0
        %590 = vmatpush1.bf16.msra.mxu0 0
        %591 = vmatprep.subr.bf16.mxu0 0
        %592 = vmatpush1.bf16.msra.mxu0 0
        %593 = vmatprep.subr.bf16.mxu0 0
        %594 = vmatpush1.bf16.msra.mxu0 0
        %595 = vmatprep.subr.bf16.mxu0 0
        %596 = vmatpush1.bf16.msra.mxu0 %v579
        %597 = vmatprep.subr.bf16.mxu0 0
        %598 = vmatpush2.bf16.msra.mxu0 0
        %599 = vmatprep.subr.bf16.mxu0 0
        %600 = vmatpush2.bf16.msra.mxu0 0
        %601 = vmatprep.subr.bf16.mxu0 0
        %602 = vmatpush2.bf16.msra.mxu0 0
        %603 = vmatprep.subr.bf16.mxu0 0
        %604 = vmatpush2.bf16.msra.mxu0 0
        %605 = vmatprep.subr.bf16.mxu0 0
        %606 = vmatpush2.bf16.msra.mxu0 0
        %607 = vmatprep.subr.bf16.mxu0 0
        %608 = vmatpush2.bf16.msra.mxu0 0
        %609 = vmatprep.subr.bf16.mxu0 0
        %610 = vmatpush2.bf16.msra.mxu0 0
        %611 = vmatprep.subr.bf16.mxu0 0
        %612 = vmatpush2.bf16.msra.mxu0 0
        %613 = vmatprep.mubr.bf16.mxu0 0
        %614 = vmatmul.mubr.bf16.gmra.mxu0 %v575
        %v615 = vpop.f32.mrf.mxu0
        %v616 = vadd.f32 0.0, %v615
        %v617 = vpop.f32.mrf.mxu0
        %v618 = vpop.f32.mrf.mxu0
        %v619 = vpop.f32.mrf.mxu0
        %620 = vdwg.mxu0
        %621 = vrot.lane.b32.xlu0 %v506, 120
        %v622 = vpop.permute.xlu0 %621
        %623 = vrot.lane.b32.xlu0 %v506, 88
        %v624 = vpop.permute.xlu0 %623
        %v626 = vsel %vm510, %v622, 0
        %v629 = vsel %vm510, %v624, 0
        %631 = vmatprep.subr.bf16.mxu0 0
        %632 = vmatpush1.bf16.xpose.msra.mxu0 0
        %633 = vmatprep.subr.bf16.mxu0 0
        %634 = vmatpush1.bf16.xpose.msra.mxu0 0
        %635 = vmatprep.subr.bf16.mxu0 0
        %636 = vmatpush1.bf16.xpose.msra.mxu0 0
        %637 = vmatprep.subr.bf16.mxu0 0
        %638 = vmatpush1.bf16.xpose.msra.mxu0 0
        %639 = vmatprep.subr.bf16.mxu0 0
        %640 = vmatpush1.bf16.xpose.msra.mxu0 0
        %641 = vmatprep.subr.bf16.mxu0 0
        %642 = vmatpush1.bf16.xpose.msra.mxu0 0
        %643 = vmatprep.subr.bf16.mxu0 0
        %644 = vmatpush1.bf16.xpose.msra.mxu0 0
        %645 = vmatprep.subr.bf16.mxu0 0
        %646 = vmatpush1.bf16.xpose.msra.mxu0 %v629
        %647 = vmatprep.subr.bf16.mxu0 0
        %648 = vmatpush2.bf16.xpose.msra.mxu0 0
        %649 = vmatprep.subr.bf16.mxu0 0
        %650 = vmatpush2.bf16.xpose.msra.mxu0 0
        %651 = vmatprep.subr.bf16.mxu0 0
        %652 = vmatpush2.bf16.xpose.msra.mxu0 0
        %653 = vmatprep.subr.bf16.mxu0 0
        %654 = vmatpush2.bf16.xpose.msra.mxu0 0
        %655 = vmatprep.subr.bf16.mxu0 0
        %656 = vmatpush2.bf16.xpose.msra.mxu0 0
        %657 = vmatprep.subr.bf16.mxu0 0
        %658 = vmatpush2.bf16.xpose.msra.mxu0 0
        %659 = vmatprep.subr.bf16.mxu0 0
        %660 = vmatpush2.bf16.xpose.msra.mxu0 0
        %661 = vmatprep.subr.bf16.mxu0 0
        %662 = vmatpush2.bf16.xpose.msra.mxu0 0
        %663 = vmatprep.mubr.bf16.mxu0 0
        %664 = vmatmul.mubr.bf16.gmra.mxu0 %v626
        %v665 = vpop.f32.mrf.mxu0
        %v666 = vadd.f32 0.0, %v665
        %v667 = vpop.f32.mrf.mxu0
        %v668 = vpop.f32.mrf.mxu0
        %v669 = vpop.f32.mrf.mxu0
        %670 = vdwg.mxu0
        %v671 = vsel %vm510, %v666, -inf
        %672 = vmax.xlane.f32.xlu0 %v671
        %v673 = vpop.xlane.xlu0 %672
        %v674 = vsub.f32 %v666, %v673
        %v675 = vmul.f32 %v674, 1.442695
        %v676 = vpow.pop %v675
        %v677 = vsel %vm510, %v676, 0.0
        %678 = vadd.xlane.f32.xlu0 %v677
        %v679 = vpop.xlane.xlu0 %678
        %v680 = vrcp.pop %v679
        %v681 = vmul.f32 %v676, %v680
        %s682 = scalar_lea.vmem %s389, 4
        %v683 = vld [vmem:[%s682] sm:$0xf]
        %v684 = vunpack.c.l.bf16 %v683
        %v685 = vadd.f32 %v681, %v684
        %v686 = vpack.c.bf16 %v685, %v685
        %687 = vrot.lane.b32.xlu0 %v506, 56
        %v688 = vpop.permute.xlu0 %687
        %v690 = vsel %vm510, %v686, 0
        %v693 = vsel %vm577, %v688, 0
        %695 = vmatprep.subr.bf16.mxu0 0
        %696 = vmatpush1.bf16.msra.mxu0 0
        %697 = vmatprep.subr.bf16.mxu0 0
        %698 = vmatpush1.bf16.msra.mxu0 0
        %699 = vmatprep.subr.bf16.mxu0 0
        %700 = vmatpush1.bf16.msra.mxu0 0
        %701 = vmatprep.subr.bf16.mxu0 0
        %702 = vmatpush1.bf16.msra.mxu0 0
        %703 = vmatprep.subr.bf16.mxu0 0
        %704 = vmatpush1.bf16.msra.mxu0 0
        %705 = vmatprep.subr.bf16.mxu0 0
        %706 = vmatpush1.bf16.msra.mxu0 0
        %707 = vmatprep.subr.bf16.mxu0 0
        %708 = vmatpush1.bf16.msra.mxu0 0
        %709 = vmatprep.subr.bf16.mxu0 0
        %710 = vmatpush1.bf16.msra.mxu0 %v693
        %711 = vmatprep.subr.bf16.mxu0 0
        %712 = vmatpush2.bf16.msra.mxu0 0
        %713 = vmatprep.subr.bf16.mxu0 0
        %714 = vmatpush2.bf16.msra.mxu0 0
        %715 = vmatprep.subr.bf16.mxu0 0
        %716 = vmatpush2.bf16.msra.mxu0 0
        %717 = vmatprep.subr.bf16.mxu0 0
        %718 = vmatpush2.bf16.msra.mxu0 0
        %719 = vmatprep.subr.bf16.mxu0 0
        %720 = vmatpush2.bf16.msra.mxu0 0
        %721 = vmatprep.subr.bf16.mxu0 0
        %722 = vmatpush2.bf16.msra.mxu0 0
        %723 = vmatprep.subr.bf16.mxu0 0
        %724 = vmatpush2.bf16.msra.mxu0 0
        %725 = vmatprep.subr.bf16.mxu0 0
        %726 = vmatpush2.bf16.msra.mxu0 0
        %727 = vmatprep.mubr.bf16.mxu0 0
        %728 = vmatmul.mubr.bf16.gmra.mxu0 %v690
        %v729 = vpop.f32.mrf.mxu0
        %v730 = vadd.f32 0.0, %v729
        %v731 = vpop.f32.mrf.mxu0
        %v732 = vpop.f32.mrf.mxu0
        %v733 = vpop.f32.mrf.mxu0
        %734 = vdwg.mxu0
        %735 = vrot.lane.b32.xlu0 %v506, 112
        %v736 = vpop.permute.xlu0 %735
        %737 = vrot.lane.b32.xlu0 %v506, 80
        %v738 = vpop.permute.xlu0 %737
        %v740 = vsel %vm510, %v736, 0
        %v743 = vsel %vm510, %v738, 0
        %745 = vmatprep.subr.bf16.mxu0 0
        %746 = vmatpush1.bf16.xpose.msra.mxu0 0
        %747 = vmatprep.subr.bf16.mxu0 0
        %748 = vmatpush1.bf16.xpose.msra.mxu0 0
        %749 = vmatprep.subr.bf16.mxu0 0
        %750 = vmatpush1.bf16.xpose.msra.mxu0 0
        %751 = vmatprep.subr.bf16.mxu0 0
        %752 = vmatpush1.bf16.xpose.msra.mxu0 0
        %753 = vmatprep.subr.bf16.mxu0 0
        %754 = vmatpush1.bf16.xpose.msra.mxu0 0
        %755 = vmatprep.subr.bf16.mxu0 0
        %756 = vmatpush1.bf16.xpose.msra.mxu0 0
        %757 = vmatprep.subr.bf16.mxu0 0
        %758 = vmatpush1.bf16.xpose.msra.mxu0 0
        %759 = vmatprep.subr.bf16.mxu0 0
        %760 = vmatpush1.bf16.xpose.msra.mxu0 %v743
        %761 = vmatprep.subr.bf16.mxu0 0
        %762 = vmatpush2.bf16.xpose.msra.mxu0 0
        %763 = vmatprep.subr.bf16.mxu0 0
        %764 = vmatpush2.bf16.xpose.msra.mxu0 0
        %765 = vmatprep.subr.bf16.mxu0 0
        %766 = vmatpush2.bf16.xpose.msra.mxu0 0
        %767 = vmatprep.subr.bf16.mxu0 0
        %768 = vmatpush2.bf16.xpose.msra.mxu0 0
        %769 = vmatprep.subr.bf16.mxu0 0
        %770 = vmatpush2.bf16.xpose.msra.mxu0 0
        %771 = vmatprep.subr.bf16.mxu0 0
        %772 = vmatpush2.bf16.xpose.msra.mxu0 0
        %773 = vmatprep.subr.bf16.mxu0 0
        %774 = vmatpush2.bf16.xpose.msra.mxu0 0
        %775 = vmatprep.subr.bf16.mxu0 0
        %776 = vmatpush2.bf16.xpose.msra.mxu0 0
        %777 = vmatprep.mubr.bf16.mxu0 0
        %778 = vmatmul.mubr.bf16.gmra.mxu0 %v740
        %v779 = vpop.f32.mrf.mxu0
        %v780 = vadd.f32 0.0, %v779
        %v781 = vpop.f32.mrf.mxu0
        %v782 = vpop.f32.mrf.mxu0
        %v783 = vpop.f32.mrf.mxu0
        %784 = vdwg.mxu0
        %v785 = vsel %vm510, %v780, -inf
        %786 = vmax.xlane.f32.xlu0 %v785
        %v787 = vpop.xlane.xlu0 %786
        %v788 = vsub.f32 %v780, %v787
        %v789 = vmul.f32 %v788, 1.442695
        %v790 = vpow.pop %v789
        %v791 = vsel %vm510, %v790, 0.0
        %792 = vadd.xlane.f32.xlu0 %v791
        %v793 = vpop.xlane.xlu0 %792
        %v794 = vrcp.pop %v793
        %v795 = vmul.f32 %v790, %v794
        %s796 = scalar_lea.vmem %s389, 8
        %v797 = vld [vmem:[%s796] sm:$0xf]
        %v798 = vunpack.c.l.bf16 %v797
        %v799 = vadd.f32 %v795, %v798
        %v800 = vpack.c.bf16 %v799, %v799
        %801 = vrot.lane.b32.xlu0 %v506, 48
        %v802 = vpop.permute.xlu0 %801
        %v804 = vsel %vm510, %v800, 0
        %v807 = vsel %vm577, %v802, 0
        %809 = vmatprep.subr.bf16.mxu0 0
        %810 = vmatpush1.bf16.msra.mxu0 0
        %811 = vmatprep.subr.bf16.mxu0 0
        %812 = vmatpush1.bf16.msra.mxu0 0
        %813 = vmatprep.subr.bf16.mxu0 0
        %814 = vmatpush1.bf16.msra.mxu0 0
        %815 = vmatprep.subr.bf16.mxu0 0
        %816 = vmatpush1.bf16.msra.mxu0 0
        %817 = vmatprep.subr.bf16.mxu0 0
        %818 = vmatpush1.bf16.msra.mxu0 0
        %819 = vmatprep.subr.bf16.mxu0 0
        %820 = vmatpush1.bf16.msra.mxu0 0
        %821 = vmatprep.subr.bf16.mxu0 0
        %822 = vmatpush1.bf16.msra.mxu0 0
        %823 = vmatprep.subr.bf16.mxu0 0
        %824 = vmatpush1.bf16.msra.mxu0 %v807
        %825 = vmatprep.subr.bf16.mxu0 0
        %826 = vmatpush2.bf16.msra.mxu0 0
        %827 = vmatprep.subr.bf16.mxu0 0
        %828 = vmatpush2.bf16.msra.mxu0 0
        %829 = vmatprep.subr.bf16.mxu0 0
        %830 = vmatpush2.bf16.msra.mxu0 0
        %831 = vmatprep.subr.bf16.mxu0 0
        %832 = vmatpush2.bf16.msra.mxu0 0
        %833 = vmatprep.subr.bf16.mxu0 0
        %834 = vmatpush2.bf16.msra.mxu0 0
        %835 = vmatprep.subr.bf16.mxu0 0
        %836 = vmatpush2.bf16.msra.mxu0 0
        %837 = vmatprep.subr.bf16.mxu0 0
        %838 = vmatpush2.bf16.msra.mxu0 0
        %839 = vmatprep.subr.bf16.mxu0 0
        %840 = vmatpush2.bf16.msra.mxu0 0
        %841 = vmatprep.mubr.bf16.mxu0 0
        %842 = vmatmul.mubr.bf16.gmra.mxu0 %v804
        %v843 = vpop.f32.mrf.mxu0
        %v844 = vadd.f32 0.0, %v843
        %v845 = vpop.f32.mrf.mxu0
        %v846 = vpop.f32.mrf.mxu0
        %v847 = vpop.f32.mrf.mxu0
        %848 = vdwg.mxu0
        %849 = vrot.lane.b32.xlu0 %v506, 104
        %v850 = vpop.permute.xlu0 %849
        %851 = vrot.lane.b32.xlu0 %v506, 72
        %v852 = vpop.permute.xlu0 %851
        %v854 = vsel %vm510, %v850, 0
        %v857 = vsel %vm510, %v852, 0
        %859 = vmatprep.subr.bf16.mxu0 0
        %860 = vmatpush1.bf16.xpose.msra.mxu0 0
        %861 = vmatprep.subr.bf16.mxu0 0
        %862 = vmatpush1.bf16.xpose.msra.mxu0 0
        %863 = vmatprep.subr.bf16.mxu0 0
        %864 = vmatpush1.bf16.xpose.msra.mxu0 0
        %865 = vmatprep.subr.bf16.mxu0 0
        %866 = vmatpush1.bf16.xpose.msra.mxu0 0
        %867 = vmatprep.subr.bf16.mxu0 0
        %868 = vmatpush1.bf16.xpose.msra.mxu0 0
        %869 = vmatprep.subr.bf16.mxu0 0
        %870 = vmatpush1.bf16.xpose.msra.mxu0 0
        %871 = vmatprep.subr.bf16.mxu0 0
        %872 = vmatpush1.bf16.xpose.msra.mxu0 0
        %873 = vmatprep.subr.bf16.mxu0 0
        %874 = vmatpush1.bf16.xpose.msra.mxu0 %v857
        %875 = vmatprep.subr.bf16.mxu0 0
        %876 = vmatpush2.bf16.xpose.msra.mxu0 0
        %877 = vmatprep.subr.bf16.mxu0 0
        %878 = vmatpush2.bf16.xpose.msra.mxu0 0
        %879 = vmatprep.subr.bf16.mxu0 0
        %880 = vmatpush2.bf16.xpose.msra.mxu0 0
        %881 = vmatprep.subr.bf16.mxu0 0
        %882 = vmatpush2.bf16.xpose.msra.mxu0 0
        %883 = vmatprep.subr.bf16.mxu0 0
        %884 = vmatpush2.bf16.xpose.msra.mxu0 0
        %885 = vmatprep.subr.bf16.mxu0 0
        %886 = vmatpush2.bf16.xpose.msra.mxu0 0
        %887 = vmatprep.subr.bf16.mxu0 0
        %888 = vmatpush2.bf16.xpose.msra.mxu0 0
        %889 = vmatprep.subr.bf16.mxu0 0
        %890 = vmatpush2.bf16.xpose.msra.mxu0 0
        %891 = vmatprep.mubr.bf16.mxu0 0
        %892 = vmatmul.mubr.bf16.gmra.mxu0 %v854
        %v893 = vpop.f32.mrf.mxu0
        %v894 = vadd.f32 0.0, %v893
        %v895 = vpop.f32.mrf.mxu0
        %v896 = vpop.f32.mrf.mxu0
        %v897 = vpop.f32.mrf.mxu0
        %898 = vdwg.mxu0
        %v899 = vsel %vm510, %v894, -inf
        %900 = vmax.xlane.f32.xlu0 %v899
        %v901 = vpop.xlane.xlu0 %900
        %v902 = vsub.f32 %v894, %v901
        %v903 = vmul.f32 %v902, 1.442695
        %v904 = vpow.pop %v903
        %v905 = vsel %vm510, %v904, 0.0
        %906 = vadd.xlane.f32.xlu0 %v905
        %v907 = vpop.xlane.xlu0 %906
        %v908 = vrcp.pop %v907
        %v909 = vmul.f32 %v904, %v908
        %s910 = scalar_lea.vmem %s389, 12
        %v911 = vld [vmem:[%s910] sm:$0xf]
        %v912 = vunpack.c.l.bf16 %v911
        %v913 = vadd.f32 %v909, %v912
        %v914 = vpack.c.bf16 %v913, %v913
        %915 = vrot.lane.b32.xlu0 %v506, 40
        %v916 = vpop.permute.xlu0 %915
        %v918 = vsel %vm510, %v914, 0
        %v921 = vsel %vm577, %v916, 0
        %923 = vmatprep.subr.bf16.mxu0 0
        %924 = vmatpush1.bf16.msra.mxu0 0
        %925 = vmatprep.subr.bf16.mxu0 0
        %926 = vmatpush1.bf16.msra.mxu0 0
        %927 = vmatprep.subr.bf16.mxu0 0
        %928 = vmatpush1.bf16.msra.mxu0 0
        %929 = vmatprep.subr.bf16.mxu0 0
        %930 = vmatpush1.bf16.msra.mxu0 0
        %931 = vmatprep.subr.bf16.mxu0 0
        %932 = vmatpush1.bf16.msra.mxu0 0
        %933 = vmatprep.subr.bf16.mxu0 0
        %934 = vmatpush1.bf16.msra.mxu0 0
        %935 = vmatprep.subr.bf16.mxu0 0
        %936 = vmatpush1.bf16.msra.mxu0 0
        %937 = vmatprep.subr.bf16.mxu0 0
        %938 = vmatpush1.bf16.msra.mxu0 %v921
        %939 = vmatprep.subr.bf16.mxu0 0
        %940 = vmatpush2.bf16.msra.mxu0 0
        %941 = vmatprep.subr.bf16.mxu0 0
        %942 = vmatpush2.bf16.msra.mxu0 0
        %943 = vmatprep.subr.bf16.mxu0 0
        %944 = vmatpush2.bf16.msra.mxu0 0
        %945 = vmatprep.subr.bf16.mxu0 0
        %946 = vmatpush2.bf16.msra.mxu0 0
        %947 = vmatprep.subr.bf16.mxu0 0
        %948 = vmatpush2.bf16.msra.mxu0 0
        %949 = vmatprep.subr.bf16.mxu0 0
        %950 = vmatpush2.bf16.msra.mxu0 0
        %951 = vmatprep.subr.bf16.mxu0 0
        %952 = vmatpush2.bf16.msra.mxu0 0
        %953 = vmatprep.subr.bf16.mxu0 0
        %954 = vmatpush2.bf16.msra.mxu0 0
        %955 = vmatprep.mubr.bf16.mxu0 0
        %956 = vmatmul.mubr.bf16.gmra.mxu0 %v918
        %v957 = vpop.f32.mrf.mxu0
        %v958 = vadd.f32 0.0, %v957
        %v959 = vpop.f32.mrf.mxu0
        %v960 = vpop.f32.mrf.mxu0
        %v961 = vpop.f32.mrf.mxu0
        %962 = vdwg.mxu0
        %964 = vrot.lane.b32.xlu0 %v730, 8
        %v965 = vpop.permute.xlu0 %964
        %968 = vrot.lane.b32.xlu0 %v844, 16
        %v969 = vpop.permute.xlu0 %968
        %972 = vrot.lane.b32.xlu0 %v958, 24
        %v973 = vpop.permute.xlu0 %972
        %v975 = vsel %vm510, %v616, %v965
        %vm976 = vcmask 130048
        %v977 = vsel %vm976, %v975, %v969
        %vm978 = vcmask 195584
        %v979 = vsel %vm978, %v977, %v973
        %v980 = vld [vmem:[#allocation3] sm:$0xff]
        %v981 = vpack.c.bf16 %v979, %v979
        %s982 = smul.addr %s435, 4
        %s983 = scalar_lea.vmem %s4, %s982
        %v984 = vld [vmem:[%s983] sm:$0xf]
        %v985 = vld [vmem:[%s983 + $0x4] sm:$0xf]
        %v986 = vld [vmem:[%s983 + $0x8] sm:$0xf]
        %v987 = vld [vmem:[%s983 + $0xc] sm:$0xf]
        %v992 = vunpack.c.l.b16 %v984
        %v993 = vunpack.c.l.b16 %v985
        %v994 = vunpack.c.l.b16 %v986
        %v995 = vunpack.c.l.b16 %v987
        %v996 = vpack.c.b16 %v993, %v992
        %v997 = vpack.c.b16 %v995, %v994
        %v1001 = vsel %vm462, %v981, 0
        %1003 = vmatprep.subr.bf16.mxu0 0
        %1004 = vmatpush1.bf16.msra.mxu0 0
        %1005 = vmatprep.subr.bf16.mxu0 0
        %1006 = vmatpush1.bf16.msra.mxu0 0
        %1007 = vmatprep.subr.bf16.mxu0 0
        %1008 = vmatpush1.bf16.msra.mxu0 0
        %1009 = vmatprep.subr.bf16.mxu0 0
        %1010 = vmatpush1.bf16.msra.mxu0 0
        %1011 = vmatprep.subr.bf16.mxu0 0
        %1012 = vmatpush1.bf16.msra.mxu0 0
        %1013 = vmatprep.subr.bf16.mxu0 0
        %1014 = vmatpush1.bf16.msra.mxu0 0
        %1015 = vmatprep.subr.bf16.mxu0 0
        %1016 = vmatpush1.bf16.msra.mxu0 %v997
        %1017 = vmatprep.subr.bf16.mxu0 0
        %1018 = vmatpush1.bf16.msra.mxu0 %v996
        %1019 = vmatprep.subr.bf16.mxu0 0
        %1020 = vmatpush2.bf16.msra.mxu0 0
        %1021 = vmatprep.subr.bf16.mxu0 0
        %1022 = vmatpush2.bf16.msra.mxu0 0
        %1023 = vmatprep.subr.bf16.mxu0 0
        %1024 = vmatpush2.bf16.msra.mxu0 0
        %1025 = vmatprep.subr.bf16.mxu0 0
        %1026 = vmatpush2.bf16.msra.mxu0 0
        %1027 = vmatprep.subr.bf16.mxu0 0
        %1028 = vmatpush2.bf16.msra.mxu0 0
        %1029 = vmatprep.subr.bf16.mxu0 0
        %1030 = vmatpush2.bf16.msra.mxu0 0
        %1031 = vmatprep.subr.bf16.mxu0 0
        %1032 = vmatpush2.bf16.msra.mxu0 0
        %1033 = vmatprep.subr.bf16.mxu0 0
        %1034 = vmatpush2.bf16.msra.mxu0 0
        %1035 = vmatprep.mubr.bf16.mxu0 0
        %1036 = vmatmul.mubr.bf16.gmra.mxu0 %v1001
        %v1037 = vpop.f32.mrf.mxu0
        %v1038 = vadd.f32 0.0, %v1037
        %v1039 = vpop.f32.mrf.mxu0
        %v1040 = vpop.f32.mrf.mxu0
        %v1041 = vpop.f32.mrf.mxu0
        %1042 = vdwg.mxu0
        %v1043 = vadd.f32 %v980, %v1038
        %1044 = vst.msk [vmem:[#allocation3] sm:$0xff] %vm462, %v1043
        // Predicated region
        $region65: #{tpu_custom_call.1} parent=55 // pred_check
          %p1045 = pneg %p392
        $region66: #{tpu_custom_call.1} parent=55 // pred_check_branch
          %1047 = sbr.rel (%p1045) target = $region68
        $region67: #{tpu_custom_call.1} parent=55 // pred_region
          %v1048 = vld [vmem:[%s5 + $0x3] sm:$0x1]
          %v1049 = vld [vmem:[%s5 + $0x4] sm:$0x1]
          %v1050 = vld [vmem:[%s5 + $0x5] sm:$0x1]
          %v1051 = vld [vmem:[%s6] sm:$0x1]
          %v1052 = vld [vmem:[#allocation4] sm:$0xf]
          %v1053 = vld [vmem:[#allocation4 + $0x4] sm:$0xf]
          %v1054 = vld [vmem:[#allocation4 + $0x8] sm:$0xf]
          %v1055 = vld [vmem:[#allocation4 + $0xc] sm:$0xf]
          %v1056 = vld [vmem:[%s8] sm:$0xf]
          %v1057 = vld [vmem:[%s8 + $0x4] sm:$0xf]
          %v1058 = vld [vmem:[%s8 + $0x8] sm:$0xf]
          %v1059 = vld [vmem:[%s8 + $0xc] sm:$0xf]
          %v1060 = vld [vmem:[%s8 + $0x10] sm:$0xf]
          %v1061 = vld [vmem:[%s8 + $0x14] sm:$0xf]
          %v1062 = vld [vmem:[%s8 + $0x18] sm:$0xf]
          %v1063 = vld [vmem:[%s8 + $0x1c] sm:$0xf]
          %v1064 = vld [vmem:[%s8 + $0x20] sm:$0xf]
          %v1065 = vld [vmem:[%s8 + $0x24] sm:$0xf]
          %v1066 = vld [vmem:[%s8 + $0x28] sm:$0xf]
          %v1067 = vld [vmem:[%s8 + $0x2c] sm:$0xf]
          %v1068 = vld [vmem:[%s8 + $0x30] sm:$0xf]
          %v1069 = vld [vmem:[%s8 + $0x34] sm:$0xf]
          %v1070 = vld [vmem:[%s8 + $0x38] sm:$0xf]
          %v1071 = vld [vmem:[%s8 + $0x3c] sm:$0xf]
          %v1072 = vld [vmem:[#allocation3] sm:$0xff]
          %v1073 = vsel %vm462, %v1072, 0.0
          %1074 = vadd.xlane.f32.xlu0 %v1073
          %v1075 = vpop.xlane.xlu0 %1074
          %v1076 = vrcp.pop 32.0
          %v1077 = vmul.f32 %v1075, %v1076
          %v1078 = vsub.f32 %v1072, %v1077
          %v1079 = vmul.f32 %v1078, %v1078
          %v1080 = vsel %vm462, %v1079, 0.0
          %1081 = vadd.xlane.f32.xlu0 %v1080
          %v1082 = vpop.xlane.xlu0 %1081
          %v1083 = vmul.f32 %v1082, %v1076
          %v1084 = vadd.f32 %v1083, 1e-05
          %v1085 = vrsqrt.pop %v1084
          %v1086 = vmul.f32 %v1078, %v1085
          %v1087 = vlaneseq
          %v1088 = vshrl.u32 %v1087, 7
          %v1089 = vsub.s32 0, %v1088
          %v1090 = vrot.slane %v1048, %v1089
          %v1091 = vmul.f32 %v1086, %v1090
          %v1092 = vlaneseq
          %v1093 = vshrl.u32 %v1092, 7
          %v1094 = vsub.s32 0, %v1093
          %v1095 = vrot.slane %v1049, %v1094
          %v1096 = vadd.f32 %v1091, %v1095
          %v1097 = vpack.c.bf16 %v1096, %v1096
          %v1099 = vlaneseq
          %v1100 = vshrl.u32 %v1099, 7
          %v1101 = vsub.s32 0, %v1100
          %v1102 = vrot.slane %v1051, %v1101
          %v1108 = vunpack.c.l.b16 %v1052
          %v1109 = vunpack.c.l.b16 %v1053
          %v1110 = vunpack.c.l.b16 %v1054
          %v1111 = vunpack.c.l.b16 %v1055
          %v1112 = vpack.c.b16 %v1109, %v1108
          %v1113 = vpack.c.b16 %v1111, %v1110
          %v1117 = vsel %vm462, %v1097, 0
          %1119 = vmatprep.subr.bf16.mxu0 0
          %1120 = vmatpush1.bf16.msra.mxu0 0
          %1121 = vmatprep.subr.bf16.mxu0 0
          %1122 = vmatpush1.bf16.msra.mxu0 0
          %1123 = vmatprep.subr.bf16.mxu0 0
          %1124 = vmatpush1.bf16.msra.mxu0 0
          %1125 = vmatprep.subr.bf16.mxu0 0
          %1126 = vmatpush1.bf16.msra.mxu0 0
          %1127 = vmatprep.subr.bf16.mxu0 0
          %1128 = vmatpush1.bf16.msra.mxu0 0
          %1129 = vmatprep.subr.bf16.mxu0 0
          %1130 = vmatpush1.bf16.msra.mxu0 0
          %1131 = vmatprep.subr.bf16.mxu0 0
          %1132 = vmatpush1.bf16.msra.mxu0 %v1113
          %1133 = vmatprep.subr.bf16.mxu0 0
          %1134 = vmatpush1.bf16.msra.mxu0 %v1112
          %1135 = vmatprep.subr.bf16.mxu0 0
          %1136 = vmatpush2.bf16.msra.mxu0 0
          %1137 = vmatprep.subr.bf16.mxu0 0
          %1138 = vmatpush2.bf16.msra.mxu0 0
          %1139 = vmatprep.subr.bf16.mxu0 0
          %1140 = vmatpush2.bf16.msra.mxu0 0
          %1141 = vmatprep.subr.bf16.mxu0 0
          %1142 = vmatpush2.bf16.msra.mxu0 0
          %1143 = vmatprep.subr.bf16.mxu0 0
          %1144 = vmatpush2.bf16.msra.mxu0 0
          %1145 = vmatprep.subr.bf16.mxu0 0
          %1146 = vmatpush2.bf16.msra.mxu0 0
          %1147 = vmatprep.subr.bf16.mxu0 0
          %1148 = vmatpush2.bf16.msra.mxu0 0
          %1149 = vmatprep.subr.bf16.mxu0 0
          %1150 = vmatpush2.bf16.msra.mxu0 0
          %1151 = vmatprep.mubr.bf16.mxu0 0
          %1152 = vmatmul.mubr.bf16.gmra.mxu0 %v1117
          %v1153 = vpop.f32.mrf.mxu0
          %v1154 = vadd.f32 %v1102, %v1153
          %v1155 = vpop.f32.mrf.mxu0
          %v1156 = vpop.f32.mrf.mxu0
          %v1157 = vpop.f32.mrf.mxu0
          %1158 = vdwg.mxu0
          %v1159 = vmul.f32 %v1154, %v1154
          %v1160 = vmul.f32 %v1154, %v1159
          %v1161 = vmul.f32 %v1160, 0.044715
          %v1162 = vadd.f32 %v1154, %v1161
          %v1163 = vmul.f32 %v1162, 0.7978846
          %v1164 = vtanh.pop %v1163
          %v1165 = vadd.f32 %v1164, 1.0
          %v1166 = vmul.f32 %v1165, 0.5
          %v1167 = vmul.f32 %v1154, %v1166
          %v1168 = vpack.c.bf16 %v1167, %v1167
          %v1169 = vlaneseq
          %v1170 = vshrl.u32 %v1169, 7
          %v1171 = vsub.s32 0, %v1170
          %v1172 = vrot.slane %v1050, %v1171
          %v1189 = vunpack.c.l.b16 %v1056
          %v1190 = vunpack.c.l.b16 %v1057
          %v1191 = vunpack.c.l.b16 %v1058
          %v1192 = vunpack.c.l.b16 %v1059
          %v1193 = vunpack.c.l.b16 %v1060
          %v1194 = vunpack.c.l.b16 %v1061
          %v1195 = vunpack.c.l.b16 %v1062
          %v1196 = vunpack.c.l.b16 %v1063
          %v1197 = vunpack.c.l.b16 %v1064
          %v1198 = vunpack.c.l.b16 %v1065
          %v1199 = vunpack.c.l.b16 %v1066
          %v1200 = vunpack.c.l.b16 %v1067
          %v1201 = vunpack.c.l.b16 %v1068
          %v1202 = vunpack.c.l.b16 %v1069
          %v1203 = vunpack.c.l.b16 %v1070
          %v1204 = vunpack.c.l.b16 %v1071
          %v1205 = vpack.c.b16 %v1190, %v1189
          %v1206 = vpack.c.b16 %v1192, %v1191
          %v1207 = vpack.c.b16 %v1194, %v1193
          %v1208 = vpack.c.b16 %v1196, %v1195
          %v1209 = vpack.c.b16 %v1198, %v1197
          %v1210 = vpack.c.b16 %v1200, %v1199
          %v1211 = vpack.c.b16 %v1202, %v1201
          %v1212 = vpack.c.b16 %v1204, %v1203
          %1221 = vmatprep.subr.bf16.mxu0 0
          %1222 = vmatpush1.bf16.msra.mxu0 %v1212
          %1223 = vmatprep.subr.bf16.mxu0 0
          %1224 = vmatpush1.bf16.msra.mxu0 %v1211
          %1225 = vmatprep.subr.bf16.mxu0 0
          %1226 = vmatpush1.bf16.msra.mxu0 %v1210
          %1227 = vmatprep.subr.bf16.mxu0 0
          %1228 = vmatpush1.bf16.msra.mxu0 %v1209
          %1229 = vmatprep.subr.bf16.mxu0 0
          %1230 = vmatpush1.bf16.msra.mxu0 %v1208
          %1231 = vmatprep.subr.bf16.mxu0 0
          %1232 = vmatpush1.bf16.msra.mxu0 %v1207
          %1233 = vmatprep.subr.bf16.mxu0 0
          %1234 = vmatpush1.bf16.msra.mxu0 %v1206
          %1235 = vmatprep.subr.bf16.mxu0 0
          %1236 = vmatpush1.bf16.msra.mxu0 %v1205
          %1237 = vmatprep.subr.bf16.mxu0 0
          %1238 = vmatpush2.bf16.msra.mxu0 0
          %1239 = vmatprep.subr.bf16.mxu0 0
          %1240 = vmatpush2.bf16.msra.mxu0 0
          %1241 = vmatprep.subr.bf16.mxu0 0
          %1242 = vmatpush2.bf16.msra.mxu0 0
          %1243 = vmatprep.subr.bf16.mxu0 0
          %1244 = vmatpush2.bf16.msra.mxu0 0
          %1245 = vmatprep.subr.bf16.mxu0 0
          %1246 = vmatpush2.bf16.msra.mxu0 0
          %1247 = vmatprep.subr.bf16.mxu0 0
          %1248 = vmatpush2.bf16.msra.mxu0 0
          %1249 = vmatprep.subr.bf16.mxu0 0
          %1250 = vmatpush2.bf16.msra.mxu0 0
          %1251 = vmatprep.subr.bf16.mxu0 0
          %1252 = vmatpush2.bf16.msra.mxu0 0
          %1253 = vmatprep.mubr.bf16.mxu0 0
          %1254 = vmatmul.mubr.bf16.gmra.mxu0 %v1168
          %v1255 = vpop.f32.mrf.mxu0
          %v1256 = vadd.f32 %v1172, %v1255
          %v1257 = vpop.f32.mrf.mxu0
          %v1258 = vpop.f32.mrf.mxu0
          %v1259 = vpop.f32.mrf.mxu0
          %1260 = vdwg.mxu0
          %v1261 = vadd.f32 %v1072, %v1256
          %1262 = vst.msk [vmem:[%s376] sm:$0xff] %vm462, %v1261
        $region68: #{tpu_custom_call.1} parent=55 // pred_fallthru
          _
        %s1263 = sand.u32 %s245, 1
        %s1264 = scalar_lea.sflag [#allocation6], %s1263
        %s1265 = sand.u32 %s245, 1
        %s1266 = smul.addr %s1265, 8
        %s1267 = scalar_lea.vmem [#allocation7], %s1266
        // Predicated region
        $region69: #{tpu_custom_call.1} parent=55 // pred_check
          %p1268 = pneg %p255
        $region70: #{tpu_custom_call.1} parent=55 // pred_check_branch
          %1270 = sbr.rel (%p1268) target = $region72
        $region71: #{tpu_custom_call.1} parent=55 // pred_region
          %s1272 = ssub.s32 128, 128
          %1273 = vsyncadd %s1264, %s1272
          %s1274 = smul.addr %s28, 128
          %s1275 = scalar_lea.hbm %s9, %s1274
          %s1277 = sshll.u32 %s1267, 4
          %s1278 = int_to_ptr.vmem [resolvable:$true] %s1277
          %1280 = dma.vmem_to_hbm [thread:$0]  %s1278, 128, %s1275, %s1264
        $region72: #{tpu_custom_call.1} parent=55 // pred_fallthru
          _
      $region56: #{tpu_custom_call.1} parent=5 // pred_fallthru
        _
      %p1281 = scmp.le.s32.totalorder 2, %s19
      // Predicated region
      $region73: #{tpu_custom_call.1} parent=5 // pred_check
        %p1282 = pneg %p1281
      $region74: #{tpu_custom_call.1} parent=5 // pred_check_branch
        %1284 = sbr.rel (%p1282) target = $region76
      $region75: #{tpu_custom_call.1} parent=5 // pred_region
        %s1285 = ssub.s32 %s19, 2
        // Predicated region
        $region77: #{tpu_custom_call.1} parent=75 // pred_check
          %p1286 = pneg %p261
        $region78: #{tpu_custom_call.1} parent=75 // pred_check_branch
          %1288 = sbr.rel (%p1286) target = $region80
        $region79: #{tpu_custom_call.1} parent=75 // pred_region
          %s1289 = sand.u32 %s246, 1
          %s1290 = scalar_lea.sflag [#allocation6], %s1289
          %s1291 = sand.u32 %s246, 1
          %s1292 = smul.addr %s1291, 8
          %s1293 = scalar_lea.vmem [#allocation7], %s1292
          %1294 = dma.done %s1290, 128
        $region80: #{tpu_custom_call.1} parent=75 // pred_fallthru
          _
      $region76: #{tpu_custom_call.1} parent=5 // pred_fallthru
        _
    $region6: #{tpu_custom_call.1} parent=1 // loop_footer
      %s23 = sadd.s32 1, %s19
    $region7: #{tpu_custom_call.1} parent=1 // loop_footer_branch
      %18 = sbr.rel target = $region3
    $region8: #{tpu_custom_call.1} parent=1 // loop_exit
      _
    %1295 = vsyncpa [#allocation5], 1
    %s1296 = scalar_lea.sflag [#allocation5], 1
    %1297 = vsyncpa %s1296, 1
    %1298 = vsyncpa [#allocation6], 1
    %s1299 = scalar_lea.sflag [#allocation6], 1
    %1300 = vsyncpa %s1299, 1

</llo_original>
